<compile_context>
chip_gen: v7x
topology: tpu7x:2x2x1
jax: 0.10.0
libtpu: 0.0.40
codegen_flags: <defaults>
</compile_context>

<pallas_src>
import numpy as np
import jax
import jax.numpy as jnp
from jax import lax
from jax.experimental import pallas as pl
from jax.experimental.pallas import tpu as pltpu

# ---------------- synthetic small config (scaled-down adapt_clip consts) ----
PATCH_NUM_HEIGHT = 4
PATCH_NUM_WIDTH = 4
MAX_PATCHES = PATCH_NUM_HEIGHT * PATCH_NUM_WIDTH          # 16
EMBED = 128                                               # lane-dense hidden
POSITION_EMBEDDING_LENGTH = EMBED
NUM_CHANNELS = 3
IMAGE_SIZE = 16
PATCH_SIZE = 4                                            # 16/4 = 4 patches/side
NUM_HEADS = 4
HEAD_DIM = EMBED // NUM_HEADS                             # 32
INTERMEDIATE = 2 * EMBED                                  # 256
NUM_LAYERS = 3
LN_EPS = 1e-5
SELECT_LAYER = -2                                         # mm_vision_select_layer
SELECT_FEATURE = "patch"                                  # drops CLS token
SEQ = MAX_PATCHES + 1                                     # 17
SCALE = HEAD_DIM ** -0.5

# hidden_states = [pre_LN_embeddings, layer1_out, ..., layerN_out]; feature_select
# reads hidden_states[SELECT_LAYER], so only L_USED encoder layers are needed.
L_USED = SELECT_LAYER % (NUM_LAYERS + 1)
assert 1 <= L_USED <= NUM_LAYERS

OUT_TOKENS = MAX_PATCHES if SELECT_FEATURE == "patch" else SEQ
MXU_DTYPE = jnp.bfloat16   # matmul-operand dtype (accumulation stays float32)


# ----------------------------- in-kernel helpers -----------------------------
def _ln(x, g, b):
    """LayerNorm in f32. g, b broadcast over rows ((1, D))."""
    mean = jnp.mean(x, axis=-1, keepdims=True)
    var = jnp.mean(jnp.square(x - mean), axis=-1, keepdims=True)
    return (x - mean) * lax.rsqrt(var + LN_EPS) * g + b


def _mm(a, w):
    """MXU matmul: bf16 operands, f32 accumulation."""
    return jnp.dot(a.astype(MXU_DTYPE), w.astype(MXU_DTYPE),
                   preferred_element_type=jnp.float32)


# ------------------------- fully fused tower kernel -------------------------
def _tower_kernel(mask_ref, patch_ref, conv_w_ref, cls_ref, pos_ref,
                  pre_g_ref, pre_b_ref,
                  ln1_g_ref, ln1_b_ref, qkv_w_ref, qkv_b_ref,
                  o_w_ref, o_b_ref, ln2_g_ref, ln2_b_ref,
                  fc1_w_ref, fc1_b_ref, fc2_w_ref, fc2_b_ref,
                  out_ref, h_scr):
    layer = pl.program_id(1)

    # ---- embeddings (patch conv + class token + pos-emb + pre-LN), once ----
    @pl.when(layer == 0)
    def _():
        pe = _mm(patch_ref[0], conv_w_ref[...])                  # (nP, EMBED)
        emb = jnp.concatenate([cls_ref[...].astype(jnp.float32), pe], axis=0)
        emb = emb + pos_ref[0].astype(jnp.float32)               # (SEQ, EMBED)
        h_scr[...] = _ln(emb, pre_g_ref[...], pre_b_ref[...])

    h = h_scr[...]                                               # (SEQ, EMBED)
    mask_row = mask_ref[0]                                       # (1, SEQ) additive

    # ---- self-attention block ----
    hn = _ln(h, ln1_g_ref[0], ln1_b_ref[0])
    qkv = _mm(hn, qkv_w_ref[0]) + qkv_b_ref[0]                   # (SEQ, 3*EMBED)
    heads = []
    for hh in range(NUM_HEADS):                                  # unrolled, H=4
        lo = hh * HEAD_DIM
        q = qkv[:, lo:lo + HEAD_DIM] * SCALE
        k = qkv[:, EMBED + lo:EMBED + lo + HEAD_DIM]
        v = qkv[:, 2 * EMBED + lo:2 * EMBED + lo + HEAD_DIM]
        # contract last dims directly -> no explicit k transpose
        s = lax.dot_general(q.astype(MXU_DTYPE), k.astype(MXU_DTYPE),
                            (((1,), (1,)), ((), ())),
                            preferred_element_type=jnp.float32)   # (SEQ, SEQ)
        s = s + mask_row
        s = s - jnp.max(s, axis=-1, keepdims=True)
        p = jnp.exp(s)
        p = p * pl.reciprocal(jnp.sum(p, axis=-1, keepdims=True), approx=True)
        heads.append(_mm(p, v))                                  # (SEQ, HEAD_DIM)
    attn = jnp.concatenate(heads, axis=-1)                       # (SEQ, EMBED)
    h = h + _mm(attn, o_w_ref[0]) + o_b_ref[0]                   # residual fused

    # ---- MLP block (quick_gelu) ----
    hn = _ln(h, ln2_g_ref[0], ln2_b_ref[0])
    m = _mm(hn, fc1_w_ref[0]) + fc1_b_ref[0]
    m = m * jax.nn.sigmoid(1.702 * m)
    h = h + _mm(m, fc2_w_ref[0]) + fc2_b_ref[0]                  # residual fused

    h_scr[...] = h

    @pl.when(layer == pl.num_programs(1) - 1)
    def _():
        if SELECT_FEATURE == "patch":
            out_ref[0] = h[1:].astype(out_ref.dtype)             # drop CLS in-kernel
        else:
            out_ref[0] = h.astype(out_ref.dtype)


def tower_pallas(patches, mask_add, pos, prepared):
    B, nP, Cpp = patches.shape
    enc = prepared["enc"]

    def pb(shape):       # per-batch block
        return pl.BlockSpec(shape, lambda b, l: (b, 0, 0))

    def shared(shape):   # batch/layer-invariant 2-D block (fetched once)
        return pl.BlockSpec(shape, lambda b, l: (0, 0))

    def plw(shape):      # per-layer (stacked-weight) block
        return pl.BlockSpec(shape, lambda b, l: (l, 0, 0))

    in_specs = [
        pb((1, 1, SEQ)),                                      # additive mask row
        pb((1, nP, Cpp)),                                     # unfolded patches
        shared((Cpp, EMBED)),                                 # conv-as-matmul weight
        shared((1, EMBED)),                                   # class embedding
        pb((1, SEQ, EMBED)),                                  # adapted pos-emb
        shared((1, EMBED)), shared((1, EMBED)),               # pre-LN g/b
        plw((1, 1, EMBED)), plw((1, 1, EMBED)),               # ln1 g/b
        plw((1, EMBED, 3 * EMBED)), plw((1, 1, 3 * EMBED)),   # fused qkv w/b
        plw((1, EMBED, EMBED)), plw((1, 1, EMBED)),           # out-proj w/b
        plw((1, 1, EMBED)), plw((1, 1, EMBED)),               # ln2 g/b
        plw((1, EMBED, INTERMEDIATE)), plw((1, 1, INTERMEDIATE)),  # fc1 w/b
        plw((1, INTERMEDIATE, EMBED)), plw((1, 1, EMBED)),    # fc2 w/b
    ]
    return pl.pallas_call(
        _tower_kernel,
        out_shape=jax.ShapeDtypeStruct((B, OUT_TOKENS, EMBED), jnp.float32),
        grid=(B, L_USED),
        in_specs=in_specs,
        out_specs=pl.BlockSpec((1, OUT_TOKENS, EMBED), lambda b, l: (b, 0, 0)),
        scratch_shapes=[pltpu.VMEM((SEQ, EMBED), jnp.float32)],
        compiler_params=pltpu.CompilerParams(
            dimension_semantics=("parallel", "arbitrary")),
    )(mask_add, patches, prepared["conv_w"], prepared["cls"], pos,
      prepared["pre_ln_g"], prepared["pre_ln_b"],
      enc["ln1_g"], enc["ln1_b"], enc["qkv_w"], enc["qkv_b"],
      enc["o_w"], enc["o_b"], enc["ln2_g"], enc["ln2_b"],
      enc["fc1_w"], enc["fc1_b"], enc["fc2_w"], enc["fc2_b"])


# ----------------- position embedding (torch-exact bicubic) -----------------
def _torch_bicubic_matrix(out_size, in_size):
    """Row matrix reproducing torch.nn.functional.interpolate
    (mode='bicubic', align_corners=False, A=-0.75) along one axis."""
    A = -0.75
    M = np.zeros((out_size, in_size), dtype=np.float32)
    scale = in_size / out_size

    def cubic1(x):  # |x| <= 1
        return ((A + 2) * x - (A + 3)) * x * x + 1

    def cubic2(x):  # 1 < |x| < 2
        return ((A * x - 5 * A) * x + 8 * A) * x - 4 * A

    for i in range(out_size):
        src = (i + 0.5) * scale - 0.5
        i0 = int(np.floor(src))
        t = src - i0
        ws = [cubic2(t + 1.0), cubic1(t), cubic1(1.0 - t), cubic2(2.0 - t)]
        idxs = [min(max(i0 + d, 0), in_size - 1) for d in (-1, 0, 1, 2)]
        for w_, idx in zip(ws, idxs):
            M[i, idx] += w_
    return M


def get_position_embedding(pos_weight, patch_height_num, patch_width_num):
    """Mirrors adapt_CLIPVisionEmbeddings.get_position_embedding (bicubic)."""
    h_n, w_n = int(patch_height_num), int(patch_width_num)
    pos = np.asarray(pos_weight)                              # (MAX_PATCHES+1, D)
    position_for_class = pos[0]
    grid = pos[1:].reshape(PATCH_NUM_WIDTH, PATCH_NUM_HEIGHT,
                           POSITION_EMBEDDING_LENGTH)
    Mh = _torch_bicubic_matrix(h_n, PATCH_NUM_WIDTH)          # axis 0 of grid
    Mw = _torch_bicubic_matrix(w_n, PATCH_NUM_HEIGHT)         # axis 1 of grid
    resized = np.einsum("ap,bq,pqd->abd", Mh, Mw, grid.astype(np.float32))
    resized = resized.reshape(h_n * w_n, POSITION_EMBEDDING_LENGTH)
    padded = np.zeros((MAX_PATCHES, POSITION_EMBEDDING_LENGTH), np.float32)
    padded[: h_n * w_n] = resized
    return np.concatenate(
        [position_for_class.reshape(1, POSITION_EMBEDDING_LENGTH), padded],
        0).astype(np.float32)                                 # (SEQ, D)


def prepare_position_embeddings(pos_weight, hw_patch_nums):
    """Host-side precompute, hoisted out of the jitted forward."""
    return jnp.asarray(np.stack(
        [get_position_embedding(pos_weight, h, w) for (h, w) in hw_patch_nums],
        axis=0), jnp.float32)                                 # (B, SEQ, D)


# ------------------------------ parameters -----------------------------------
def init_params(key):
    def nrm(k, shape, s=0.02):
        return jax.random.normal(k, shape, jnp.float32) * s

    keys = jax.random.split(key, 8 + NUM_LAYERS)
    params = {
        "patch_w": nrm(keys[0], (EMBED, NUM_CHANNELS, PATCH_SIZE, PATCH_SIZE)),
        "class_embedding": nrm(keys[1], (EMBED,)),
        "pos_embedding": nrm(keys[2], (MAX_PATCHES + 1, EMBED)),
        "pre_ln_g": jnp.ones((EMBED,), jnp.float32),
        "pre_ln_b": jnp.zeros((EMBED,), jnp.float32),
        "layers": [],
    }
    for li in range(NUM_LAYERS):
        lk = jax.random.split(keys[8 + li], 8)
        params["layers"].append({
            "ln1_g": jnp.ones((EMBED,), jnp.float32),
            "ln1_b": jnp.zeros((EMBED,), jnp.float32),
            "q_w": nrm(lk[0], (EMBED, EMBED)), "q_b": jnp.zeros((EMBED,)),
            "k_w": nrm(lk[1], (EMBED, EMBED)), "k_b": jnp.zeros((EMBED,)),
            "v_w": nrm(lk[2], (EMBED, EMBED)), "v_b": jnp.zeros((EMBED,)),
            "o_w": nrm(lk[3], (EMBED, EMBED)), "o_b": jnp.zeros((EMBED,)),
            "ln2_g": jnp.ones((EMBED,), jnp.float32),
            "ln2_b": jnp.zeros((EMBED,), jnp.float32),
            "fc1_w": nrm(lk[4], (EMBED, INTERMEDIATE)),
            "fc1_b": jnp.zeros((INTERMEDIATE,)),
            "fc2_w": nrm(lk[5], (INTERMEDIATE, EMBED)),
            "fc2_b": jnp.zeros((EMBED,)),
        })
    return params


def prepare_weights(params):
    """Pack module parameters into the fused / stacked layouts the Pallas
    kernel consumes: QKV fused, only L_USED layers kept, per-layer weights
    stacked on a leading layer axis, matmul weights in bf16."""
    def stack(fn, dtype=None):
        x = jnp.stack([fn(l) for l in params["layers"][:L_USED]], axis=0)
        return x.astype(dtype) if dtype is not None else x

    return {
        "conv_w": params["patch_w"].reshape(EMBED, -1).T.astype(MXU_DTYPE),
        "cls": params["class_embedding"].reshape(1, EMBED),
        "pre_ln_g": params["pre_ln_g"].reshape(1, EMBED),
        "pre_ln_b": params["pre_ln_b"].reshape(1, EMBED),
        "enc": {
            "ln1_g": stack(lambda l: l["ln1_g"].reshape(1, EMBED)),
            "ln1_b": stack(lambda l: l["ln1_b"].reshape(1, EMBED)),
            "qkv_w": stack(lambda l: jnp.concatenate(
                [l["q_w"], l["k_w"], l["v_w"]], axis=1), MXU_DTYPE),
            "qkv_b": stack(lambda l: jnp.concatenate(
                [l["q_b"], l["k_b"], l["v_b"]]).reshape(1, 3 * EMBED)),
            "o_w": stack(lambda l: l["o_w"], MXU_DTYPE),
            "o_b": stack(lambda l: l["o_b"].reshape(1, EMBED)),
            "ln2_g": stack(lambda l: l["ln2_g"].reshape(1, EMBED)),
            "ln2_b": stack(lambda l: l["ln2_b"].reshape(1, EMBED)),
            "fc1_w": stack(lambda l: l["fc1_w"], MXU_DTYPE),
            "fc1_b": stack(lambda l: l["fc1_b"].reshape(1, INTERMEDIATE)),
            "fc2_w": stack(lambda l: l["fc2_w"], MXU_DTYPE),
            "fc2_b": stack(lambda l: l["fc2_b"].reshape(1, EMBED)),
        },
    }


# ------------------------------ tower forward --------------------------------
@jax.jit
def tower_forward(prepared, pixel_values, pos, attention_mask):
    B, C, H, W = pixel_values.shape
    p = PATCH_SIZE
    nP = (H // p) * (W // p)

    # unfold NCHW image into conv-as-matmul rows, row-major over the patch grid
    # (matches torch Conv2d(stride=kernel=patch).flatten(2).transpose(1, 2))
    x = pixel_values.reshape(B, C, H // p, p, W // p, p)
    patches = x.transpose(0, 2, 4, 1, 3, 5).reshape(B, nP, C * p * p)

    # additive key mask (True -> 0, False -> finfo.min); broadcast to (SEQ,SEQ)
    # happens inside the attention kernel.
    neg = jnp.finfo(jnp.float32).min
    mask_add = jnp.where(attention_mask, 0.0, neg).astype(jnp.float32)[:, None, :]

    # one fused kernel: embeddings + pre-LN + L_USED encoder layers; output is
    # exactly feature_select(hidden_states[SELECT_LAYER]) with CLS dropped.
    feats = tower_pallas(patches, mask_add, pos, prepared)
    return feats.astype(pixel_values.dtype)
    # TODO(synk): post_layernorm / pooled_output is unused by feature_select,
    # so it is intentionally not computed.


# ---------------------------------- main --------------------------------------
if __name__ == "__main__":
    key = jax.random.PRNGKey(0)
    kp, kx = jax.random.split(key)
    params = init_params(kp)
    prepared = prepare_weights(params)

    B = 2
    pixel_values = jax.random.normal(
        kx, (B, NUM_CHANNELS, IMAGE_SIZE, IMAGE_SIZE), jnp.float32)
    # per-image (patch_height_num, patch_width_num); second one exercises
    # bicubic down-resize + zero padding of position embeddings.
    hw_patch_nums = [(PATCH_NUM_HEIGHT, PATCH_NUM_WIDTH), (3, 2)]
    pos = prepare_position_embeddings(params["pos_embedding"], hw_patch_nums)
    valid = np.array([1 + h * w for (h, w) in hw_patch_nums])
    attention_mask = jnp.asarray(
        np.arange(SEQ)[None, :] < valid[:, None])              # (B, SEQ) bool

    feats = tower_forward(prepared, pixel_values, pos, attention_mask)
    feats = jax.block_until_ready(feats)
    assert feats.shape == (B, OUT_TOKENS, EMBED), feats.shape
    assert feats.dtype == pixel_values.dtype
    assert bool(jnp.all(jnp.isfinite(feats)))
    print("KERNEL_OK")
</pallas_src>

<mosaic_0001>
module attributes {stable_mosaic.version = 11 : i64} {
  func.func @_tower_kernel(%arg0: i32, %arg1: i32, %arg2: memref<1x1x17xf32, #tpu.memory_space<vmem>>, %arg3: memref<1x16x48xf32, #tpu.memory_space<vmem>>, %arg4: memref<48x128xbf16, #tpu.memory_space<vmem>>, %arg5: memref<1x128xf32, #tpu.memory_space<vmem>>, %arg6: memref<1x17x128xf32, #tpu.memory_space<vmem>>, %arg7: memref<1x128xf32, #tpu.memory_space<vmem>>, %arg8: memref<1x128xf32, #tpu.memory_space<vmem>>, %arg9: memref<1x1x128xf32, #tpu.memory_space<vmem>>, %arg10: memref<1x1x128xf32, #tpu.memory_space<vmem>>, %arg11: memref<1x128x384xbf16, #tpu.memory_space<vmem>>, %arg12: memref<1x1x384xf32, #tpu.memory_space<vmem>>, %arg13: memref<1x128x128xbf16, #tpu.memory_space<vmem>>, %arg14: memref<1x1x128xf32, #tpu.memory_space<vmem>>, %arg15: memref<1x1x128xf32, #tpu.memory_space<vmem>>, %arg16: memref<1x1x128xf32, #tpu.memory_space<vmem>>, %arg17: memref<1x128x256xbf16, #tpu.memory_space<vmem>>, %arg18: memref<1x1x256xf32, #tpu.memory_space<vmem>>, %arg19: memref<1x256x128xbf16, #tpu.memory_space<vmem>>, %arg20: memref<1x1x128xf32, #tpu.memory_space<vmem>>, %arg21: memref<1x16x128xf32, #tpu.memory_space<vmem>>, %arg22: memref<17x128xf32, #tpu.memory_space<vmem>>) attributes {dimension_semantics = [#tpu.dimension_semantics<parallel>, #tpu.dimension_semantics<arbitrary>], iteration_bounds = array<i64: 2, 2>, scalar_prefetch = 0 : i64, scratch_operands = 1 : i64, tpu.core_type = #tpu.core_type<tc>, window_params = [{transform_indices = @transform_0, window_bounds = array<i64: 1, 1, 17>}, {transform_indices = @transform_1, window_bounds = array<i64: 1, 16, 48>}, {pipeline_mode = #tpu.pipeline_mode<synchronous>, transform_indices = @transform_2, window_bounds = array<i64: 48, 128>}, {pipeline_mode = #tpu.pipeline_mode<synchronous>, transform_indices = @transform_3, window_bounds = array<i64: 1, 128>}, {transform_indices = @transform_4, window_bounds = array<i64: 1, 17, 128>}, {pipeline_mode = #tpu.pipeline_mode<synchronous>, transform_indices = @transform_5, window_bounds = array<i64: 1, 128>}, {pipeline_mode = #tpu.pipeline_mode<synchronous>, transform_indices = @transform_6, window_bounds = array<i64: 1, 128>}, {transform_indices = @transform_7, window_bounds = array<i64: 1, 1, 128>}, {transform_indices = @transform_8, window_bounds = array<i64: 1, 1, 128>}, {transform_indices = @transform_9, window_bounds = array<i64: 1, 128, 384>}, {transform_indices = @transform_10, window_bounds = array<i64: 1, 1, 384>}, {transform_indices = @transform_11, window_bounds = array<i64: 1, 128, 128>}, {transform_indices = @transform_12, window_bounds = array<i64: 1, 1, 128>}, {transform_indices = @transform_13, window_bounds = array<i64: 1, 1, 128>}, {transform_indices = @transform_14, window_bounds = array<i64: 1, 1, 128>}, {transform_indices = @transform_15, window_bounds = array<i64: 1, 128, 256>}, {transform_indices = @transform_16, window_bounds = array<i64: 1, 1, 256>}, {transform_indices = @transform_17, window_bounds = array<i64: 1, 256, 128>}, {transform_indices = @transform_18, window_bounds = array<i64: 1, 1, 128>}, {transform_indices = @transform_19, window_bounds = array<i64: 1, 16, 128>}]} {
    %c0_i32 = arith.constant 0 : i32
    %0 = arith.cmpi eq, %arg1, %c0_i32 : i32
    %1 = arith.extui %0 : i1 to i32
    %c0_i32_0 = arith.constant 0 : i32
    %2 = arith.cmpi ne, %1, %c0_i32_0 : i32
    scf.if %2 {
      %c0_79 = arith.constant 0 : index
      %c0_80 = arith.constant 0 : index
      %c0_81 = arith.constant 0 : index
      %197 = vector.load %arg3[%c0_79, %c0_80, %c0_81] : memref<1x16x48xf32, #tpu.memory_space<vmem>>, vector<1x16x48xf32>
      %198 = vector.shape_cast %197 : vector<1x16x48xf32> to vector<16x48xf32>
      %c0_82 = arith.constant 0 : index
      %c0_83 = arith.constant 0 : index
      %199 = vector.load %arg4[%c0_82, %c0_83] : memref<48x128xbf16, #tpu.memory_space<vmem>>, vector<48x128xbf16>
      %200 = arith.truncf %198 : vector<16x48xf32> to vector<16x48xbf16>
      %cst_84 = arith.constant dense<0.000000e+00> : vector<16x128xf32>
      %201 = tpu.matmul %200, %199, %cst_84 {dimension_numbers = #tpu.dot_dimension_numbers<[1], [0], [0], [1], [0, 0, 1, 1], [], []>} : vector<16x48xbf16>, vector<48x128xbf16>, vector<16x128xf32> -> vector<16x128xf32>
      %c0_85 = arith.constant 0 : index
      %c0_86 = arith.constant 0 : index
      %202 = vector.load %arg5[%c0_85, %c0_86] : memref<1x128xf32, #tpu.memory_space<vmem>>, vector<1x128xf32>
      %203 = tpu.concatenate %202, %201 in 0 : vector<1x128xf32>, vector<16x128xf32> -> vector<17x128xf32>
      %c0_87 = arith.constant 0 : index
      %c0_88 = arith.constant 0 : index
      %c0_89 = arith.constant 0 : index
      %204 = vector.load %arg6[%c0_87, %c0_88, %c0_89] : memref<1x17x128xf32, #tpu.memory_space<vmem>>, vector<1x17x128xf32>
      %205 = vector.shape_cast %204 : vector<1x17x128xf32> to vector<17x128xf32>
      %206 = arith.addf %203, %205 : vector<17x128xf32>
      %c0_90 = arith.constant 0 : index
      %c0_91 = arith.constant 0 : index
      %207 = vector.load %arg7[%c0_90, %c0_91] : memref<1x128xf32, #tpu.memory_space<vmem>>, vector<1x128xf32>
      %c0_92 = arith.constant 0 : index
      %c0_93 = arith.constant 0 : index
      %208 = vector.load %arg8[%c0_92, %c0_93] : memref<1x128xf32, #tpu.memory_space<vmem>>, vector<1x128xf32>
      %cst_94 = arith.constant dense<0.000000e+00> : vector<17xf32>
      %209 = vector.multi_reduction <add>, %206, %cst_94 [1] : vector<17x128xf32> to vector<17xf32>
      %210 = vector.shape_cast %209 : vector<17xf32> to vector<17x1xf32>
      %cst_95 = arith.constant 1.280000e+02 : f32
      %211 = vector.broadcast %cst_95 : f32 to vector<17x1xf32>
      %212 = arith.divf %210, %211 : vector<17x1xf32>
      %213 = vector.broadcast %212 : vector<17x1xf32> to vector<17x128xf32>
      %214 = arith.subf %206, %213 : vector<17x128xf32>
      %215 = arith.mulf %214, %214 : vector<17x128xf32>
      %cst_96 = arith.constant dense<0.000000e+00> : vector<17xf32>
      %216 = vector.multi_reduction <add>, %215, %cst_96 [1] : vector<17x128xf32> to vector<17xf32>
      %217 = vector.shape_cast %216 : vector<17xf32> to vector<17x1xf32>
      %cst_97 = arith.constant 1.280000e+02 : f32
      %218 = vector.broadcast %cst_97 : f32 to vector<17x1xf32>
      %219 = arith.divf %217, %218 : vector<17x1xf32>
      %220 = vector.broadcast %212 : vector<17x1xf32> to vector<17x128xf32>
      %221 = arith.subf %206, %220 : vector<17x128xf32>
      %cst_98 = arith.constant 9.99999974E-6 : f32
      %222 = vector.broadcast %cst_98 : f32 to vector<17x1xf32>
      %223 = arith.addf %219, %222 : vector<17x1xf32>
      %224 = math.rsqrt %223 : vector<17x1xf32>
      %225 = vector.broadcast %224 : vector<17x1xf32> to vector<17x128xf32>
      %226 = arith.mulf %221, %225 : vector<17x128xf32>
      %227 = vector.broadcast %207 : vector<1x128xf32> to vector<17x128xf32>
      %228 = arith.mulf %226, %227 : vector<17x128xf32>
      %229 = vector.broadcast %208 : vector<1x128xf32> to vector<17x128xf32>
      %230 = arith.addf %228, %229 : vector<17x128xf32>
      %c0_99 = arith.constant 0 : index
      %c0_100 = arith.constant 0 : index
      %231 = vector.load %arg22[%c0_99, %c0_100] : memref<17x128xf32, #tpu.memory_space<vmem>>, vector<17x128xf32>
      tpu.vector_store %arg22[%c0_99, %c0_100], %230 {strides = array<i32>} : memref<17x128xf32, #tpu.memory_space<vmem>>, vector<17x128xf32>,
    } else {
    }
    %c0 = arith.constant 0 : index
    %c0_1 = arith.constant 0 : index
    %3 = vector.load %arg22[%c0, %c0_1] : memref<17x128xf32, #tpu.memory_space<vmem>>, vector<17x128xf32>
    %c0_2 = arith.constant 0 : index
    %c0_3 = arith.constant 0 : index
    %c0_4 = arith.constant 0 : index
    %4 = vector.load %arg2[%c0_2, %c0_3, %c0_4] : memref<1x1x17xf32, #tpu.memory_space<vmem>>, vector<1x1x17xf32>
    %5 = vector.shape_cast %4 : vector<1x1x17xf32> to vector<1x17xf32>
    %c0_5 = arith.constant 0 : index
    %c0_6 = arith.constant 0 : index
    %c0_7 = arith.constant 0 : index
    %6 = vector.load %arg9[%c0_5, %c0_6, %c0_7] : memref<1x1x128xf32, #tpu.memory_space<vmem>>, vector<1x1x128xf32>
    %7 = vector.shape_cast %6 : vector<1x1x128xf32> to vector<1x128xf32>
    %c0_8 = arith.constant 0 : index
    %c0_9 = arith.constant 0 : index
    %c0_10 = arith.constant 0 : index
    %8 = vector.load %arg10[%c0_8, %c0_9, %c0_10] : memref<1x1x128xf32, #tpu.memory_space<vmem>>, vector<1x1x128xf32>
    %9 = vector.shape_cast %8 : vector<1x1x128xf32> to vector<1x128xf32>
    %cst = arith.constant dense<0.000000e+00> : vector<17xf32>
    %10 = vector.multi_reduction <add>, %3, %cst [1] : vector<17x128xf32> to vector<17xf32>
    %11 = vector.shape_cast %10 : vector<17xf32> to vector<17x1xf32>
    %cst_11 = arith.constant 1.280000e+02 : f32
    %12 = vector.broadcast %cst_11 : f32 to vector<17x1xf32>
    %13 = arith.divf %11, %12 : vector<17x1xf32>
    %14 = vector.broadcast %13 : vector<17x1xf32> to vector<17x128xf32>
    %15 = arith.subf %3, %14 : vector<17x128xf32>
    %16 = arith.mulf %15, %15 : vector<17x128xf32>
    %cst_12 = arith.constant dense<0.000000e+00> : vector<17xf32>
    %17 = vector.multi_reduction <add>, %16, %cst_12 [1] : vector<17x128xf32> to vector<17xf32>
    %18 = vector.shape_cast %17 : vector<17xf32> to vector<17x1xf32>
    %cst_13 = arith.constant 1.280000e+02 : f32
    %19 = vector.broadcast %cst_13 : f32 to vector<17x1xf32>
    %20 = arith.divf %18, %19 : vector<17x1xf32>
    %21 = vector.broadcast %13 : vector<17x1xf32> to vector<17x128xf32>
    %22 = arith.subf %3, %21 : vector<17x128xf32>
    %cst_14 = arith.constant 9.99999974E-6 : f32
    %23 = vector.broadcast %cst_14 : f32 to vector<17x1xf32>
    %24 = arith.addf %20, %23 : vector<17x1xf32>
    %25 = math.rsqrt %24 : vector<17x1xf32>
    %26 = vector.broadcast %25 : vector<17x1xf32> to vector<17x128xf32>
    %27 = arith.mulf %22, %26 : vector<17x128xf32>
    %28 = vector.broadcast %7 : vector<1x128xf32> to vector<17x128xf32>
    %29 = arith.mulf %27, %28 : vector<17x128xf32>
    %30 = vector.broadcast %9 : vector<1x128xf32> to vector<17x128xf32>
    %31 = arith.addf %29, %30 : vector<17x128xf32>
    %c0_15 = arith.constant 0 : index
    %c0_16 = arith.constant 0 : index
    %c0_17 = arith.constant 0 : index
    %32 = vector.load %arg11[%c0_15, %c0_16, %c0_17] : memref<1x128x384xbf16, #tpu.memory_space<vmem>>, vector<1x128x384xbf16>
    %33 = vector.shape_cast %32 : vector<1x128x384xbf16> to vector<128x384xbf16>
    %34 = arith.truncf %31 : vector<17x128xf32> to vector<17x128xbf16>
    %cst_18 = arith.constant dense<0.000000e+00> : vector<17x384xf32>
    %35 = tpu.matmul %34, %33, %cst_18 {dimension_numbers = #tpu.dot_dimension_numbers<[1], [0], [0], [1], [0, 0, 1, 1], [], []>} : vector<17x128xbf16>, vector<128x384xbf16>, vector<17x384xf32> -> vector<17x384xf32>
    %c0_19 = arith.constant 0 : index
    %c0_20 = arith.constant 0 : index
    %c0_21 = arith.constant 0 : index
    %36 = vector.load %arg12[%c0_19, %c0_20, %c0_21] : memref<1x1x384xf32, #tpu.memory_space<vmem>>, vector<1x1x384xf32>
    %37 = vector.shape_cast %36 : vector<1x1x384xf32> to vector<1x384xf32>
    %38 = vector.broadcast %37 : vector<1x384xf32> to vector<17x384xf32>
    %39 = arith.addf %35, %38 : vector<17x384xf32>
    %40 = vector.extract_strided_slice %39 {offsets = [0, 0], sizes = [17, 32], strides = [1, 1]} : vector<17x384xf32> to vector<17x32xf32>
    %cst_22 = arith.constant 0.176776692 : f32
    %41 = vector.broadcast %cst_22 : f32 to vector<17x32xf32>
    %42 = arith.mulf %40, %41 : vector<17x32xf32>
    %43 = vector.extract_strided_slice %39 {offsets = [0, 128], sizes = [17, 32], strides = [1, 1]} : vector<17x384xf32> to vector<17x32xf32>
    %44 = vector.extract_strided_slice %39 {offsets = [0, 256], sizes = [17, 32], strides = [1, 1]} : vector<17x384xf32> to vector<17x32xf32>
    %45 = arith.truncf %42 : vector<17x32xf32> to vector<17x32xbf16>
    %46 = arith.truncf %43 : vector<17x32xf32> to vector<17x32xbf16>
    %cst_23 = arith.constant dense<0.000000e+00> : vector<17x17xf32>
    %47 = tpu.matmul %45, %46, %cst_23 {dimension_numbers = #tpu.dot_dimension_numbers<[1], [1], [0], [0], [0, 0, 1, 0], [], []>} : vector<17x32xbf16>, vector<17x32xbf16>, vector<17x17xf32> -> vector<17x17xf32>
    %48 = vector.broadcast %5 : vector<1x17xf32> to vector<17x17xf32>
    %49 = arith.addf %47, %48 : vector<17x17xf32>
    %cst_24 = arith.constant dense<0xFF800000> : vector<17xf32>
    %50 = vector.multi_reduction <maximumf>, %49, %cst_24 [1] : vector<17x17xf32> to vector<17xf32>
    %51 = vector.shape_cast %50 : vector<17xf32> to vector<17x1xf32>
    %52 = vector.broadcast %51 : vector<17x1xf32> to vector<17x17xf32>
    %53 = arith.subf %49, %52 : vector<17x17xf32>
    %54 = math.exp %53 : vector<17x17xf32>
    %cst_25 = arith.constant dense<0.000000e+00> : vector<17xf32>
    %55 = vector.multi_reduction <add>, %54, %cst_25 [1] : vector<17x17xf32> to vector<17xf32>
    %56 = vector.shape_cast %55 : vector<17xf32> to vector<17x1xf32>
    %57 = tpu.reciprocal %56 {approx = true} : vector<17x1xf32> -> vector<17x1xf32>
    %58 = vector.broadcast %57 : vector<17x1xf32> to vector<17x17xf32>
    %59 = arith.mulf %54, %58 : vector<17x17xf32>
    %60 = arith.truncf %59 : vector<17x17xf32> to vector<17x17xbf16>
    %61 = arith.truncf %44 : vector<17x32xf32> to vector<17x32xbf16>
    %cst_26 = arith.constant dense<0.000000e+00> : vector<17x32xf32>
    %62 = tpu.matmul %60, %61, %cst_26 {dimension_numbers = #tpu.dot_dimension_numbers<[1], [0], [0], [1], [0, 0, 1, 1], [], []>} : vector<17x17xbf16>, vector<17x32xbf16>, vector<17x32xf32> -> vector<17x32xf32>
    %63 = vector.extract_strided_slice %39 {offsets = [0, 32], sizes = [17, 32], strides = [1, 1]} : vector<17x384xf32> to vector<17x32xf32>
    %cst_27 = arith.constant 0.176776692 : f32
    %64 = vector.broadcast %cst_27 : f32 to vector<17x32xf32>
    %65 = arith.mulf %63, %64 : vector<17x32xf32>
    %66 = vector.extract_strided_slice %39 {offsets = [0, 160], sizes = [17, 32], strides = [1, 1]} : vector<17x384xf32> to vector<17x32xf32>
    %67 = vector.extract_strided_slice %39 {offsets = [0, 288], sizes = [17, 32], strides = [1, 1]} : vector<17x384xf32> to vector<17x32xf32>
    %68 = arith.truncf %65 : vector<17x32xf32> to vector<17x32xbf16>
    %69 = arith.truncf %66 : vector<17x32xf32> to vector<17x32xbf16>
    %cst_28 = arith.constant dense<0.000000e+00> : vector<17x17xf32>
    %70 = tpu.matmul %68, %69, %cst_28 {dimension_numbers = #tpu.dot_dimension_numbers<[1], [1], [0], [0], [0, 0, 1, 0], [], []>} : vector<17x32xbf16>, vector<17x32xbf16>, vector<17x17xf32> -> vector<17x17xf32>
    %71 = vector.broadcast %5 : vector<1x17xf32> to vector<17x17xf32>
    %72 = arith.addf %70, %71 : vector<17x17xf32>
    %cst_29 = arith.constant dense<0xFF800000> : vector<17xf32>
    %73 = vector.multi_reduction <maximumf>, %72, %cst_29 [1] : vector<17x17xf32> to vector<17xf32>
    %74 = vector.shape_cast %73 : vector<17xf32> to vector<17x1xf32>
    %75 = vector.broadcast %74 : vector<17x1xf32> to vector<17x17xf32>
    %76 = arith.subf %72, %75 : vector<17x17xf32>
    %77 = math.exp %76 : vector<17x17xf32>
    %cst_30 = arith.constant dense<0.000000e+00> : vector<17xf32>
    %78 = vector.multi_reduction <add>, %77, %cst_30 [1] : vector<17x17xf32> to vector<17xf32>
    %79 = vector.shape_cast %78 : vector<17xf32> to vector<17x1xf32>
    %80 = tpu.reciprocal %79 {approx = true} : vector<17x1xf32> -> vector<17x1xf32>
    %81 = vector.broadcast %80 : vector<17x1xf32> to vector<17x17xf32>
    %82 = arith.mulf %77, %81 : vector<17x17xf32>
    %83 = arith.truncf %82 : vector<17x17xf32> to vector<17x17xbf16>
    %84 = arith.truncf %67 : vector<17x32xf32> to vector<17x32xbf16>
    %cst_31 = arith.constant dense<0.000000e+00> : vector<17x32xf32>
    %85 = tpu.matmul %83, %84, %cst_31 {dimension_numbers = #tpu.dot_dimension_numbers<[1], [0], [0], [1], [0, 0, 1, 1], [], []>} : vector<17x17xbf16>, vector<17x32xbf16>, vector<17x32xf32> -> vector<17x32xf32>
    %86 = vector.extract_strided_slice %39 {offsets = [0, 64], sizes = [17, 32], strides = [1, 1]} : vector<17x384xf32> to vector<17x32xf32>
    %cst_32 = arith.constant 0.176776692 : f32
    %87 = vector.broadcast %cst_32 : f32 to vector<17x32xf32>
    %88 = arith.mulf %86, %87 : vector<17x32xf32>
    %89 = vector.extract_strided_slice %39 {offsets = [0, 192], sizes = [17, 32], strides = [1, 1]} : vector<17x384xf32> to vector<17x32xf32>
    %90 = vector.extract_strided_slice %39 {offsets = [0, 320], sizes = [17, 32], strides = [1, 1]} : vector<17x384xf32> to vector<17x32xf32>
    %91 = arith.truncf %88 : vector<17x32xf32> to vector<17x32xbf16>
    %92 = arith.truncf %89 : vector<17x32xf32> to vector<17x32xbf16>
    %cst_33 = arith.constant dense<0.000000e+00> : vector<17x17xf32>
    %93 = tpu.matmul %91, %92, %cst_33 {dimension_numbers = #tpu.dot_dimension_numbers<[1], [1], [0], [0], [0, 0, 1, 0], [], []>} : vector<17x32xbf16>, vector<17x32xbf16>, vector<17x17xf32> -> vector<17x17xf32>
    %94 = vector.broadcast %5 : vector<1x17xf32> to vector<17x17xf32>
    %95 = arith.addf %93, %94 : vector<17x17xf32>
    %cst_34 = arith.constant dense<0xFF800000> : vector<17xf32>
    %96 = vector.multi_reduction <maximumf>, %95, %cst_34 [1] : vector<17x17xf32> to vector<17xf32>
    %97 = vector.shape_cast %96 : vector<17xf32> to vector<17x1xf32>
    %98 = vector.broadcast %97 : vector<17x1xf32> to vector<17x17xf32>
    %99 = arith.subf %95, %98 : vector<17x17xf32>
    %100 = math.exp %99 : vector<17x17xf32>
    %cst_35 = arith.constant dense<0.000000e+00> : vector<17xf32>
    %101 = vector.multi_reduction <add>, %100, %cst_35 [1] : vector<17x17xf32> to vector<17xf32>
    %102 = vector.shape_cast %101 : vector<17xf32> to vector<17x1xf32>
    %103 = tpu.reciprocal %102 {approx = true} : vector<17x1xf32> -> vector<17x1xf32>
    %104 = vector.broadcast %103 : vector<17x1xf32> to vector<17x17xf32>
    %105 = arith.mulf %100, %104 : vector<17x17xf32>
    %106 = arith.truncf %105 : vector<17x17xf32> to vector<17x17xbf16>
    %107 = arith.truncf %90 : vector<17x32xf32> to vector<17x32xbf16>
    %cst_36 = arith.constant dense<0.000000e+00> : vector<17x32xf32>
    %108 = tpu.matmul %106, %107, %cst_36 {dimension_numbers = #tpu.dot_dimension_numbers<[1], [0], [0], [1], [0, 0, 1, 1], [], []>} : vector<17x17xbf16>, vector<17x32xbf16>, vector<17x32xf32> -> vector<17x32xf32>
    %109 = vector.extract_strided_slice %39 {offsets = [0, 96], sizes = [17, 32], strides = [1, 1]} : vector<17x384xf32> to vector<17x32xf32>
    %cst_37 = arith.constant 0.176776692 : f32
    %110 = vector.broadcast %cst_37 : f32 to vector<17x32xf32>
    %111 = arith.mulf %109, %110 : vector<17x32xf32>
    %112 = vector.extract_strided_slice %39 {offsets = [0, 224], sizes = [17, 32], strides = [1, 1]} : vector<17x384xf32> to vector<17x32xf32>
    %113 = vector.extract_strided_slice %39 {offsets = [0, 352], sizes = [17, 32], strides = [1, 1]} : vector<17x384xf32> to vector<17x32xf32>
    %114 = arith.truncf %111 : vector<17x32xf32> to vector<17x32xbf16>
    %115 = arith.truncf %112 : vector<17x32xf32> to vector<17x32xbf16>
    %cst_38 = arith.constant dense<0.000000e+00> : vector<17x17xf32>
    %116 = tpu.matmul %114, %115, %cst_38 {dimension_numbers = #tpu.dot_dimension_numbers<[1], [1], [0], [0], [0, 0, 1, 0], [], []>} : vector<17x32xbf16>, vector<17x32xbf16>, vector<17x17xf32> -> vector<17x17xf32>
    %117 = vector.broadcast %5 : vector<1x17xf32> to vector<17x17xf32>
    %118 = arith.addf %116, %117 : vector<17x17xf32>
    %cst_39 = arith.constant dense<0xFF800000> : vector<17xf32>
    %119 = vector.multi_reduction <maximumf>, %118, %cst_39 [1] : vector<17x17xf32> to vector<17xf32>
    %120 = vector.shape_cast %119 : vector<17xf32> to vector<17x1xf32>
    %121 = vector.broadcast %120 : vector<17x1xf32> to vector<17x17xf32>
    %122 = arith.subf %118, %121 : vector<17x17xf32>
    %123 = math.exp %122 : vector<17x17xf32>
    %cst_40 = arith.constant dense<0.000000e+00> : vector<17xf32>
    %124 = vector.multi_reduction <add>, %123, %cst_40 [1] : vector<17x17xf32> to vector<17xf32>
    %125 = vector.shape_cast %124 : vector<17xf32> to vector<17x1xf32>
    %126 = tpu.reciprocal %125 {approx = true} : vector<17x1xf32> -> vector<17x1xf32>
    %127 = vector.broadcast %126 : vector<17x1xf32> to vector<17x17xf32>
    %128 = arith.mulf %123, %127 : vector<17x17xf32>
    %129 = arith.truncf %128 : vector<17x17xf32> to vector<17x17xbf16>
    %130 = arith.truncf %113 : vector<17x32xf32> to vector<17x32xbf16>
    %cst_41 = arith.constant dense<0.000000e+00> : vector<17x32xf32>
    %131 = tpu.matmul %129, %130, %cst_41 {dimension_numbers = #tpu.dot_dimension_numbers<[1], [0], [0], [1], [0, 0, 1, 1], [], []>} : vector<17x17xbf16>, vector<17x32xbf16>, vector<17x32xf32> -> vector<17x32xf32>
    %132 = tpu.concatenate %62, %85, %108, %131 in 1 : vector<17x32xf32>, vector<17x32xf32>, vector<17x32xf32>, vector<17x32xf32> -> vector<17x128xf32>
    %c0_42 = arith.constant 0 : index
    %c0_43 = arith.constant 0 : index
    %c0_44 = arith.constant 0 : index
    %133 = vector.load %arg13[%c0_42, %c0_43, %c0_44] : memref<1x128x128xbf16, #tpu.memory_space<vmem>>, vector<1x128x128xbf16>
    %134 = vector.shape_cast %133 : vector<1x128x128xbf16> to vector<128x128xbf16>
    %135 = arith.truncf %132 : vector<17x128xf32> to vector<17x128xbf16>
    %cst_45 = arith.constant dense<0.000000e+00> : vector<17x128xf32>
    %136 = tpu.matmul %135, %134, %cst_45 {dimension_numbers = #tpu.dot_dimension_numbers<[1], [0], [0], [1], [0, 0, 1, 1], [], []>} : vector<17x128xbf16>, vector<128x128xbf16>, vector<17x128xf32> -> vector<17x128xf32>
    %137 = arith.addf %3, %136 : vector<17x128xf32>
    %c0_46 = arith.constant 0 : index
    %c0_47 = arith.constant 0 : index
    %c0_48 = arith.constant 0 : index
    %138 = vector.load %arg14[%c0_46, %c0_47, %c0_48] : memref<1x1x128xf32, #tpu.memory_space<vmem>>, vector<1x1x128xf32>
    %139 = vector.shape_cast %138 : vector<1x1x128xf32> to vector<1x128xf32>
    %140 = vector.broadcast %139 : vector<1x128xf32> to vector<17x128xf32>
    %141 = arith.addf %137, %140 : vector<17x128xf32>
    %c0_49 = arith.constant 0 : index
    %c0_50 = arith.constant 0 : index
    %c0_51 = arith.constant 0 : index
    %142 = vector.load %arg15[%c0_49, %c0_50, %c0_51] : memref<1x1x128xf32, #tpu.memory_space<vmem>>, vector<1x1x128xf32>
    %143 = vector.shape_cast %142 : vector<1x1x128xf32> to vector<1x128xf32>
    %c0_52 = arith.constant 0 : index
    %c0_53 = arith.constant 0 : index
    %c0_54 = arith.constant 0 : index
    %144 = vector.load %arg16[%c0_52, %c0_53, %c0_54] : memref<1x1x128xf32, #tpu.memory_space<vmem>>, vector<1x1x128xf32>
    %145 = vector.shape_cast %144 : vector<1x1x128xf32> to vector<1x128xf32>
    %cst_55 = arith.constant dense<0.000000e+00> : vector<17xf32>
    %146 = vector.multi_reduction <add>, %141, %cst_55 [1] : vector<17x128xf32> to vector<17xf32>
    %147 = vector.shape_cast %146 : vector<17xf32> to vector<17x1xf32>
    %cst_56 = arith.constant 1.280000e+02 : f32
    %148 = vector.broadcast %cst_56 : f32 to vector<17x1xf32>
    %149 = arith.divf %147, %148 : vector<17x1xf32>
    %150 = vector.broadcast %149 : vector<17x1xf32> to vector<17x128xf32>
    %151 = arith.subf %141, %150 : vector<17x128xf32>
    %152 = arith.mulf %151, %151 : vector<17x128xf32>
    %cst_57 = arith.constant dense<0.000000e+00> : vector<17xf32>
    %153 = vector.multi_reduction <add>, %152, %cst_57 [1] : vector<17x128xf32> to vector<17xf32>
    %154 = vector.shape_cast %153 : vector<17xf32> to vector<17x1xf32>
    %cst_58 = arith.constant 1.280000e+02 : f32
    %155 = vector.broadcast %cst_58 : f32 to vector<17x1xf32>
    %156 = arith.divf %154, %155 : vector<17x1xf32>
    %157 = vector.broadcast %149 : vector<17x1xf32> to vector<17x128xf32>
    %158 = arith.subf %141, %157 : vector<17x128xf32>
    %cst_59 = arith.constant 9.99999974E-6 : f32
    %159 = vector.broadcast %cst_59 : f32 to vector<17x1xf32>
    %160 = arith.addf %156, %159 : vector<17x1xf32>
    %161 = math.rsqrt %160 : vector<17x1xf32>
    %162 = vector.broadcast %161 : vector<17x1xf32> to vector<17x128xf32>
    %163 = arith.mulf %158, %162 : vector<17x128xf32>
    %164 = vector.broadcast %143 : vector<1x128xf32> to vector<17x128xf32>
    %165 = arith.mulf %163, %164 : vector<17x128xf32>
    %166 = vector.broadcast %145 : vector<1x128xf32> to vector<17x128xf32>
    %167 = arith.addf %165, %166 : vector<17x128xf32>
    %c0_60 = arith.constant 0 : index
    %c0_61 = arith.constant 0 : index
    %c0_62 = arith.constant 0 : index
    %168 = vector.load %arg17[%c0_60, %c0_61, %c0_62] : memref<1x128x256xbf16, #tpu.memory_space<vmem>>, vector<1x128x256xbf16>
    %169 = vector.shape_cast %168 : vector<1x128x256xbf16> to vector<128x256xbf16>
    %170 = arith.truncf %167 : vector<17x128xf32> to vector<17x128xbf16>
    %cst_63 = arith.constant dense<0.000000e+00> : vector<17x256xf32>
    %171 = tpu.matmul %170, %169, %cst_63 {dimension_numbers = #tpu.dot_dimension_numbers<[1], [0], [0], [1], [0, 0, 1, 1], [], []>} : vector<17x128xbf16>, vector<128x256xbf16>, vector<17x256xf32> -> vector<17x256xf32>
    %c0_64 = arith.constant 0 : index
    %c0_65 = arith.constant 0 : index
    %c0_66 = arith.constant 0 : index
    %172 = vector.load %arg18[%c0_64, %c0_65, %c0_66] : memref<1x1x256xf32, #tpu.memory_space<vmem>>, vector<1x1x256xf32>
    %173 = vector.shape_cast %172 : vector<1x1x256xf32> to vector<1x256xf32>
    %174 = vector.broadcast %173 : vector<1x256xf32> to vector<17x256xf32>
    %175 = arith.addf %171, %174 : vector<17x256xf32>
    %cst_67 = arith.constant 1.702000e+00 : f32
    %176 = vector.broadcast %cst_67 : f32 to vector<17x256xf32>
    %177 = arith.mulf %176, %175 : vector<17x256xf32>
    %178 = arith.negf %177 : vector<17x256xf32>
    %179 = math.exp %178 : vector<17x256xf32>
    %cst_68 = arith.constant 1.000000e+00 : f32
    %180 = vector.broadcast %cst_68 : f32 to vector<17x256xf32>
    %181 = arith.addf %180, %179 : vector<17x256xf32>
    %182 = arith.divf %180, %181 : vector<17x256xf32>
    %183 = arith.mulf %175, %182 : vector<17x256xf32>
    %c0_69 = arith.constant 0 : index
    %c0_70 = arith.constant 0 : index
    %c0_71 = arith.constant 0 : index
    %184 = vector.load %arg19[%c0_69, %c0_70, %c0_71] : memref<1x256x128xbf16, #tpu.memory_space<vmem>>, vector<1x256x128xbf16>
    %185 = vector.shape_cast %184 : vector<1x256x128xbf16> to vector<256x128xbf16>
    %186 = arith.truncf %183 : vector<17x256xf32> to vector<17x256xbf16>
    %cst_72 = arith.constant dense<0.000000e+00> : vector<17x128xf32>
    %187 = tpu.matmul %186, %185, %cst_72 {dimension_numbers = #tpu.dot_dimension_numbers<[1], [0], [0], [1], [0, 0, 1, 1], [], []>} : vector<17x256xbf16>, vector<256x128xbf16>, vector<17x128xf32> -> vector<17x128xf32>
    %188 = arith.addf %141, %187 : vector<17x128xf32>
    %c0_73 = arith.constant 0 : index
    %c0_74 = arith.constant 0 : index
    %c0_75 = arith.constant 0 : index
    %189 = vector.load %arg20[%c0_73, %c0_74, %c0_75] : memref<1x1x128xf32, #tpu.memory_space<vmem>>, vector<1x1x128xf32>
    %190 = vector.shape_cast %189 : vector<1x1x128xf32> to vector<1x128xf32>
    %191 = vector.broadcast %190 : vector<1x128xf32> to vector<17x128xf32>
    %192 = arith.addf %188, %191 : vector<17x128xf32>
    %c0_76 = arith.constant 0 : index
    %c0_77 = arith.constant 0 : index
    %193 = vector.load %arg22[%c0_76, %c0_77] : memref<17x128xf32, #tpu.memory_space<vmem>>, vector<17x128xf32>
    tpu.vector_store %arg22[%c0_76, %c0_77], %192 {strides = array<i32>} : memref<17x128xf32, #tpu.memory_space<vmem>>, vector<17x128xf32>,
    %c1_i32 = arith.constant 1 : i32
    %194 = arith.cmpi eq, %arg1, %c1_i32 : i32
    %195 = arith.extui %194 : i1 to i32
    %c0_i32_78 = arith.constant 0 : i32
    %196 = arith.cmpi ne, %195, %c0_i32_78 : i32
    scf.if %196 {
      %197 = vector.extract_strided_slice %192 {offsets = [1, 0], sizes = [16, 128], strides = [1, 1]} : vector<17x128xf32> to vector<16x128xf32>
      %c0_79 = arith.constant 0 : index
      %c0_80 = arith.constant 0 : index
      %c0_81 = arith.constant 0 : index
      %198 = vector.load %arg21[%c0_79, %c0_80, %c0_81] : memref<1x16x128xf32, #tpu.memory_space<vmem>>, vector<1x16x128xf32>
      %199 = vector.shape_cast %198 : vector<1x16x128xf32> to vector<16x128xf32>
      %200 = vector.shape_cast %197 : vector<16x128xf32> to vector<1x16x128xf32>
      tpu.vector_store %arg21[%c0_79, %c0_80, %c0_81], %200 {strides = array<i32>} : memref<1x16x128xf32, #tpu.memory_space<vmem>>, vector<1x16x128xf32>,
    } else {
    }
    return
  }
  func.func @transform_0(%arg0: i32, %arg1: i32) -> (i32, i32, i32) {
    %c0_i32 = arith.constant 0 : i32
    %c0_i32_0 = arith.constant 0 : i32
    %c0_i32_1 = arith.constant 0 : i32
    return %arg0, %c0_i32, %c0_i32_0 : i32, i32, i32
  }
  func.func @transform_1(%arg0: i32, %arg1: i32) -> (i32, i32, i32) {
    %c0_i32 = arith.constant 0 : i32
    %c0_i32_0 = arith.constant 0 : i32
    %c0_i32_1 = arith.constant 0 : i32
    return %arg0, %c0_i32, %c0_i32_0 : i32, i32, i32
  }
  func.func @transform_2(%arg0: i32, %arg1: i32) -> (i32, i32) {
    %c0_i32 = arith.constant 0 : i32
    %c0_i32_0 = arith.constant 0 : i32
    %c0_i32_1 = arith.constant 0 : i32
    return %c0_i32, %c0_i32_0 : i32, i32
  }
  func.func @transform_3(%arg0: i32, %arg1: i32) -> (i32, i32) {
    %c0_i32 = arith.constant 0 : i32
    %c0_i32_0 = arith.constant 0 : i32
    %c0_i32_1 = arith.constant 0 : i32
    return %c0_i32, %c0_i32_0 : i32, i32
  }
  func.func @transform_4(%arg0: i32, %arg1: i32) -> (i32, i32, i32) {
    %c0_i32 = arith.constant 0 : i32
    %c0_i32_0 = arith.constant 0 : i32
    %c0_i32_1 = arith.constant 0 : i32
    return %arg0, %c0_i32, %c0_i32_0 : i32, i32, i32
  }
  func.func @transform_5(%arg0: i32, %arg1: i32) -> (i32, i32) {
    %c0_i32 = arith.constant 0 : i32
    %c0_i32_0 = arith.constant 0 : i32
    %c0_i32_1 = arith.constant 0 : i32
    return %c0_i32, %c0_i32_0 : i32, i32
  }
  func.func @transform_6(%arg0: i32, %arg1: i32) -> (i32, i32) {
    %c0_i32 = arith.constant 0 : i32
    %c0_i32_0 = arith.constant 0 : i32
    %c0_i32_1 = arith.constant 0 : i32
    return %c0_i32, %c0_i32_0 : i32, i32
  }
  func.func @transform_7(%arg0: i32, %arg1: i32) -> (i32, i32, i32) {
    %c0_i32 = arith.constant 0 : i32
    %c0_i32_0 = arith.constant 0 : i32
    %c0_i32_1 = arith.constant 0 : i32
    return %arg1, %c0_i32, %c0_i32_0 : i32, i32, i32
  }
  func.func @transform_8(%arg0: i32, %arg1: i32) -> (i32, i32, i32) {
    %c0_i32 = arith.constant 0 : i32
    %c0_i32_0 = arith.constant 0 : i32
    %c0_i32_1 = arith.constant 0 : i32
    return %arg1, %c0_i32, %c0_i32_0 : i32, i32, i32
  }
  func.func @transform_9(%arg0: i32, %arg1: i32) -> (i32, i32, i32) {
    %c0_i32 = arith.constant 0 : i32
    %c0_i32_0 = arith.constant 0 : i32
    %c0_i32_1 = arith.constant 0 : i32
    return %arg1, %c0_i32, %c0_i32_0 : i32, i32, i32
  }
  func.func @transform_10(%arg0: i32, %arg1: i32) -> (i32, i32, i32) {
    %c0_i32 = arith.constant 0 : i32
    %c0_i32_0 = arith.constant 0 : i32
    %c0_i32_1 = arith.constant 0 : i32
    return %arg1, %c0_i32, %c0_i32_0 : i32, i32, i32
  }
  func.func @transform_11(%arg0: i32, %arg1: i32) -> (i32, i32, i32) {
    %c0_i32 = arith.constant 0 : i32
    %c0_i32_0 = arith.constant 0 : i32
    %c0_i32_1 = arith.constant 0 : i32
    return %arg1, %c0_i32, %c0_i32_0 : i32, i32, i32
  }
  func.func @transform_12(%arg0: i32, %arg1: i32) -> (i32, i32, i32) {
    %c0_i32 = arith.constant 0 : i32
    %c0_i32_0 = arith.constant 0 : i32
    %c0_i32_1 = arith.constant 0 : i32
    return %arg1, %c0_i32, %c0_i32_0 : i32, i32, i32
  }
  func.func @transform_13(%arg0: i32, %arg1: i32) -> (i32, i32, i32) {
    %c0_i32 = arith.constant 0 : i32
    %c0_i32_0 = arith.constant 0 : i32
    %c0_i32_1 = arith.constant 0 : i32
    return %arg1, %c0_i32, %c0_i32_0 : i32, i32, i32
  }
  func.func @transform_14(%arg0: i32, %arg1: i32) -> (i32, i32, i32) {
    %c0_i32 = arith.constant 0 : i32
    %c0_i32_0 = arith.constant 0 : i32
    %c0_i32_1 = arith.constant 0 : i32
    return %arg1, %c0_i32, %c0_i32_0 : i32, i32, i32
  }
  func.func @transform_15(%arg0: i32, %arg1: i32) -> (i32, i32, i32) {
    %c0_i32 = arith.constant 0 : i32
    %c0_i32_0 = arith.constant 0 : i32
    %c0_i32_1 = arith.constant 0 : i32
    return %arg1, %c0_i32, %c0_i32_0 : i32, i32, i32
  }
  func.func @transform_16(%arg0: i32, %arg1: i32) -> (i32, i32, i32) {
    %c0_i32 = arith.constant 0 : i32
    %c0_i32_0 = arith.constant 0 : i32
    %c0_i32_1 = arith.constant 0 : i32
    return %arg1, %c0_i32, %c0_i32_0 : i32, i32, i32
  }
  func.func @transform_17(%arg0: i32, %arg1: i32) -> (i32, i32, i32) {
    %c0_i32 = arith.constant 0 : i32
    %c0_i32_0 = arith.constant 0 : i32
    %c0_i32_1 = arith.constant 0 : i32
    return %arg1, %c0_i32, %c0_i32_0 : i32, i32, i32
  }
  func.func @transform_18(%arg0: i32, %arg1: i32) -> (i32, i32, i32) {
    %c0_i32 = arith.constant 0 : i32
    %c0_i32_0 = arith.constant 0 : i32
    %c0_i32_1 = arith.constant 0 : i32
    return %arg1, %c0_i32, %c0_i32_0 : i32, i32, i32
  }
  func.func @transform_19(%arg0: i32, %arg1: i32) -> (i32, i32, i32) {
    %c0_i32 = arith.constant 0 : i32
    %c0_i32_0 = arith.constant 0 : i32
    %c0_i32_1 = arith.constant 0 : i32
    return %arg0, %c0_i32, %c0_i32_0 : i32, i32, i32
  }
}

</mosaic_0001>

<llo_original>
// kernel: tower_forward.1
$region0: #{tower_forward.1}
  #allocation0 [shape = 'u32[]', space=smem, size = 0x4, offset = 0x4, fixed_abs, tag = 'smem constant byte address 0x4 - core index']
  #allocation1 [shape = 'u32[144,128]{1,0:T(1,128)}', space=vmem, size = 0x12000, scoped, tag = 'internal scratch']
  #allocation2 [shape = 'f32[17,128]{1,0:T(8,128)}', space=vmem, size = 0x3000, scoped, tag = 'scratch operand']
  %s0 = inlined_call_operand.vmem [shape: f32[2,1,17], index: 0, kind: input, shape index: {}]
  %s1 = inlined_call_operand.vmem [shape: f32[2,16,48], index: 1, kind: input, shape index: {}]
  %s2 = inlined_call_operand.vmem [shape: bf16[48,128], index: 2, kind: input, shape index: {}]
  %s3 = inlined_call_operand.vmem [shape: f32[1,128], index: 3, kind: input, shape index: {}]
  %s4 = inlined_call_operand.vmem [shape: f32[2,17,128], index: 4, kind: input, shape index: {}]
  %s5 = inlined_call_operand.vmem [shape: f32[1,128], index: 5, kind: input, shape index: {}]
  %s6 = inlined_call_operand.vmem [shape: f32[1,128], index: 6, kind: input, shape index: {}]
  %s7 = inlined_call_operand.vmem [shape: f32[2,1,128], index: 7, kind: input, shape index: {}]
  %s8 = inlined_call_operand.vmem [shape: f32[2,1,128], index: 8, kind: input, shape index: {}]
  %s9 = inlined_call_operand.vmem [shape: bf16[2,128,384], index: 9, kind: input, shape index: {}]
  %s10 = inlined_call_operand.vmem [shape: f32[2,1,384], index: 10, kind: input, shape index: {}]
  %s11 = inlined_call_operand.vmem [shape: bf16[2,128,128], index: 11, kind: input, shape index: {}]
  %s12 = inlined_call_operand.vmem [shape: f32[2,1,128], index: 12, kind: input, shape index: {}]
  %s13 = inlined_call_operand.vmem [shape: f32[2,1,128], index: 13, kind: input, shape index: {}]
  %s14 = inlined_call_operand.vmem [shape: f32[2,1,128], index: 14, kind: input, shape index: {}]
  %s15 = inlined_call_operand.vmem [shape: bf16[2,128,256], index: 15, kind: input, shape index: {}]
  %s16 = inlined_call_operand.vmem [shape: f32[2,1,256], index: 16, kind: input, shape index: {}]
  %s17 = inlined_call_operand.vmem [shape: bf16[2,256,128], index: 17, kind: input, shape index: {}]
  %s18 = inlined_call_operand.vmem [shape: f32[2,1,128], index: 18, kind: input, shape index: {}]
  %s19 = inlined_call_operand.hbm [shape: f32[2,16,128], index: 19, kind: output, shape index: {}]
  %s20 = sld [smem:[#allocation0]]
  $region117: #{tower_forward.1} parent=0
    _
  %s22 = ssub.s32 1, %s20
  %s23 = scalar_select 0, %s22, %s20
  $region1: #{tower_forward.1} parent=0
    #allocation3 [shape = 'u8[16384]{0}', space=vmem, size = 0x4000, scoped, tag = 'output window, operand 0']
    #allocation4 [shape = 's32[2]{0}', space=sflag, size = 0x8, scoped, tag = 'scoped memory for tower_forward.1']
    %24 = vsyncpa [#allocation4], 0
    %s25 = scalar_lea.sflag [#allocation4], 1
    %26 = vsyncpa %s25, 0
    loop: start=0, step=1, limit=6
    $region2: #{tower_forward.1} parent=1 // loop_pre_header
      _
    $region3: #{tower_forward.1} parent=1 // loop_header
      %s28 = sphi 0, %s32
      %p29 = scmp.ge.s32.totalorder %s28, 6
      %s35 = sphi 0, %s47
      %s36 = sphi 0, %s43
      %s37 = sphi 0, %s35
      %s38 = sphi 0, %s36
      %s39 = sphi 0, %s37
      %s40 = sphi 0, %s38
      %s50 = sphi 0, %s52
      %s53 = sphi 0, %s50
      %s54 = sphi 0, %s53
      %s70 = sphi 0, %s54
      %s76 = sphi 0, %s78
      %s79 = sphi 0, %s76
      %s80 = sphi 0, %s79
      %s96 = sphi 0, %s80
      %s100 = sphi 0, %s100
      %s102 = sphi 0, %s100
      %s103 = sphi 0, %s102
      %s117 = sphi 0, %s103
      %s121 = sphi 0, %s121
      %s123 = sphi 0, %s121
      %s124 = sphi 0, %s123
      %s138 = sphi 0, %s124
      %s144 = sphi 0, %s146
      %s147 = sphi 0, %s144
      %s148 = sphi 0, %s147
      %s164 = sphi 0, %s148
      %s168 = sphi 0, %s168
      %s170 = sphi 0, %s168
      %s171 = sphi 0, %s170
      %s185 = sphi 0, %s171
      %s189 = sphi 0, %s189
      %s191 = sphi 0, %s189
      %s192 = sphi 0, %s191
      %s206 = sphi 0, %s192
      %s212 = sphi 0, %s214
      %s215 = sphi 0, %s212
      %s216 = sphi 0, %s215
      %s232 = sphi 0, %s216
      %s238 = sphi 0, %s240
      %s241 = sphi 0, %s238
      %s242 = sphi 0, %s241
      %s258 = sphi 0, %s242
      %s264 = sphi 0, %s266
      %s267 = sphi 0, %s264
      %s268 = sphi 0, %s267
      %s284 = sphi 0, %s268
      %s290 = sphi 0, %s292
      %s293 = sphi 0, %s290
      %s294 = sphi 0, %s293
      %s310 = sphi 0, %s294
      %s316 = sphi 0, %s318
      %s319 = sphi 0, %s316
      %s320 = sphi 0, %s319
      %s336 = sphi 0, %s320
      %s342 = sphi 0, %s344
      %s345 = sphi 0, %s342
      %s346 = sphi 0, %s345
      %s362 = sphi 0, %s346
      %s368 = sphi 0, %s370
      %s371 = sphi 0, %s368
      %s372 = sphi 0, %s371
      %s388 = sphi 0, %s372
      %s394 = sphi 0, %s396
      %s397 = sphi 0, %s394
      %s398 = sphi 0, %s397
      %s414 = sphi 0, %s398
      %s420 = sphi 0, %s422
      %s423 = sphi 0, %s420
      %s424 = sphi 0, %s423
      %s440 = sphi 0, %s424
      %s446 = sphi 0, %s448
      %s449 = sphi 0, %s446
      %s450 = sphi 0, %s449
      %s466 = sphi 0, %s450
      %s472 = sphi 0, %s474
      %s475 = sphi 0, %s472
      %s476 = sphi 0, %s475
      %s492 = sphi 0, %s476
      %s498 = sphi 0, %s500
      %s501 = sphi 0, %s498
      %s502 = sphi 0, %s501
      %s518 = sphi 0, %s502
      %s524 = sphi 0, %s526
      %s527 = sphi 0, %s524
      %s528 = sphi 0, %s527
      %s544 = sphi 0, %s528
    $region4: #{tower_forward.1} parent=1 // loop_header_branch
      %31 = sbr.rel (%p29) target = $region8
    $region5: #{tower_forward.1} parent=1 // loop_body
      %s33 = ssub.s32 %s28, 1
      %s34 = ssub.s32 %s28, 2
      %s41 = sadd.s32 1, %s36
      %p42 = scmp.ge.s32.totalorder %s41, 2
      %s43 = scalar_select %p42, 0, %s41
      %s44 = sadd.s32 1, %s35
      %s45 = scalar_select %p42, %s44, %s35
      %p46 = scmp.ge.s32.totalorder %s45, 2
      %s47 = scalar_select %p46, 0, %s45
      %s48 = ssub.s32 %s35, %s47
      %p49 = scmp.eq.s32.totalorder %s48, 0
      %s51 = sadd.s32 %s50, 1
      %s52 = scalar_select %p49, %s50, %s51
      %p55 = pneg %p49
      %p56 = scmp.eq.s32.totalorder %s28, 3
      %p57 = por %p55, %p56
      %p58 = scmp.ne.s32.totalorder %s50, %s53
      %p59 = scmp.eq.s32.totalorder %s28, 0
      %p60 = por %p58, %p59
      %p61 = scmp.ne.s32.totalorder %s50, %s53
      %p62 = scmp.eq.s32.totalorder %s33, 3
      %p63 = por %p61, %p62
      %p64 = scmp.ne.s32.totalorder %s53, %s54
      %p65 = scmp.eq.s32.totalorder %s33, 0
      %p66 = por %p64, %p65
      %p67 = scmp.ne.s32.totalorder %s53, %s54
      %p68 = scmp.eq.s32.totalorder %s34, 3
      %p69 = por %p67, %p68
      %p71 = scmp.ne.s32.totalorder %s54, %s70
      %p72 = scmp.eq.s32.totalorder %s34, 0
      %p73 = por %p71, %p72
      %s74 = ssub.s32 %s35, %s47
      %p75 = scmp.eq.s32.totalorder %s74, 0
      %s77 = sadd.s32 %s76, 1
      %s78 = scalar_select %p75, %s76, %s77
      %p81 = pneg %p75
      %p82 = scmp.eq.s32.totalorder %s28, 3
      %p83 = por %p81, %p82
      %p84 = scmp.ne.s32.totalorder %s76, %s79
      %p85 = scmp.eq.s32.totalorder %s28, 0
      %p86 = por %p84, %p85
      %p87 = scmp.ne.s32.totalorder %s76, %s79
      %p88 = scmp.eq.s32.totalorder %s33, 3
      %p89 = por %p87, %p88
      %p90 = scmp.ne.s32.totalorder %s79, %s80
      %p91 = scmp.eq.s32.totalorder %s33, 0
      %p92 = por %p90, %p91
      %p93 = scmp.ne.s32.totalorder %s79, %s80
      %p94 = scmp.eq.s32.totalorder %s34, 3
      %p95 = por %p93, %p94
      %p97 = scmp.ne.s32.totalorder %s80, %s96
      %p98 = scmp.eq.s32.totalorder %s34, 0
      %p99 = por %p97, %p98
      %s101 = sadd.s32 %s100, 1
      %p104 = scmp.eq.s32.totalorder %s28, 3
      %p105 = scmp.ne.s32.totalorder %s100, %s102
      %p106 = scmp.eq.s32.totalorder %s28, 0
      %p107 = por %p105, %p106
      %p108 = scmp.ne.s32.totalorder %s100, %s102
      %p109 = scmp.eq.s32.totalorder %s33, 3
      %p110 = por %p108, %p109
      %p111 = scmp.ne.s32.totalorder %s102, %s103
      %p112 = scmp.eq.s32.totalorder %s33, 0
      %p113 = por %p111, %p112
      %p114 = scmp.ne.s32.totalorder %s102, %s103
      %p115 = scmp.eq.s32.totalorder %s34, 3
      %p116 = por %p114, %p115
      %p118 = scmp.ne.s32.totalorder %s103, %s117
      %p119 = scmp.eq.s32.totalorder %s34, 0
      %p120 = por %p118, %p119
      %s122 = sadd.s32 %s121, 1
      %p125 = scmp.eq.s32.totalorder %s28, 3
      %p126 = scmp.ne.s32.totalorder %s121, %s123
      %p127 = scmp.eq.s32.totalorder %s28, 0
      %p128 = por %p126, %p127
      %p129 = scmp.ne.s32.totalorder %s121, %s123
      %p130 = scmp.eq.s32.totalorder %s33, 3
      %p131 = por %p129, %p130
      %p132 = scmp.ne.s32.totalorder %s123, %s124
      %p133 = scmp.eq.s32.totalorder %s33, 0
      %p134 = por %p132, %p133
      %p135 = scmp.ne.s32.totalorder %s123, %s124
      %p136 = scmp.eq.s32.totalorder %s34, 3
      %p137 = por %p135, %p136
      %p139 = scmp.ne.s32.totalorder %s124, %s138
      %p140 = scmp.eq.s32.totalorder %s34, 0
      %p141 = por %p139, %p140
      %s142 = ssub.s32 %s35, %s47
      %p143 = scmp.eq.s32.totalorder %s142, 0
      %s145 = sadd.s32 %s144, 1
      %s146 = scalar_select %p143, %s144, %s145
      %p149 = pneg %p143
      %p150 = scmp.eq.s32.totalorder %s28, 3
      %p151 = por %p149, %p150
      %p152 = scmp.ne.s32.totalorder %s144, %s147
      %p153 = scmp.eq.s32.totalorder %s28, 0
      %p154 = por %p152, %p153
      %p155 = scmp.ne.s32.totalorder %s144, %s147
      %p156 = scmp.eq.s32.totalorder %s33, 3
      %p157 = por %p155, %p156
      %p158 = scmp.ne.s32.totalorder %s147, %s148
      %p159 = scmp.eq.s32.totalorder %s33, 0
      %p160 = por %p158, %p159
      %p161 = scmp.ne.s32.totalorder %s147, %s148
      %p162 = scmp.eq.s32.totalorder %s34, 3
      %p163 = por %p161, %p162
      %p165 = scmp.ne.s32.totalorder %s148, %s164
      %p166 = scmp.eq.s32.totalorder %s34, 0
      %p167 = por %p165, %p166
      %s169 = sadd.s32 %s168, 1
      %p172 = scmp.eq.s32.totalorder %s28, 3
      %p173 = scmp.ne.s32.totalorder %s168, %s170
      %p174 = scmp.eq.s32.totalorder %s28, 0
      %p175 = por %p173, %p174
      %p176 = scmp.ne.s32.totalorder %s168, %s170
      %p177 = scmp.eq.s32.totalorder %s33, 3
      %p178 = por %p176, %p177
      %p179 = scmp.ne.s32.totalorder %s170, %s171
      %p180 = scmp.eq.s32.totalorder %s33, 0
      %p181 = por %p179, %p180
      %p182 = scmp.ne.s32.totalorder %s170, %s171
      %p183 = scmp.eq.s32.totalorder %s34, 3
      %p184 = por %p182, %p183
      %p186 = scmp.ne.s32.totalorder %s171, %s185
      %p187 = scmp.eq.s32.totalorder %s34, 0
      %p188 = por %p186, %p187
      %s190 = sadd.s32 %s189, 1
      %p193 = scmp.eq.s32.totalorder %s28, 3
      %p194 = scmp.ne.s32.totalorder %s189, %s191
      %p195 = scmp.eq.s32.totalorder %s28, 0
      %p196 = por %p194, %p195
      %p197 = scmp.ne.s32.totalorder %s189, %s191
      %p198 = scmp.eq.s32.totalorder %s33, 3
      %p199 = por %p197, %p198
      %p200 = scmp.ne.s32.totalorder %s191, %s192
      %p201 = scmp.eq.s32.totalorder %s33, 0
      %p202 = por %p200, %p201
      %p203 = scmp.ne.s32.totalorder %s191, %s192
      %p204 = scmp.eq.s32.totalorder %s34, 3
      %p205 = por %p203, %p204
      %p207 = scmp.ne.s32.totalorder %s192, %s206
      %p208 = scmp.eq.s32.totalorder %s34, 0
      %p209 = por %p207, %p208
      %s210 = ssub.s32 %s36, %s43
      %p211 = scmp.eq.s32.totalorder %s210, 0
      %s213 = sadd.s32 %s212, 1
      %s214 = scalar_select %p211, %s212, %s213
      %p217 = pneg %p211
      %p218 = scmp.eq.s32.totalorder %s28, 3
      %p219 = por %p217, %p218
      %p220 = scmp.ne.s32.totalorder %s212, %s215
      %p221 = scmp.eq.s32.totalorder %s28, 0
      %p222 = por %p220, %p221
      %p223 = scmp.ne.s32.totalorder %s212, %s215
      %p224 = scmp.eq.s32.totalorder %s33, 3
      %p225 = por %p223, %p224
      %p226 = scmp.ne.s32.totalorder %s215, %s216
      %p227 = scmp.eq.s32.totalorder %s33, 0
      %p228 = por %p226, %p227
      %p229 = scmp.ne.s32.totalorder %s215, %s216
      %p230 = scmp.eq.s32.totalorder %s34, 3
      %p231 = por %p229, %p230
      %p233 = scmp.ne.s32.totalorder %s216, %s232
      %p234 = scmp.eq.s32.totalorder %s34, 0
      %p235 = por %p233, %p234
      %s236 = ssub.s32 %s36, %s43
      %p237 = scmp.eq.s32.totalorder %s236, 0
      %s239 = sadd.s32 %s238, 1
      %s240 = scalar_select %p237, %s238, %s239
      %p243 = pneg %p237
      %p244 = scmp.eq.s32.totalorder %s28, 3
      %p245 = por %p243, %p244
      %p246 = scmp.ne.s32.totalorder %s238, %s241
      %p247 = scmp.eq.s32.totalorder %s28, 0
      %p248 = por %p246, %p247
      %p249 = scmp.ne.s32.totalorder %s238, %s241
      %p250 = scmp.eq.s32.totalorder %s33, 3
      %p251 = por %p249, %p250
      %p252 = scmp.ne.s32.totalorder %s241, %s242
      %p253 = scmp.eq.s32.totalorder %s33, 0
      %p254 = por %p252, %p253
      %p255 = scmp.ne.s32.totalorder %s241, %s242
      %p256 = scmp.eq.s32.totalorder %s34, 3
      %p257 = por %p255, %p256
      %p259 = scmp.ne.s32.totalorder %s242, %s258
      %p260 = scmp.eq.s32.totalorder %s34, 0
      %p261 = por %p259, %p260
      %s262 = ssub.s32 %s36, %s43
      %p263 = scmp.eq.s32.totalorder %s262, 0
      %s265 = sadd.s32 %s264, 1
      %s266 = scalar_select %p263, %s264, %s265
      %p269 = pneg %p263
      %p270 = scmp.eq.s32.totalorder %s28, 3
      %p271 = por %p269, %p270
      %p272 = scmp.ne.s32.totalorder %s264, %s267
      %p273 = scmp.eq.s32.totalorder %s28, 0
      %p274 = por %p272, %p273
      %p275 = scmp.ne.s32.totalorder %s264, %s267
      %p276 = scmp.eq.s32.totalorder %s33, 3
      %p277 = por %p275, %p276
      %p278 = scmp.ne.s32.totalorder %s267, %s268
      %p279 = scmp.eq.s32.totalorder %s33, 0
      %p280 = por %p278, %p279
      %p281 = scmp.ne.s32.totalorder %s267, %s268
      %p282 = scmp.eq.s32.totalorder %s34, 3
      %p283 = por %p281, %p282
      %p285 = scmp.ne.s32.totalorder %s268, %s284
      %p286 = scmp.eq.s32.totalorder %s34, 0
      %p287 = por %p285, %p286
      %s288 = ssub.s32 %s36, %s43
      %p289 = scmp.eq.s32.totalorder %s288, 0
      %s291 = sadd.s32 %s290, 1
      %s292 = scalar_select %p289, %s290, %s291
      %p295 = pneg %p289
      %p296 = scmp.eq.s32.totalorder %s28, 3
      %p297 = por %p295, %p296
      %p298 = scmp.ne.s32.totalorder %s290, %s293
      %p299 = scmp.eq.s32.totalorder %s28, 0
      %p300 = por %p298, %p299
      %p301 = scmp.ne.s32.totalorder %s290, %s293
      %p302 = scmp.eq.s32.totalorder %s33, 3
      %p303 = por %p301, %p302
      %p304 = scmp.ne.s32.totalorder %s293, %s294
      %p305 = scmp.eq.s32.totalorder %s33, 0
      %p306 = por %p304, %p305
      %p307 = scmp.ne.s32.totalorder %s293, %s294
      %p308 = scmp.eq.s32.totalorder %s34, 3
      %p309 = por %p307, %p308
      %p311 = scmp.ne.s32.totalorder %s294, %s310
      %p312 = scmp.eq.s32.totalorder %s34, 0
      %p313 = por %p311, %p312
      %s314 = ssub.s32 %s36, %s43
      %p315 = scmp.eq.s32.totalorder %s314, 0
      %s317 = sadd.s32 %s316, 1
      %s318 = scalar_select %p315, %s316, %s317
      %p321 = pneg %p315
      %p322 = scmp.eq.s32.totalorder %s28, 3
      %p323 = por %p321, %p322
      %p324 = scmp.ne.s32.totalorder %s316, %s319
      %p325 = scmp.eq.s32.totalorder %s28, 0
      %p326 = por %p324, %p325
      %p327 = scmp.ne.s32.totalorder %s316, %s319
      %p328 = scmp.eq.s32.totalorder %s33, 3
      %p329 = por %p327, %p328
      %p330 = scmp.ne.s32.totalorder %s319, %s320
      %p331 = scmp.eq.s32.totalorder %s33, 0
      %p332 = por %p330, %p331
      %p333 = scmp.ne.s32.totalorder %s319, %s320
      %p334 = scmp.eq.s32.totalorder %s34, 3
      %p335 = por %p333, %p334
      %p337 = scmp.ne.s32.totalorder %s320, %s336
      %p338 = scmp.eq.s32.totalorder %s34, 0
      %p339 = por %p337, %p338
      %s340 = ssub.s32 %s36, %s43
      %p341 = scmp.eq.s32.totalorder %s340, 0
      %s343 = sadd.s32 %s342, 1
      %s344 = scalar_select %p341, %s342, %s343
      %p347 = pneg %p341
      %p348 = scmp.eq.s32.totalorder %s28, 3
      %p349 = por %p347, %p348
      %p350 = scmp.ne.s32.totalorder %s342, %s345
      %p351 = scmp.eq.s32.totalorder %s28, 0
      %p352 = por %p350, %p351
      %p353 = scmp.ne.s32.totalorder %s342, %s345
      %p354 = scmp.eq.s32.totalorder %s33, 3
      %p355 = por %p353, %p354
      %p356 = scmp.ne.s32.totalorder %s345, %s346
      %p357 = scmp.eq.s32.totalorder %s33, 0
      %p358 = por %p356, %p357
      %p359 = scmp.ne.s32.totalorder %s345, %s346
      %p360 = scmp.eq.s32.totalorder %s34, 3
      %p361 = por %p359, %p360
      %p363 = scmp.ne.s32.totalorder %s346, %s362
      %p364 = scmp.eq.s32.totalorder %s34, 0
      %p365 = por %p363, %p364
      %s366 = ssub.s32 %s36, %s43
      %p367 = scmp.eq.s32.totalorder %s366, 0
      %s369 = sadd.s32 %s368, 1
      %s370 = scalar_select %p367, %s368, %s369
      %p373 = pneg %p367
      %p374 = scmp.eq.s32.totalorder %s28, 3
      %p375 = por %p373, %p374
      %p376 = scmp.ne.s32.totalorder %s368, %s371
      %p377 = scmp.eq.s32.totalorder %s28, 0
      %p378 = por %p376, %p377
      %p379 = scmp.ne.s32.totalorder %s368, %s371
      %p380 = scmp.eq.s32.totalorder %s33, 3
      %p381 = por %p379, %p380
      %p382 = scmp.ne.s32.totalorder %s371, %s372
      %p383 = scmp.eq.s32.totalorder %s33, 0
      %p384 = por %p382, %p383
      %p385 = scmp.ne.s32.totalorder %s371, %s372
      %p386 = scmp.eq.s32.totalorder %s34, 3
      %p387 = por %p385, %p386
      %p389 = scmp.ne.s32.totalorder %s372, %s388
      %p390 = scmp.eq.s32.totalorder %s34, 0
      %p391 = por %p389, %p390
      %s392 = ssub.s32 %s36, %s43
      %p393 = scmp.eq.s32.totalorder %s392, 0
      %s395 = sadd.s32 %s394, 1
      %s396 = scalar_select %p393, %s394, %s395
      %p399 = pneg %p393
      %p400 = scmp.eq.s32.totalorder %s28, 3
      %p401 = por %p399, %p400
      %p402 = scmp.ne.s32.totalorder %s394, %s397
      %p403 = scmp.eq.s32.totalorder %s28, 0
      %p404 = por %p402, %p403
      %p405 = scmp.ne.s32.totalorder %s394, %s397
      %p406 = scmp.eq.s32.totalorder %s33, 3
      %p407 = por %p405, %p406
      %p408 = scmp.ne.s32.totalorder %s397, %s398
      %p409 = scmp.eq.s32.totalorder %s33, 0
      %p410 = por %p408, %p409
      %p411 = scmp.ne.s32.totalorder %s397, %s398
      %p412 = scmp.eq.s32.totalorder %s34, 3
      %p413 = por %p411, %p412
      %p415 = scmp.ne.s32.totalorder %s398, %s414
      %p416 = scmp.eq.s32.totalorder %s34, 0
      %p417 = por %p415, %p416
      %s418 = ssub.s32 %s36, %s43
      %p419 = scmp.eq.s32.totalorder %s418, 0
      %s421 = sadd.s32 %s420, 1
      %s422 = scalar_select %p419, %s420, %s421
      %p425 = pneg %p419
      %p426 = scmp.eq.s32.totalorder %s28, 3
      %p427 = por %p425, %p426
      %p428 = scmp.ne.s32.totalorder %s420, %s423
      %p429 = scmp.eq.s32.totalorder %s28, 0
      %p430 = por %p428, %p429
      %p431 = scmp.ne.s32.totalorder %s420, %s423
      %p432 = scmp.eq.s32.totalorder %s33, 3
      %p433 = por %p431, %p432
      %p434 = scmp.ne.s32.totalorder %s423, %s424
      %p435 = scmp.eq.s32.totalorder %s33, 0
      %p436 = por %p434, %p435
      %p437 = scmp.ne.s32.totalorder %s423, %s424
      %p438 = scmp.eq.s32.totalorder %s34, 3
      %p439 = por %p437, %p438
      %p441 = scmp.ne.s32.totalorder %s424, %s440
      %p442 = scmp.eq.s32.totalorder %s34, 0
      %p443 = por %p441, %p442
      %s444 = ssub.s32 %s36, %s43
      %p445 = scmp.eq.s32.totalorder %s444, 0
      %s447 = sadd.s32 %s446, 1
      %s448 = scalar_select %p445, %s446, %s447
      %p451 = pneg %p445
      %p452 = scmp.eq.s32.totalorder %s28, 3
      %p453 = por %p451, %p452
      %p454 = scmp.ne.s32.totalorder %s446, %s449
      %p455 = scmp.eq.s32.totalorder %s28, 0
      %p456 = por %p454, %p455
      %p457 = scmp.ne.s32.totalorder %s446, %s449
      %p458 = scmp.eq.s32.totalorder %s33, 3
      %p459 = por %p457, %p458
      %p460 = scmp.ne.s32.totalorder %s449, %s450
      %p461 = scmp.eq.s32.totalorder %s33, 0
      %p462 = por %p460, %p461
      %p463 = scmp.ne.s32.totalorder %s449, %s450
      %p464 = scmp.eq.s32.totalorder %s34, 3
      %p465 = por %p463, %p464
      %p467 = scmp.ne.s32.totalorder %s450, %s466
      %p468 = scmp.eq.s32.totalorder %s34, 0
      %p469 = por %p467, %p468
      %s470 = ssub.s32 %s36, %s43
      %p471 = scmp.eq.s32.totalorder %s470, 0
      %s473 = sadd.s32 %s472, 1
      %s474 = scalar_select %p471, %s472, %s473
      %p477 = pneg %p471
      %p478 = scmp.eq.s32.totalorder %s28, 3
      %p479 = por %p477, %p478
      %p480 = scmp.ne.s32.totalorder %s472, %s475
      %p481 = scmp.eq.s32.totalorder %s28, 0
      %p482 = por %p480, %p481
      %p483 = scmp.ne.s32.totalorder %s472, %s475
      %p484 = scmp.eq.s32.totalorder %s33, 3
      %p485 = por %p483, %p484
      %p486 = scmp.ne.s32.totalorder %s475, %s476
      %p487 = scmp.eq.s32.totalorder %s33, 0
      %p488 = por %p486, %p487
      %p489 = scmp.ne.s32.totalorder %s475, %s476
      %p490 = scmp.eq.s32.totalorder %s34, 3
      %p491 = por %p489, %p490
      %p493 = scmp.ne.s32.totalorder %s476, %s492
      %p494 = scmp.eq.s32.totalorder %s34, 0
      %p495 = por %p493, %p494
      %s496 = ssub.s32 %s36, %s43
      %p497 = scmp.eq.s32.totalorder %s496, 0
      %s499 = sadd.s32 %s498, 1
      %s500 = scalar_select %p497, %s498, %s499
      %p503 = pneg %p497
      %p504 = scmp.eq.s32.totalorder %s28, 3
      %p505 = por %p503, %p504
      %p506 = scmp.ne.s32.totalorder %s498, %s501
      %p507 = scmp.eq.s32.totalorder %s28, 0
      %p508 = por %p506, %p507
      %p509 = scmp.ne.s32.totalorder %s498, %s501
      %p510 = scmp.eq.s32.totalorder %s33, 3
      %p511 = por %p509, %p510
      %p512 = scmp.ne.s32.totalorder %s501, %s502
      %p513 = scmp.eq.s32.totalorder %s33, 0
      %p514 = por %p512, %p513
      %p515 = scmp.ne.s32.totalorder %s501, %s502
      %p516 = scmp.eq.s32.totalorder %s34, 3
      %p517 = por %p515, %p516
      %p519 = scmp.ne.s32.totalorder %s502, %s518
      %p520 = scmp.eq.s32.totalorder %s34, 0
      %p521 = por %p519, %p520
      %s522 = ssub.s32 %s35, %s47
      %p523 = scmp.eq.s32.totalorder %s522, 0
      %s525 = sadd.s32 %s524, 1
      %s526 = scalar_select %p523, %s524, %s525
      %p529 = pneg %p523
      %p530 = scmp.eq.s32.totalorder %s28, 3
      %p531 = por %p529, %p530
      %p532 = scmp.ne.s32.totalorder %s524, %s527
      %p533 = scmp.eq.s32.totalorder %s28, 0
      %p534 = por %p532, %p533
      %p535 = scmp.ne.s32.totalorder %s524, %s527
      %p536 = scmp.eq.s32.totalorder %s33, 3
      %p537 = por %p535, %p536
      %p538 = scmp.ne.s32.totalorder %s527, %s528
      %p539 = scmp.eq.s32.totalorder %s33, 0
      %p540 = por %p538, %p539
      %p541 = scmp.ne.s32.totalorder %s527, %s528
      %p542 = scmp.eq.s32.totalorder %s34, 3
      %p543 = por %p541, %p542
      %p545 = scmp.ne.s32.totalorder %s528, %s544
      %p546 = scmp.eq.s32.totalorder %s34, 0
      %p547 = por %p545, %p546
      %p548 = scmp.le.s32.totalorder 1, %s28
      %p549 = scmp.lt.s32.totalorder %s28, 5
      %p550 = pnand %p548, %p549
      %p551 = pneg %p550
      // Predicated region
      $region9: #{tower_forward.1} parent=5 // pred_check
        _
      $region10: #{tower_forward.1} parent=5 // pred_check_branch
        %553 = sbr.rel (%p550) target = $region12
      $region11: #{tower_forward.1} parent=5 // pred_region
        %s554 = ssub.s32 %s28, 1
        // Predicated region
        $region13: #{tower_forward.1} parent=11 // pred_check
          %p555 = pneg %p113
        $region14: #{tower_forward.1} parent=11 // pred_check_branch
          %557 = sbr.rel (%p555) target = $region16
        $region15: #{tower_forward.1} parent=11 // pred_region
          _
        $region16: #{tower_forward.1} parent=11 // pred_fallthru
          _
        // Predicated region
        $region17: #{tower_forward.1} parent=11 // pred_check
          %p558 = pneg %p134
        $region18: #{tower_forward.1} parent=11 // pred_check_branch
          %560 = sbr.rel (%p558) target = $region20
        $region19: #{tower_forward.1} parent=11 // pred_region
          _
        $region20: #{tower_forward.1} parent=11 // pred_fallthru
          _
        // Predicated region
        $region21: #{tower_forward.1} parent=11 // pred_check
          %p561 = pneg %p181
        $region22: #{tower_forward.1} parent=11 // pred_check_branch
          %563 = sbr.rel (%p561) target = $region24
        $region23: #{tower_forward.1} parent=11 // pred_region
          _
        $region24: #{tower_forward.1} parent=11 // pred_fallthru
          _
        // Predicated region
        $region25: #{tower_forward.1} parent=11 // pred_check
          %p564 = pneg %p202
        $region26: #{tower_forward.1} parent=11 // pred_check_branch
          %566 = sbr.rel (%p564) target = $region28
        $region27: #{tower_forward.1} parent=11 // pred_region
          _
        $region28: #{tower_forward.1} parent=11 // pred_fallthru
          _
      $region12: #{tower_forward.1} parent=5 // pred_fallthru
        _
      %p567 = scmp.lt.s32.totalorder %s28, 4
      // Predicated region
      $region29: #{tower_forward.1} parent=5 // pred_check
        %p568 = pneg %p567
      $region30: #{tower_forward.1} parent=5 // pred_check_branch
        %570 = sbr.rel (%p568) target = $region32
      $region31: #{tower_forward.1} parent=5 // pred_region
        // Predicated region
        $region33: #{tower_forward.1} parent=31 // pred_check
          %p571 = pneg %p60
        $region34: #{tower_forward.1} parent=31 // pred_check_branch
          %573 = sbr.rel (%p571) target = $region36
        $region35: #{tower_forward.1} parent=31 // pred_region
          %p574 = scmp.lt.s32.totalorder %s35, 1
          %s575 = scalar_select %p574, %s35, 1
          %s576 = scalar_lea.vmem %s0, %s575
        $region36: #{tower_forward.1} parent=31 // pred_fallthru
          _
        // Predicated region
        $region37: #{tower_forward.1} parent=31 // pred_check
          %p577 = pneg %p86
        $region38: #{tower_forward.1} parent=31 // pred_check_branch
          %579 = sbr.rel (%p577) target = $region40
        $region39: #{tower_forward.1} parent=31 // pred_region
          %p580 = scmp.lt.s32.totalorder %s35, 1
          %s581 = scalar_select %p580, %s35, 1
          %s582 = smul.addr %s581, 2
          %s583 = smul.addr %s582, 8
          %s584 = scalar_lea.vmem %s1, %s583
        $region40: #{tower_forward.1} parent=31 // pred_fallthru
          _
        // Predicated region
        $region41: #{tower_forward.1} parent=31 // pred_check
          %p585 = pneg %p154
        $region42: #{tower_forward.1} parent=31 // pred_check_branch
          %587 = sbr.rel (%p585) target = $region44
        $region43: #{tower_forward.1} parent=31 // pred_region
          %p588 = scmp.lt.s32.totalorder %s35, 1
          %s589 = scalar_select %p588, %s35, 1
          %s590 = smul.addr %s589, 3
          %s591 = smul.addr %s590, 8
          %s592 = scalar_lea.vmem %s4, %s591
        $region44: #{tower_forward.1} parent=31 // pred_fallthru
          _
        // Predicated region
        $region45: #{tower_forward.1} parent=31 // pred_check
          %p593 = pneg %p222
        $region46: #{tower_forward.1} parent=31 // pred_check_branch
          %595 = sbr.rel (%p593) target = $region48
        $region47: #{tower_forward.1} parent=31 // pred_region
          %p596 = scmp.lt.s32.totalorder %s36, 1
          %s597 = scalar_select %p596, %s36, 1
          %s598 = scalar_lea.vmem %s7, %s597
        $region48: #{tower_forward.1} parent=31 // pred_fallthru
          _
        // Predicated region
        $region49: #{tower_forward.1} parent=31 // pred_check
          %p599 = pneg %p248
        $region50: #{tower_forward.1} parent=31 // pred_check_branch
          %601 = sbr.rel (%p599) target = $region52
        $region51: #{tower_forward.1} parent=31 // pred_region
          %p602 = scmp.lt.s32.totalorder %s36, 1
          %s603 = scalar_select %p602, %s36, 1
          %s604 = scalar_lea.vmem %s8, %s603
        $region52: #{tower_forward.1} parent=31 // pred_fallthru
          _
        // Predicated region
        $region53: #{tower_forward.1} parent=31 // pred_check
          %p605 = pneg %p274
        $region54: #{tower_forward.1} parent=31 // pred_check_branch
          %607 = sbr.rel (%p605) target = $region56
        $region55: #{tower_forward.1} parent=31 // pred_region
          %p608 = scmp.lt.s32.totalorder %s36, 1
          %s609 = scalar_select %p608, %s36, 1
          %s610 = smul.addr %s609, 48
          %s611 = smul.addr %s610, 4
          %s612 = scalar_lea.vmem %s9, %s611
        $region56: #{tower_forward.1} parent=31 // pred_fallthru
          _
        // Predicated region
        $region57: #{tower_forward.1} parent=31 // pred_check
          %p613 = pneg %p300
        $region58: #{tower_forward.1} parent=31 // pred_check_branch
          %615 = sbr.rel (%p613) target = $region60
        $region59: #{tower_forward.1} parent=31 // pred_region
          %p616 = scmp.lt.s32.totalorder %s36, 1
          %s617 = scalar_select %p616, %s36, 1
          %s618 = smul.addr %s617, 3
          %s619 = scalar_lea.vmem %s10, %s618
        $region60: #{tower_forward.1} parent=31 // pred_fallthru
          _
        // Predicated region
        $region61: #{tower_forward.1} parent=31 // pred_check
          %p620 = pneg %p326
        $region62: #{tower_forward.1} parent=31 // pred_check_branch
          %622 = sbr.rel (%p620) target = $region64
        $region63: #{tower_forward.1} parent=31 // pred_region
          %p623 = scmp.lt.s32.totalorder %s36, 1
          %s624 = scalar_select %p623, %s36, 1
          %s625 = smul.addr %s624, 16
          %s626 = smul.addr %s625, 4
          %s627 = scalar_lea.vmem %s11, %s626
        $region64: #{tower_forward.1} parent=31 // pred_fallthru
          _
        // Predicated region
        $region65: #{tower_forward.1} parent=31 // pred_check
          %p628 = pneg %p352
        $region66: #{tower_forward.1} parent=31 // pred_check_branch
          %630 = sbr.rel (%p628) target = $region68
        $region67: #{tower_forward.1} parent=31 // pred_region
          %p631 = scmp.lt.s32.totalorder %s36, 1
          %s632 = scalar_select %p631, %s36, 1
          %s633 = scalar_lea.vmem %s12, %s632
        $region68: #{tower_forward.1} parent=31 // pred_fallthru
          _
        // Predicated region
        $region69: #{tower_forward.1} parent=31 // pred_check
          %p634 = pneg %p378
        $region70: #{tower_forward.1} parent=31 // pred_check_branch
          %636 = sbr.rel (%p634) target = $region72
        $region71: #{tower_forward.1} parent=31 // pred_region
          %p637 = scmp.lt.s32.totalorder %s36, 1
          %s638 = scalar_select %p637, %s36, 1
          %s639 = scalar_lea.vmem %s13, %s638
        $region72: #{tower_forward.1} parent=31 // pred_fallthru
          _
        // Predicated region
        $region73: #{tower_forward.1} parent=31 // pred_check
          %p640 = pneg %p404
        $region74: #{tower_forward.1} parent=31 // pred_check_branch
          %642 = sbr.rel (%p640) target = $region76
        $region75: #{tower_forward.1} parent=31 // pred_region
          %p643 = scmp.lt.s32.totalorder %s36, 1
          %s644 = scalar_select %p643, %s36, 1
          %s645 = scalar_lea.vmem %s14, %s644
        $region76: #{tower_forward.1} parent=31 // pred_fallthru
          _
        // Predicated region
        $region77: #{tower_forward.1} parent=31 // pred_check
          %p646 = pneg %p430
        $region78: #{tower_forward.1} parent=31 // pred_check_branch
          %648 = sbr.rel (%p646) target = $region80
        $region79: #{tower_forward.1} parent=31 // pred_region
          %p649 = scmp.lt.s32.totalorder %s36, 1
          %s650 = scalar_select %p649, %s36, 1
          %s651 = smul.addr %s650, 32
          %s652 = smul.addr %s651, 4
          %s653 = scalar_lea.vmem %s15, %s652
        $region80: #{tower_forward.1} parent=31 // pred_fallthru
          _
        // Predicated region
        $region81: #{tower_forward.1} parent=31 // pred_check
          %p654 = pneg %p456
        $region82: #{tower_forward.1} parent=31 // pred_check_branch
          %656 = sbr.rel (%p654) target = $region84
        $region83: #{tower_forward.1} parent=31 // pred_region
          %p657 = scmp.lt.s32.totalorder %s36, 1
          %s658 = scalar_select %p657, %s36, 1
          %s659 = smul.addr %s658, 2
          %s660 = scalar_lea.vmem %s16, %s659
        $region84: #{tower_forward.1} parent=31 // pred_fallthru
          _
        // Predicated region
        $region85: #{tower_forward.1} parent=31 // pred_check
          %p661 = pneg %p482
        $region86: #{tower_forward.1} parent=31 // pred_check_branch
          %663 = sbr.rel (%p661) target = $region88
        $region87: #{tower_forward.1} parent=31 // pred_region
          %p664 = scmp.lt.s32.totalorder %s36, 1
          %s665 = scalar_select %p664, %s36, 1
          %s666 = smul.addr %s665, 32
          %s667 = smul.addr %s666, 4
          %s668 = scalar_lea.vmem %s17, %s667
        $region88: #{tower_forward.1} parent=31 // pred_fallthru
          _
        // Predicated region
        $region89: #{tower_forward.1} parent=31 // pred_check
          %p669 = pneg %p508
        $region90: #{tower_forward.1} parent=31 // pred_check_branch
          %671 = sbr.rel (%p669) target = $region92
        $region91: #{tower_forward.1} parent=31 // pred_region
          %p672 = scmp.lt.s32.totalorder %s36, 1
          %s673 = scalar_select %p672, %s36, 1
          %s674 = scalar_lea.vmem %s18, %s673
        $region92: #{tower_forward.1} parent=31 // pred_fallthru
          _
      $region32: #{tower_forward.1} parent=5 // pred_fallthru
        _
      %p675 = scmp.le.s32.totalorder 1, %s28
      %p676 = scmp.lt.s32.totalorder %s28, 5
      %p677 = pnand %p675, %p676
      %p678 = pneg %p677
      // Predicated region
      $region93: #{tower_forward.1} parent=5 // pred_check
        _
      $region94: #{tower_forward.1} parent=5 // pred_check_branch
        %680 = sbr.rel (%p677) target = $region96
      $region95: #{tower_forward.1} parent=5 // pred_region
        %s681 = ssub.s32 %s28, 1
        %p682 = scmp.lt.s32.totalorder %s37, 1
        %s683 = scalar_select %p682, %s37, 1
        %s684 = scalar_lea.vmem %s0, %s683
        %p685 = pneg %p66
        %p686 = pneg %p63
        %p687 = scmp.lt.s32.totalorder %s37, 1
        %s688 = scalar_select %p687, %s37, 1
        %s689 = smul.addr %s688, 2
        %s690 = smul.addr %s689, 8
        %s691 = scalar_lea.vmem %s1, %s690
        %p692 = pneg %p92
        %p693 = pneg %p89
        %p694 = pneg %p113
        %p695 = pneg %p110
        %p696 = pneg %p134
        %p697 = pneg %p131
        %p698 = scmp.lt.s32.totalorder %s37, 1
        %s699 = scalar_select %p698, %s37, 1
        %s700 = smul.addr %s699, 3
        %s701 = smul.addr %s700, 8
        %s702 = scalar_lea.vmem %s4, %s701
        %p703 = pneg %p160
        %p704 = pneg %p157
        %p705 = pneg %p181
        %p706 = pneg %p178
        %p707 = pneg %p202
        %p708 = pneg %p199
        %p709 = scmp.lt.s32.totalorder %s38, 1
        %s710 = scalar_select %p709, %s38, 1
        %s711 = scalar_lea.vmem %s7, %s710
        %p712 = pneg %p228
        %p713 = pneg %p225
        %p714 = scmp.lt.s32.totalorder %s38, 1
        %s715 = scalar_select %p714, %s38, 1
        %s716 = scalar_lea.vmem %s8, %s715
        %p717 = pneg %p254
        %p718 = pneg %p251
        %p719 = scmp.lt.s32.totalorder %s38, 1
        %s720 = scalar_select %p719, %s38, 1
        %s721 = smul.addr %s720, 48
        %s722 = smul.addr %s721, 4
        %s723 = scalar_lea.vmem %s9, %s722
        %p724 = pneg %p280
        %p725 = pneg %p277
        %p726 = scmp.lt.s32.totalorder %s38, 1
        %s727 = scalar_select %p726, %s38, 1
        %s728 = smul.addr %s727, 3
        %s729 = scalar_lea.vmem %s10, %s728
        %p730 = pneg %p306
        %p731 = pneg %p303
        %p732 = scmp.lt.s32.totalorder %s38, 1
        %s733 = scalar_select %p732, %s38, 1
        %s734 = smul.addr %s733, 16
        %s735 = smul.addr %s734, 4
        %s736 = scalar_lea.vmem %s11, %s735
        %p737 = pneg %p332
        %p738 = pneg %p329
        %p739 = scmp.lt.s32.totalorder %s38, 1
        %s740 = scalar_select %p739, %s38, 1
        %s741 = scalar_lea.vmem %s12, %s740
        %p742 = pneg %p358
        %p743 = pneg %p355
        %p744 = scmp.lt.s32.totalorder %s38, 1
        %s745 = scalar_select %p744, %s38, 1
        %s746 = scalar_lea.vmem %s13, %s745
        %p747 = pneg %p384
        %p748 = pneg %p381
        %p749 = scmp.lt.s32.totalorder %s38, 1
        %s750 = scalar_select %p749, %s38, 1
        %s751 = scalar_lea.vmem %s14, %s750
        %p752 = pneg %p410
        %p753 = pneg %p407
        %p754 = scmp.lt.s32.totalorder %s38, 1
        %s755 = scalar_select %p754, %s38, 1
        %s756 = smul.addr %s755, 32
        %s757 = smul.addr %s756, 4
        %s758 = scalar_lea.vmem %s15, %s757
        %p759 = pneg %p436
        %p760 = pneg %p433
        %p761 = scmp.lt.s32.totalorder %s38, 1
        %s762 = scalar_select %p761, %s38, 1
        %s763 = smul.addr %s762, 2
        %s764 = scalar_lea.vmem %s16, %s763
        %p765 = pneg %p462
        %p766 = pneg %p459
        %p767 = scmp.lt.s32.totalorder %s38, 1
        %s768 = scalar_select %p767, %s38, 1
        %s769 = smul.addr %s768, 32
        %s770 = smul.addr %s769, 4
        %s771 = scalar_lea.vmem %s17, %s770
        %p772 = pneg %p488
        %p773 = pneg %p485
        %p774 = scmp.lt.s32.totalorder %s38, 1
        %s775 = scalar_select %p774, %s38, 1
        %s776 = scalar_lea.vmem %s18, %s775
        %p777 = pneg %p514
        %p778 = pneg %p511
        %p779 = pneg %p540
        %p780 = pneg %p537
        %s781 = sand.u32 %s527, 1
        %s782 = scalar_lea.sflag [#allocation4], %s781
        %s783 = sand.u32 %s527, 1
        %s784 = smul.addr %s783, 16
        %s785 = scalar_lea.vmem [#allocation3], %s784
        %p786 = scmp.lt.s32.totalorder %s37, 1
        %s787 = scalar_select %p786, %s37, 1
        %s788 = scalar_lea.vmem %s0, %s787
        %p789 = scmp.lt.s32.totalorder %s37, 1
        %s790 = scalar_select %p789, %s37, 1
        %s791 = smul.addr %s790, 2
        %s792 = smul.addr %s791, 8
        %s793 = scalar_lea.vmem %s1, %s792
        %p794 = scmp.lt.s32.totalorder %s37, 1
        %s795 = scalar_select %p794, %s37, 1
        %s796 = smul.addr %s795, 3
        %s797 = smul.addr %s796, 8
        %s798 = scalar_lea.vmem %s4, %s797
        %p799 = scmp.lt.s32.totalorder %s38, 1
        %s800 = scalar_select %p799, %s38, 1
        %s801 = scalar_lea.vmem %s7, %s800
        %p802 = scmp.lt.s32.totalorder %s38, 1
        %s803 = scalar_select %p802, %s38, 1
        %s804 = scalar_lea.vmem %s8, %s803
        %p805 = scmp.lt.s32.totalorder %s38, 1
        %s806 = scalar_select %p805, %s38, 1
        %s807 = smul.addr %s806, 48
        %s808 = smul.addr %s807, 4
        %s809 = scalar_lea.vmem %s9, %s808
        %p810 = scmp.lt.s32.totalorder %s38, 1
        %s811 = scalar_select %p810, %s38, 1
        %s812 = smul.addr %s811, 3
        %s813 = scalar_lea.vmem %s10, %s812
        %p814 = scmp.lt.s32.totalorder %s38, 1
        %s815 = scalar_select %p814, %s38, 1
        %s816 = smul.addr %s815, 16
        %s817 = smul.addr %s816, 4
        %s818 = scalar_lea.vmem %s11, %s817
        %p819 = scmp.lt.s32.totalorder %s38, 1
        %s820 = scalar_select %p819, %s38, 1
        %s821 = scalar_lea.vmem %s12, %s820
        %p822 = scmp.lt.s32.totalorder %s38, 1
        %s823 = scalar_select %p822, %s38, 1
        %s824 = scalar_lea.vmem %s13, %s823
        %p825 = scmp.lt.s32.totalorder %s38, 1
        %s826 = scalar_select %p825, %s38, 1
        %s827 = scalar_lea.vmem %s14, %s826
        %p828 = scmp.lt.s32.totalorder %s38, 1
        %s829 = scalar_select %p828, %s38, 1
        %s830 = smul.addr %s829, 32
        %s831 = smul.addr %s830, 4
        %s832 = scalar_lea.vmem %s15, %s831
        %p833 = scmp.lt.s32.totalorder %s38, 1
        %s834 = scalar_select %p833, %s38, 1
        %s835 = smul.addr %s834, 2
        %s836 = scalar_lea.vmem %s16, %s835
        %p837 = scmp.lt.s32.totalorder %s38, 1
        %s838 = scalar_select %p837, %s38, 1
        %s839 = smul.addr %s838, 32
        %s840 = smul.addr %s839, 4
        %s841 = scalar_lea.vmem %s17, %s840
        %p842 = scmp.lt.s32.totalorder %s38, 1
        %s843 = scalar_select %p842, %s38, 1
        %s844 = scalar_lea.vmem %s18, %s843
        %p846 = scmp.eq.s32.totalorder %s38, 0
        // Predicated region
        $region97: #{tower_forward.1} parent=95 // pred_check
          %p847 = pneg %p846
        $region98: #{tower_forward.1} parent=95 // pred_check_branch
          %849 = sbr.rel (%p847) target = $region100
        $region99: #{tower_forward.1} parent=95 // pred_region
          %v850 = vld [vmem:[%s793] sm:$0xff]
          %v851 = vld [vmem:[%s793 + $0x8] sm:$0xff]
          %v852 = vld [vmem:[%s2] sm:$0xf]
          %v853 = vld [vmem:[%s2 + $0x4] sm:$0xf]
          %v854 = vld [vmem:[%s2 + $0x8] sm:$0xf]
          %v855 = vld [vmem:[%s2 + $0xc] sm:$0xf]
          %v856 = vld [vmem:[%s2 + $0x10] sm:$0xf]
          %v857 = vld [vmem:[%s2 + $0x14] sm:$0xf]
          %v858 = vpack.c.bf16 %v851, %v850
          %v865 = vunpack.c.l.b16 %v852
          %v866 = vunpack.c.l.b16 %v853
          %v867 = vunpack.c.l.b16 %v854
          %v868 = vunpack.c.l.b16 %v855
          %v869 = vunpack.c.l.b16 %v856
          %v870 = vunpack.c.l.b16 %v857
          %v871 = vpack.c.b16 %v866, %v865
          %v872 = vpack.c.b16 %v868, %v867
          %v873 = vpack.c.b16 %v870, %v869
          %vm877 = vcmask 392192
          %v879 = vsel %vm877, %v858, 0
          %881 = vmatprep.subr.bf16.mxu0 0
          %882 = vmatpush1.bf16.msra.mxu0 %v871
          %883 = vmatprep.subr.bf16.mxu0 0
          %884 = vmatpush1.bf16.msra.mxu0 %v872
          %885 = vmatprep.subr.bf16.mxu0 0
          %886 = vmatpush1.bf16.msra.mxu0 %v873
          %887 = vmatprep.subr.bf16.mxu0 0
          %888 = vmatpush1.bf16.msra.mxu0 0
          %889 = vmatprep.subr.bf16.mxu0 0
          %890 = vmatpush1.bf16.msra.mxu0 0
          %891 = vmatprep.subr.bf16.mxu0 0
          %892 = vmatpush1.bf16.msra.mxu0 0
          %893 = vmatprep.subr.bf16.mxu0 0
          %894 = vmatpush1.bf16.msra.mxu0 0
          %895 = vmatprep.subr.bf16.mxu0 0
          %896 = vmatpush1.bf16.msra.mxu0 0
          %897 = vmatprep.subr.bf16.mxu0 0
          %898 = vmatpush1.bf16.msra.mxu0 0
          %899 = vmatprep.subr.bf16.mxu0 0
          %900 = vmatpush1.bf16.msra.mxu0 0
          %901 = vmatprep.subr.bf16.mxu0 0
          %902 = vmatpush1.bf16.msra.mxu0 0
          %903 = vmatprep.subr.bf16.mxu0 0
          %904 = vmatpush1.bf16.msra.mxu0 0
          %905 = vmatprep.subr.bf16.mxu0 0
          %906 = vmatpush1.bf16.msra.mxu0 0
          %907 = vmatprep.subr.bf16.mxu0 0
          %908 = vmatpush1.bf16.msra.mxu0 0
          %909 = vmatprep.subr.bf16.mxu0 0
          %910 = vmatpush1.bf16.msra.mxu0 0
          %911 = vmatprep.subr.bf16.mxu0 0
          %912 = vmatpush1.bf16.msra.mxu0 0
          %913 = vmatprep.mubr.bf16.mxu0 0
          %914 = vmatmul.mubr.bf16.gmra.mrb[0].mxu0 %v879
          %v915 = vpop.f32.mrb[0].mxu0
          %v916 = vadd.f32 0.0, %v915
          %v917 = vpop.f32.mrb[0].mxu0
          %v918 = vpop.f32.mrb[0].mxu0
          %v919 = vadd.f32 0.0, %v918
          %v920 = vpop.f32.mrb[0].mxu0
          %921 = vdwg.mxu0
          %v922 = vld [vmem:[%s3] sm:$0x1]
          %vm925 = vcmask 1040384
          %v926 = vrot.slane %v916, 7
          %v927 = vrot.slane %v919, 7
          %v928 = vsel %vm925, %v926, %v927
          %v932 = vsel %vm925, %v922, %v926
          %v933 = vld [vmem:[%s798] sm:$0xff]
          %v934 = vld [vmem:[%s798 + $0x8] sm:$0xff]
          %v935 = vld [vmem:[%s798 + $0x10] sm:$0x1]
          %v936 = vadd.f32 %v932, %v933
          %v937 = vadd.f32 %v928, %v934
          %v938 = vadd.f32 %v927, %v935
          %v939 = vld [vmem:[%s5] sm:$0x1]
          %v940 = vld [vmem:[%s6] sm:$0x1]
          %941 = vadd.xlane.f32.xlu0 %v936
          %v942 = vpop.xlane.xlu0 %941
          %943 = vadd.xlane.f32.xlu0 %v937
          %v944 = vpop.xlane.xlu0 %943
          %v945 = vsel %vm925, %v938, 0.0
          %946 = vadd.xlane.f32.xlu0 %v945
          %v947 = vpop.xlane.xlu0 %946
          %v948 = vrcp.pop 128.0
          %v949 = vmul.f32 %v942, %v948
          %v950 = vmul.f32 %v944, %v948
          %v951 = vmul.f32 %v947, %v948
          %v952 = vsub.f32 %v936, %v949
          %v953 = vsub.f32 %v937, %v950
          %v954 = vsub.f32 %v938, %v951
          %v955 = vmul.f32 %v952, %v952
          %v956 = vmul.f32 %v953, %v953
          %v957 = vmul.f32 %v954, %v954
          %958 = vadd.xlane.f32.xlu0 %v955
          %v959 = vpop.xlane.xlu0 %958
          %960 = vadd.xlane.f32.xlu0 %v956
          %v961 = vpop.xlane.xlu0 %960
          %v962 = vsel %vm925, %v957, 0.0
          %963 = vadd.xlane.f32.xlu0 %v962
          %v964 = vpop.xlane.xlu0 %963
          %v965 = vmul.f32 %v959, %v948
          %v966 = vmul.f32 %v961, %v948
          %v967 = vmul.f32 %v964, %v948
          %v968 = vadd.f32 %v965, 1e-05
          %v969 = vadd.f32 %v966, 1e-05
          %v970 = vadd.f32 %v967, 1e-05
          %v971 = vrsqrt.pop %v968
          %v972 = vrsqrt.pop %v969
          %v973 = vrsqrt.pop %v970
          %v974 = vmul.f32 %v952, %v971
          %v975 = vmul.f32 %v953, %v972
          %v976 = vmul.f32 %v954, %v973
          %v978 = vlaneseq
          %v979 = vshrl.u32 %v978, 7
          %v980 = vsub.s32 0, %v979
          %v981 = vrot.slane %v939, %v980
          %v983 = vmul.f32 %v974, %v981
          %v984 = vmul.f32 %v975, %v981
          %v985 = vmul.f32 %v976, %v981
          %v987 = vlaneseq
          %v988 = vshrl.u32 %v987, 7
          %v989 = vsub.s32 0, %v988
          %v990 = vrot.slane %v940, %v989
          %v992 = vadd.f32 %v983, %v990
          %v993 = vadd.f32 %v984, %v990
          %v994 = vadd.f32 %v985, %v990
          %995 = vst [vmem:[#allocation2] sm:$0xff] %v992
          %996 = vst [vmem:[#allocation2 + $0x8] sm:$0xff] %v993
          %997 = vst [vmem:[#allocation2 + $0x10] sm:$0x1] %v994
        $region100: #{tower_forward.1} parent=95 // pred_fallthru
          _
        %v998 = vld [vmem:[#allocation2] sm:$0xff]
        %v999 = vld [vmem:[#allocation2 + $0x8] sm:$0xff]
        %v1000 = vld [vmem:[#allocation2 + $0x10] sm:$0x1]
        %v1001 = vld [vmem:[%s788] sm:$0x1]
        %v1002 = vld [vmem:[%s801] sm:$0x1]
        %v1003 = vld [vmem:[%s804] sm:$0x1]
        %1004 = vadd.xlane.f32.xlu0 %v998
        %v1005 = vpop.xlane.xlu0 %1004
        %1006 = vadd.xlane.f32.xlu0 %v999
        %v1007 = vpop.xlane.xlu0 %1006
        %vm1008 = vcmask 1040384
        %v1009 = vsel %vm1008, %v1000, 0.0
        %1010 = vadd.xlane.f32.xlu0 %v1009
        %v1011 = vpop.xlane.xlu0 %1010
        %v1012 = vrcp.pop 128.0
        %v1013 = vmul.f32 %v1005, %v1012
        %v1014 = vmul.f32 %v1007, %v1012
        %v1015 = vmul.f32 %v1011, %v1012
        %v1016 = vsub.f32 %v998, %v1013
        %v1017 = vsub.f32 %v999, %v1014
        %v1018 = vsub.f32 %v1000, %v1015
        %v1019 = vmul.f32 %v1016, %v1016
        %v1020 = vmul.f32 %v1017, %v1017
        %v1021 = vmul.f32 %v1018, %v1018
        %1022 = vadd.xlane.f32.xlu0 %v1019
        %v1023 = vpop.xlane.xlu0 %1022
        %1024 = vadd.xlane.f32.xlu0 %v1020
        %v1025 = vpop.xlane.xlu0 %1024
        %v1026 = vsel %vm1008, %v1021, 0.0
        %1027 = vadd.xlane.f32.xlu0 %v1026
        %v1028 = vpop.xlane.xlu0 %1027
        %v1029 = vmul.f32 %v1023, %v1012
        %v1030 = vmul.f32 %v1025, %v1012
        %v1031 = vmul.f32 %v1028, %v1012
        %v1032 = vadd.f32 %v1029, 1e-05
        %v1033 = vadd.f32 %v1030, 1e-05
        %v1034 = vadd.f32 %v1031, 1e-05
        %v1035 = vrsqrt.pop %v1032
        %v1036 = vrsqrt.pop %v1033
        %v1037 = vrsqrt.pop %v1034
        %v1038 = vmul.f32 %v1016, %v1035
        %v1039 = vmul.f32 %v1017, %v1036
        %v1040 = vmul.f32 %v1018, %v1037
        %v1042 = vlaneseq
        %v1043 = vshrl.u32 %v1042, 7
        %v1044 = vsub.s32 0, %v1043
        %v1045 = vrot.slane %v1002, %v1044
        %v1047 = vmul.f32 %v1038, %v1045
        %v1048 = vmul.f32 %v1039, %v1045
        %v1049 = vmul.f32 %v1040, %v1045
        %v1051 = vlaneseq
        %v1052 = vshrl.u32 %v1051, 7
        %v1053 = vsub.s32 0, %v1052
        %v1054 = vrot.slane %v1003, %v1053
        %v1056 = vadd.f32 %v1047, %v1054
        %v1057 = vadd.f32 %v1048, %v1054
        %v1058 = vadd.f32 %v1049, %v1054
        %v1059 = vld [vmem:[%s809] sm:$0xff]
        %v1060 = vld [vmem:[%s809 + $0x8] sm:$0xf]
        %v1061 = vld [vmem:[%s809 + $0xc] sm:$0xff]
        %v1062 = vld [vmem:[%s809 + $0x14] sm:$0xf]
        %v1063 = vld [vmem:[%s809 + $0x18] sm:$0xff]
        %v1064 = vld [vmem:[%s809 + $0x20] sm:$0xf]
        %v1065 = vld [vmem:[%s809 + $0x24] sm:$0xff]
        %v1066 = vld [vmem:[%s809 + $0x2c] sm:$0xf]
        %v1067 = vld [vmem:[%s809 + $0x30] sm:$0xff]
        %v1068 = vld [vmem:[%s809 + $0x38] sm:$0xf]
        %v1069 = vld [vmem:[%s809 + $0x3c] sm:$0xff]
        %v1070 = vld [vmem:[%s809 + $0x44] sm:$0xf]
        %v1071 = vld [vmem:[%s809 + $0x48] sm:$0xff]
        %v1072 = vld [vmem:[%s809 + $0x50] sm:$0xf]
        %v1073 = vld [vmem:[%s809 + $0x54] sm:$0xff]
        %v1074 = vld [vmem:[%s809 + $0x5c] sm:$0xf]
        %v1075 = vld [vmem:[%s809 + $0x60] sm:$0xff]
        %v1076 = vld [vmem:[%s809 + $0x68] sm:$0xf]
        %v1077 = vld [vmem:[%s809 + $0x6c] sm:$0xff]
        %v1078 = vld [vmem:[%s809 + $0x74] sm:$0xf]
        %v1079 = vld [vmem:[%s809 + $0x78] sm:$0xff]
        %v1080 = vld [vmem:[%s809 + $0x80] sm:$0xf]
        %v1081 = vld [vmem:[%s809 + $0x84] sm:$0xff]
        %v1082 = vld [vmem:[%s809 + $0x8c] sm:$0xf]
        %v1083 = vld [vmem:[%s809 + $0x90] sm:$0xff]
        %v1084 = vld [vmem:[%s809 + $0x98] sm:$0xf]
        %v1085 = vld [vmem:[%s809 + $0x9c] sm:$0xff]
        %v1086 = vld [vmem:[%s809 + $0xa4] sm:$0xf]
        %v1087 = vld [vmem:[%s809 + $0xa8] sm:$0xff]
        %v1088 = vld [vmem:[%s809 + $0xb0] sm:$0xf]
        %v1089 = vld [vmem:[%s809 + $0xb4] sm:$0xff]
        %v1090 = vld [vmem:[%s809 + $0xbc] sm:$0xf]
        %v1091 = vpack.c.bf16 %v1057, %v1056
        %v1092 = vpack.c.bf16 %v1058, %v1058
        %v1093 = vld [vmem:[%s813] sm:$0x7]
        %v1095 = vlaneseq
        %v1096 = vshrl.u32 %v1095, 7
        %v1097 = vsub.s32 0, %v1096
        %v1098 = vrot.slane %v1093, %v1097
        %v1099 = vlaneseq
        %v1100 = vshrl.u32 %v1099, 7
        %v1101 = vsub.s32 1, %v1100
        %v1102 = vrot.slane %v1093, %v1101
        %v1103 = vlaneseq
        %v1104 = vshrl.u32 %v1103, 7
        %v1105 = vsub.s32 2, %v1104
        %v1106 = vrot.slane %v1093, %v1105
        %v1142 = vunpack.c.l.b16 %v1059
        %v1143 = vunpack.c.h.b16 %v1059
        %v1144 = vunpack.c.l.b16 %v1060
        %v1145 = vunpack.c.l.b16 %v1061
        %v1146 = vunpack.c.h.b16 %v1061
        %v1147 = vunpack.c.l.b16 %v1062
        %v1148 = vunpack.c.l.b16 %v1063
        %v1149 = vunpack.c.h.b16 %v1063
        %v1150 = vunpack.c.l.b16 %v1064
        %v1151 = vunpack.c.l.b16 %v1065
        %v1152 = vunpack.c.h.b16 %v1065
        %v1153 = vunpack.c.l.b16 %v1066
        %v1154 = vunpack.c.l.b16 %v1067
        %v1155 = vunpack.c.h.b16 %v1067
        %v1156 = vunpack.c.l.b16 %v1068
        %v1157 = vunpack.c.l.b16 %v1069
        %v1158 = vunpack.c.h.b16 %v1069
        %v1159 = vunpack.c.l.b16 %v1070
        %v1160 = vunpack.c.l.b16 %v1071
        %v1161 = vunpack.c.h.b16 %v1071
        %v1162 = vunpack.c.l.b16 %v1072
        %v1163 = vunpack.c.l.b16 %v1073
        %v1164 = vunpack.c.h.b16 %v1073
        %v1165 = vunpack.c.l.b16 %v1074
        %v1166 = vunpack.c.l.b16 %v1075
        %v1167 = vunpack.c.h.b16 %v1075
        %v1168 = vunpack.c.l.b16 %v1076
        %v1169 = vunpack.c.l.b16 %v1077
        %v1170 = vunpack.c.h.b16 %v1077
        %v1171 = vunpack.c.l.b16 %v1078
        %v1172 = vunpack.c.l.b16 %v1079
        %v1173 = vunpack.c.h.b16 %v1079
        %v1174 = vunpack.c.l.b16 %v1080
        %v1175 = vunpack.c.l.b16 %v1081
        %v1176 = vunpack.c.h.b16 %v1081
        %v1177 = vunpack.c.l.b16 %v1082
        %v1178 = vunpack.c.l.b16 %v1083
        %v1179 = vunpack.c.h.b16 %v1083
        %v1180 = vunpack.c.l.b16 %v1084
        %v1181 = vunpack.c.l.b16 %v1085
        %v1182 = vunpack.c.h.b16 %v1085
        %v1183 = vunpack.c.l.b16 %v1086
        %v1184 = vunpack.c.l.b16 %v1087
        %v1185 = vunpack.c.h.b16 %v1087
        %v1186 = vunpack.c.l.b16 %v1088
        %v1187 = vunpack.c.l.b16 %v1089
        %v1188 = vunpack.c.h.b16 %v1089
        %v1189 = vunpack.c.l.b16 %v1090
        %v1190 = vpack.c.b16 %v1145, %v1142
        %v1191 = vpack.c.b16 %v1146, %v1143
        %v1192 = vpack.c.b16 %v1147, %v1144
        %v1193 = vpack.c.b16 %v1151, %v1148
        %v1194 = vpack.c.b16 %v1152, %v1149
        %v1195 = vpack.c.b16 %v1153, %v1150
        %v1196 = vpack.c.b16 %v1157, %v1154
        %v1197 = vpack.c.b16 %v1158, %v1155
        %v1198 = vpack.c.b16 %v1159, %v1156
        %v1199 = vpack.c.b16 %v1163, %v1160
        %v1200 = vpack.c.b16 %v1164, %v1161
        %v1201 = vpack.c.b16 %v1165, %v1162
        %v1202 = vpack.c.b16 %v1169, %v1166
        %v1203 = vpack.c.b16 %v1170, %v1167
        %v1204 = vpack.c.b16 %v1171, %v1168
        %v1205 = vpack.c.b16 %v1175, %v1172
        %v1206 = vpack.c.b16 %v1176, %v1173
        %v1207 = vpack.c.b16 %v1177, %v1174
        %v1208 = vpack.c.b16 %v1181, %v1178
        %v1209 = vpack.c.b16 %v1182, %v1179
        %v1210 = vpack.c.b16 %v1183, %v1180
        %v1211 = vpack.c.b16 %v1187, %v1184
        %v1212 = vpack.c.b16 %v1188, %v1185
        %v1213 = vpack.c.b16 %v1189, %v1186
        %1238 = vmatprep.subr.bf16.mxu0 %v1191
        %1239 = vmatpush1.bf16.msra.mxu0 %v1190
        %1240 = vmatprep.subr.bf16.mxu0 %v1194
        %1241 = vmatpush1.bf16.msra.mxu0 %v1193
        %1242 = vmatprep.subr.bf16.mxu0 %v1197
        %1243 = vmatpush1.bf16.msra.mxu0 %v1196
        %1244 = vmatprep.subr.bf16.mxu0 %v1200
        %1245 = vmatpush1.bf16.msra.mxu0 %v1199
        %1246 = vmatprep.subr.bf16.mxu0 %v1203
        %1247 = vmatpush1.bf16.msra.mxu0 %v1202
        %1248 = vmatprep.subr.bf16.mxu0 %v1206
        %1249 = vmatpush1.bf16.msra.mxu0 %v1205
        %1250 = vmatprep.subr.bf16.mxu0 %v1209
        %1251 = vmatpush1.bf16.msra.mxu0 %v1208
        %1252 = vmatprep.subr.bf16.mxu0 %v1212
        %1253 = vmatpush1.bf16.msra.mxu0 %v1211
        %1254 = vmatprep.subr.bf16.mxu0 0
        %1255 = vmatpush1.bf16.msra.mxu0 0
        %1256 = vmatprep.subr.bf16.mxu0 0
        %1257 = vmatpush1.bf16.msra.mxu0 0
        %1258 = vmatprep.subr.bf16.mxu0 0
        %1259 = vmatpush1.bf16.msra.mxu0 0
        %1260 = vmatprep.subr.bf16.mxu0 0
        %1261 = vmatpush1.bf16.msra.mxu0 0
        %1262 = vmatprep.subr.bf16.mxu0 0
        %1263 = vmatpush1.bf16.msra.mxu0 0
        %1264 = vmatprep.subr.bf16.mxu0 0
        %1265 = vmatpush1.bf16.msra.mxu0 0
        %1266 = vmatprep.subr.bf16.mxu0 0
        %1267 = vmatpush1.bf16.msra.mxu0 0
        %1268 = vmatprep.subr.bf16.mxu0 0
        %1269 = vmatpush1.bf16.msra.mxu0 0
        %1270 = vmatprep.mubr.bf16.mxu0 0
        %1271 = vmatmul.mubr.bf16.gmra.mrb[0].mxu0 %v1091
        %v1272 = vpop.f32.mrb[0].mxu0
        %v1273 = vadd.f32 %v1098, %v1272
        %v1274 = vpop.f32.mrb[0].mxu0
        %v1275 = vadd.f32 %v1102, %v1274
        %v1276 = vpop.f32.mrb[0].mxu0
        %v1277 = vadd.f32 %v1098, %v1276
        %v1278 = vpop.f32.mrb[0].mxu0
        %v1279 = vadd.f32 %v1102, %v1278
        %1280 = vmatprep.mubr.bf16.mxu0 0
        %1281 = vmatmul.mubr.bf16.gmra.mrb[0].mxu0 %v1092
        %v1282 = vpop.f32.mrb[0].mxu0
        %v1283 = vadd.f32 %v1098, %v1282
        %v1284 = vpop.f32.mrb[0].mxu0
        %v1285 = vadd.f32 %v1102, %v1284
        %v1286 = vpop.f32.mrb[0].mxu0
        %v1287 = vpop.f32.mrb[0].mxu0
        %1288 = vdwg.mxu0
        %1289 = vmatprep.subr.bf16.mxu0 0
        %1290 = vmatpush1.bf16.msra.mxu0 %v1192
        %1291 = vmatprep.subr.bf16.mxu0 0
        %1292 = vmatpush1.bf16.msra.mxu0 %v1195
        %1293 = vmatprep.subr.bf16.mxu0 0
        %1294 = vmatpush1.bf16.msra.mxu0 %v1198
        %1295 = vmatprep.subr.bf16.mxu0 0
        %1296 = vmatpush1.bf16.msra.mxu0 %v1201
        %1297 = vmatprep.subr.bf16.mxu0 0
        %1298 = vmatpush1.bf16.msra.mxu0 %v1204
        %1299 = vmatprep.subr.bf16.mxu0 0
        %1300 = vmatpush1.bf16.msra.mxu0 %v1207
        %1301 = vmatprep.subr.bf16.mxu0 0
        %1302 = vmatpush1.bf16.msra.mxu0 %v1210
        %1303 = vmatprep.subr.bf16.mxu0 0
        %1304 = vmatpush1.bf16.msra.mxu0 %v1213
        %1305 = vmatprep.subr.bf16.mxu0 0
        %1306 = vmatpush1.bf16.msra.mxu0 0
        %1307 = vmatprep.subr.bf16.mxu0 0
        %1308 = vmatpush1.bf16.msra.mxu0 0
        %1309 = vmatprep.subr.bf16.mxu0 0
        %1310 = vmatpush1.bf16.msra.mxu0 0
        %1311 = vmatprep.subr.bf16.mxu0 0
        %1312 = vmatpush1.bf16.msra.mxu0 0
        %1313 = vmatprep.subr.bf16.mxu0 0
        %1314 = vmatpush1.bf16.msra.mxu0 0
        %1315 = vmatprep.subr.bf16.mxu0 0
        %1316 = vmatpush1.bf16.msra.mxu0 0
        %1317 = vmatprep.subr.bf16.mxu0 0
        %1318 = vmatpush1.bf16.msra.mxu0 0
        %1319 = vmatprep.subr.bf16.mxu0 0
        %1320 = vmatpush1.bf16.msra.mxu0 0
        %1321 = vmatprep.mubr.bf16.mxu0 0
        %1322 = vmatmul.mubr.bf16.gmra.mrb[0].mxu0 %v1091
        %v1323 = vpop.f32.mrb[0].mxu0
        %v1324 = vadd.f32 %v1106, %v1323
        %v1325 = vpop.f32.mrb[0].mxu0
        %v1326 = vpop.f32.mrb[0].mxu0
        %v1327 = vadd.f32 %v1106, %v1326
        %v1328 = vpop.f32.mrb[0].mxu0
        %1329 = vmatprep.mubr.bf16.mxu0 0
        %1330 = vmatmul.mubr.bf16.gmra.mrb[0].mxu0 %v1092
        %v1331 = vpop.f32.mrb[0].mxu0
        %v1332 = vadd.f32 %v1106, %v1331
        %v1333 = vpop.f32.mrb[0].mxu0
        %v1334 = vpop.f32.mrb[0].mxu0
        %v1335 = vpop.f32.mrb[0].mxu0
        %1336 = vdwg.mxu0
        %v1337 = vmul.f32 %v1273, 0.17677669
        %v1338 = vmul.f32 %v1277, 0.17677669
        %v1339 = vmul.f32 %v1283, 0.17677669
        %v1340 = vpack.c.bf16 %v1338, %v1337
        %v1341 = vpack.c.bf16 %v1339, %v1339
        %v1342 = vpack.c.bf16 %v1279, %v1275
        %v1343 = vpack.c.bf16 %v1285, %v1285
        %v1345 = vlaneseq
        %v1346 = vshrl.u32 %v1345, 7
        %v1347 = vsub.s32 0, %v1346
        %v1348 = vrot.slane %v1001, %v1347
        %vm1350 = vcmask 261120
        %v1352 = vsel %vm1350, %v1340, 0
        %v1355 = vsel %vm1350, %v1341, 0
        %v1358 = vsel %vm1350, %v1342, 0
        %v1361 = vsel %vm1350, %v1343, 0
        %1363 = vmatprep.subr.bf16.mxu0 0
        %1364 = vmatpush1.bf16.xpose.msra.mxu0 %v1358
        %1365 = vmatprep.subr.bf16.mxu0 0
        %1366 = vmatpush1.bf16.xpose.msra.mxu0 %v1361
        %1367 = vmatprep.subr.bf16.mxu0 0
        %1368 = vmatpush1.bf16.xpose.msra.mxu0 0
        %1369 = vmatprep.subr.bf16.mxu0 0
        %1370 = vmatpush1.bf16.xpose.msra.mxu0 0
        %1371 = vmatprep.subr.bf16.mxu0 0
        %1372 = vmatpush1.bf16.xpose.msra.mxu0 0
        %1373 = vmatprep.subr.bf16.mxu0 0
        %1374 = vmatpush1.bf16.xpose.msra.mxu0 0
        %1375 = vmatprep.subr.bf16.mxu0 0
        %1376 = vmatpush1.bf16.xpose.msra.mxu0 0
        %1377 = vmatprep.subr.bf16.mxu0 0
        %1378 = vmatpush1.bf16.xpose.msra.mxu0 0
        %1379 = vmatprep.subr.bf16.mxu0 0
        %1380 = vmatpush1.bf16.xpose.msra.mxu0 0
        %1381 = vmatprep.subr.bf16.mxu0 0
        %1382 = vmatpush1.bf16.xpose.msra.mxu0 0
        %1383 = vmatprep.subr.bf16.mxu0 0
        %1384 = vmatpush1.bf16.xpose.msra.mxu0 0
        %1385 = vmatprep.subr.bf16.mxu0 0
        %1386 = vmatpush1.bf16.xpose.msra.mxu0 0
        %1387 = vmatprep.subr.bf16.mxu0 0
        %1388 = vmatpush1.bf16.xpose.msra.mxu0 0
        %1389 = vmatprep.subr.bf16.mxu0 0
        %1390 = vmatpush1.bf16.xpose.msra.mxu0 0
        %1391 = vmatprep.subr.bf16.mxu0 0
        %1392 = vmatpush1.bf16.xpose.msra.mxu0 0
        %1393 = vmatprep.subr.bf16.mxu0 0
        %1394 = vmatpush1.bf16.xpose.msra.mxu0 0
        %1395 = vmatprep.mubr.bf16.mxu0 0
        %1396 = vmatmul.mubr.bf16.gmra.mrb[0].mxu0 %v1352
        %v1397 = vpop.f32.mrb[0].mxu0
        %v1398 = vadd.f32 %v1348, %v1397
        %v1399 = vpop.f32.mrb[0].mxu0
        %v1400 = vpop.f32.mrb[0].mxu0
        %v1401 = vadd.f32 %v1348, %v1400
        %v1402 = vpop.f32.mrb[0].mxu0
        %1403 = vmatprep.mubr.bf16.mxu0 0
        %1404 = vmatmul.mubr.bf16.gmra.mrb[0].mxu0 %v1355
        %v1405 = vpop.f32.mrb[0].mxu0
        %v1406 = vadd.f32 %v1348, %v1405
        %v1407 = vpop.f32.mrb[0].mxu0
        %v1408 = vpop.f32.mrb[0].mxu0
        %v1409 = vpop.f32.mrb[0].mxu0
        %1410 = vdwg.mxu0
        %vm1411 = vcmask 138240
        %v1412 = vsel %vm1411, %v1398, -inf
        %1413 = vmax.xlane.f32.xlu0 %v1412
        %v1414 = vpop.xlane.xlu0 %1413
        %v1415 = vsel %vm1411, %v1401, -inf
        %1416 = vmax.xlane.f32.xlu0 %v1415
        %v1417 = vpop.xlane.xlu0 %1416
        %vm1418 = vcmask 131072
        %v1419 = vsel %vm1418, %v1406, -inf
        %1420 = vmax.xlane.f32.xlu0 %v1419
        %v1421 = vpop.xlane.xlu0 %1420
        %v1422 = vsub.f32 %v1398, %v1414
        %v1423 = vsub.f32 %v1401, %v1417
        %v1424 = vsub.f32 %v1406, %v1421
        %v1425 = vmul.f32 %v1422, 1.442695
        %v1426 = vpow.pop %v1425
        %v1427 = vmul.f32 %v1423, 1.442695
        %v1428 = vpow.pop %v1427
        %v1429 = vmul.f32 %v1424, 1.442695
        %v1430 = vpow.pop %v1429
        %v1431 = vsel %vm1411, %v1426, 0.0
        %1432 = vadd.xlane.f32.xlu0 %v1431
        %v1433 = vpop.xlane.xlu0 %1432
        %v1434 = vsel %vm1411, %v1428, 0.0
        %1435 = vadd.xlane.f32.xlu0 %v1434
        %v1436 = vpop.xlane.xlu0 %1435
        %v1437 = vsel %vm1418, %v1430, 0.0
        %1438 = vadd.xlane.f32.xlu0 %v1437
        %v1439 = vpop.xlane.xlu0 %1438
        %v1440 = vrcp.pop %v1433
        %v1441 = vrcp.pop %v1436
        %v1442 = vrcp.pop %v1439
        %v1443 = vmul.f32 %v1426, %v1440
        %v1444 = vmul.f32 %v1428, %v1441
        %v1445 = vmul.f32 %v1430, %v1442
        %v1446 = vpack.c.bf16 %v1444, %v1443
        %v1447 = vpack.c.bf16 %v1445, %v1445
        %v1448 = vpack.c.bf16 %v1327, %v1324
        %v1449 = vpack.c.bf16 %v1332, %v1332
        %v1451 = vsel %vm1411, %v1446, 0
        %v1454 = vsel %vm1411, %v1447, 0
        %v1456 = vsel 0, 4294967295, 65535
        %v1457 = vsel %vm1008, %v1456, 0
        %v1459 = vand.u32 %v1449, %v1457
        %1461 = vmatprep.subr.bf16.mxu0 0
        %1462 = vmatpush1.bf16.msra.mxu0 %v1448
        %1463 = vmatprep.subr.bf16.mxu0 0
        %1464 = vmatpush1.bf16.msra.mxu0 %v1459
        %1465 = vmatprep.subr.bf16.mxu0 0
        %1466 = vmatpush1.bf16.msra.mxu0 0
        %1467 = vmatprep.subr.bf16.mxu0 0
        %1468 = vmatpush1.bf16.msra.mxu0 0
        %1469 = vmatprep.subr.bf16.mxu0 0
        %1470 = vmatpush1.bf16.msra.mxu0 0
        %1471 = vmatprep.subr.bf16.mxu0 0
        %1472 = vmatpush1.bf16.msra.mxu0 0
        %1473 = vmatprep.subr.bf16.mxu0 0
        %1474 = vmatpush1.bf16.msra.mxu0 0
        %1475 = vmatprep.subr.bf16.mxu0 0
        %1476 = vmatpush1.bf16.msra.mxu0 0
        %1477 = vmatprep.subr.bf16.mxu0 0
        %1478 = vmatpush1.bf16.msra.mxu0 0
        %1479 = vmatprep.subr.bf16.mxu0 0
        %1480 = vmatpush1.bf16.msra.mxu0 0
        %1481 = vmatprep.subr.bf16.mxu0 0
        %1482 = vmatpush1.bf16.msra.mxu0 0
        %1483 = vmatprep.subr.bf16.mxu0 0
        %1484 = vmatpush1.bf16.msra.mxu0 0
        %1485 = vmatprep.subr.bf16.mxu0 0
        %1486 = vmatpush1.bf16.msra.mxu0 0
        %1487 = vmatprep.subr.bf16.mxu0 0
        %1488 = vmatpush1.bf16.msra.mxu0 0
        %1489 = vmatprep.subr.bf16.mxu0 0
        %1490 = vmatpush1.bf16.msra.mxu0 0
        %1491 = vmatprep.subr.bf16.mxu0 0
        %1492 = vmatpush1.bf16.msra.mxu0 0
        %1493 = vmatprep.mubr.bf16.mxu0 0
        %1494 = vmatmul.mubr.bf16.gmra.mrb[0].mxu0 %v1451
        %v1495 = vpop.f32.mrb[0].mxu0
        %v1496 = vadd.f32 0.0, %v1495
        %v1497 = vpop.f32.mrb[0].mxu0
        %v1498 = vpop.f32.mrb[0].mxu0
        %v1499 = vadd.f32 0.0, %v1498
        %v1500 = vpop.f32.mrb[0].mxu0
        %1501 = vmatprep.mubr.bf16.mxu0 0
        %1502 = vmatmul.mubr.bf16.gmra.mrb[0].mxu0 %v1454
        %v1503 = vpop.f32.mrb[0].mxu0
        %v1504 = vadd.f32 0.0, %v1503
        %v1505 = vpop.f32.mrb[0].mxu0
        %v1506 = vpop.f32.mrb[0].mxu0
        %v1507 = vpop.f32.mrb[0].mxu0
        %1508 = vdwg.mxu0
        %1511 = vrot.lane.b32.xlu0 %v1340, 96
        %v1512 = vpop.permute.xlu0 %1511
        %1513 = vrot.lane.b32.xlu0 %v1341, 96
        %v1514 = vpop.permute.xlu0 %1513
        %1517 = vrot.lane.b32.xlu0 %v1342, 96
        %v1518 = vpop.permute.xlu0 %1517
        %1519 = vrot.lane.b32.xlu0 %v1343, 96
        %v1520 = vpop.permute.xlu0 %1519
        %v1522 = vsel %vm1350, %v1512, 0
        %v1525 = vsel %vm1350, %v1514, 0
        %v1528 = vsel %vm1350, %v1518, 0
        %v1531 = vsel %vm1350, %v1520, 0
        %1533 = vmatprep.subr.bf16.mxu0 0
        %1534 = vmatpush1.bf16.xpose.msra.mxu0 %v1528
        %1535 = vmatprep.subr.bf16.mxu0 0
        %1536 = vmatpush1.bf16.xpose.msra.mxu0 %v1531
        %1537 = vmatprep.subr.bf16.mxu0 0
        %1538 = vmatpush1.bf16.xpose.msra.mxu0 0
        %1539 = vmatprep.subr.bf16.mxu0 0
        %1540 = vmatpush1.bf16.xpose.msra.mxu0 0
        %1541 = vmatprep.subr.bf16.mxu0 0
        %1542 = vmatpush1.bf16.xpose.msra.mxu0 0
        %1543 = vmatprep.subr.bf16.mxu0 0
        %1544 = vmatpush1.bf16.xpose.msra.mxu0 0
        %1545 = vmatprep.subr.bf16.mxu0 0
        %1546 = vmatpush1.bf16.xpose.msra.mxu0 0
        %1547 = vmatprep.subr.bf16.mxu0 0
        %1548 = vmatpush1.bf16.xpose.msra.mxu0 0
        %1549 = vmatprep.subr.bf16.mxu0 0
        %1550 = vmatpush1.bf16.xpose.msra.mxu0 0
        %1551 = vmatprep.subr.bf16.mxu0 0
        %1552 = vmatpush1.bf16.xpose.msra.mxu0 0
        %1553 = vmatprep.subr.bf16.mxu0 0
        %1554 = vmatpush1.bf16.xpose.msra.mxu0 0
        %1555 = vmatprep.subr.bf16.mxu0 0
        %1556 = vmatpush1.bf16.xpose.msra.mxu0 0
        %1557 = vmatprep.subr.bf16.mxu0 0
        %1558 = vmatpush1.bf16.xpose.msra.mxu0 0
        %1559 = vmatprep.subr.bf16.mxu0 0
        %1560 = vmatpush1.bf16.xpose.msra.mxu0 0
        %1561 = vmatprep.subr.bf16.mxu0 0
        %1562 = vmatpush1.bf16.xpose.msra.mxu0 0
        %1563 = vmatprep.subr.bf16.mxu0 0
        %1564 = vmatpush1.bf16.xpose.msra.mxu0 0
        %1565 = vmatprep.mubr.bf16.mxu0 0
        %1566 = vmatmul.mubr.bf16.gmra.mrb[0].mxu0 %v1522
        %v1567 = vpop.f32.mrb[0].mxu0
        %v1568 = vadd.f32 %v1348, %v1567
        %v1569 = vpop.f32.mrb[0].mxu0
        %v1570 = vpop.f32.mrb[0].mxu0
        %v1571 = vadd.f32 %v1348, %v1570
        %v1572 = vpop.f32.mrb[0].mxu0
        %1573 = vmatprep.mubr.bf16.mxu0 0
        %1574 = vmatmul.mubr.bf16.gmra.mrb[0].mxu0 %v1525
        %v1575 = vpop.f32.mrb[0].mxu0
        %v1576 = vadd.f32 %v1348, %v1575
        %v1577 = vpop.f32.mrb[0].mxu0
        %v1578 = vpop.f32.mrb[0].mxu0
        %v1579 = vpop.f32.mrb[0].mxu0
        %1580 = vdwg.mxu0
        %v1581 = vsel %vm1411, %v1568, -inf
        %1582 = vmax.xlane.f32.xlu0 %v1581
        %v1583 = vpop.xlane.xlu0 %1582
        %v1584 = vsel %vm1411, %v1571, -inf
        %1585 = vmax.xlane.f32.xlu0 %v1584
        %v1586 = vpop.xlane.xlu0 %1585
        %v1587 = vsel %vm1418, %v1576, -inf
        %1588 = vmax.xlane.f32.xlu0 %v1587
        %v1589 = vpop.xlane.xlu0 %1588
        %v1590 = vsub.f32 %v1568, %v1583
        %v1591 = vsub.f32 %v1571, %v1586
        %v1592 = vsub.f32 %v1576, %v1589
        %v1593 = vmul.f32 %v1590, 1.442695
        %v1594 = vpow.pop %v1593
        %v1595 = vmul.f32 %v1591, 1.442695
        %v1596 = vpow.pop %v1595
        %v1597 = vmul.f32 %v1592, 1.442695
        %v1598 = vpow.pop %v1597
        %v1599 = vsel %vm1411, %v1594, 0.0
        %1600 = vadd.xlane.f32.xlu0 %v1599
        %v1601 = vpop.xlane.xlu0 %1600
        %v1602 = vsel %vm1411, %v1596, 0.0
        %1603 = vadd.xlane.f32.xlu0 %v1602
        %v1604 = vpop.xlane.xlu0 %1603
        %v1605 = vsel %vm1418, %v1598, 0.0
        %1606 = vadd.xlane.f32.xlu0 %v1605
        %v1607 = vpop.xlane.xlu0 %1606
        %v1608 = vrcp.pop %v1601
        %v1609 = vrcp.pop %v1604
        %v1610 = vrcp.pop %v1607
        %v1611 = vmul.f32 %v1594, %v1608
        %v1612 = vmul.f32 %v1596, %v1609
        %v1613 = vmul.f32 %v1598, %v1610
        %v1614 = vpack.c.bf16 %v1612, %v1611
        %v1615 = vpack.c.bf16 %v1613, %v1613
        %1618 = vrot.lane.b32.xlu0 %v1448, 96
        %v1619 = vpop.permute.xlu0 %1618
        %1620 = vrot.lane.b32.xlu0 %v1449, 96
        %v1621 = vpop.permute.xlu0 %1620
        %v1624 = vsel %vm1411, %v1614, 0
        %v1627 = vsel %vm1411, %v1615, 0
        %v1630 = vand.u32 %v1621, %v1457
        %1632 = vmatprep.subr.bf16.mxu0 0
        %1633 = vmatpush1.bf16.msra.mxu0 %v1619
        %1634 = vmatprep.subr.bf16.mxu0 0
        %1635 = vmatpush1.bf16.msra.mxu0 %v1630
        %1636 = vmatprep.subr.bf16.mxu0 0
        %1637 = vmatpush1.bf16.msra.mxu0 0
        %1638 = vmatprep.subr.bf16.mxu0 0
        %1639 = vmatpush1.bf16.msra.mxu0 0
        %1640 = vmatprep.subr.bf16.mxu0 0
        %1641 = vmatpush1.bf16.msra.mxu0 0
        %1642 = vmatprep.subr.bf16.mxu0 0
        %1643 = vmatpush1.bf16.msra.mxu0 0
        %1644 = vmatprep.subr.bf16.mxu0 0
        %1645 = vmatpush1.bf16.msra.mxu0 0
        %1646 = vmatprep.subr.bf16.mxu0 0
        %1647 = vmatpush1.bf16.msra.mxu0 0
        %1648 = vmatprep.subr.bf16.mxu0 0
        %1649 = vmatpush1.bf16.msra.mxu0 0
        %1650 = vmatprep.subr.bf16.mxu0 0
        %1651 = vmatpush1.bf16.msra.mxu0 0
        %1652 = vmatprep.subr.bf16.mxu0 0
        %1653 = vmatpush1.bf16.msra.mxu0 0
        %1654 = vmatprep.subr.bf16.mxu0 0
        %1655 = vmatpush1.bf16.msra.mxu0 0
        %1656 = vmatprep.subr.bf16.mxu0 0
        %1657 = vmatpush1.bf16.msra.mxu0 0
        %1658 = vmatprep.subr.bf16.mxu0 0
        %1659 = vmatpush1.bf16.msra.mxu0 0
        %1660 = vmatprep.subr.bf16.mxu0 0
        %1661 = vmatpush1.bf16.msra.mxu0 0
        %1662 = vmatprep.subr.bf16.mxu0 0
        %1663 = vmatpush1.bf16.msra.mxu0 0
        %1664 = vmatprep.mubr.bf16.mxu0 0
        %1665 = vmatmul.mubr.bf16.gmra.mrb[0].mxu0 %v1624
        %v1666 = vpop.f32.mrb[0].mxu0
        %v1667 = vadd.f32 0.0, %v1666
        %v1668 = vpop.f32.mrb[0].mxu0
        %v1669 = vpop.f32.mrb[0].mxu0
        %v1670 = vadd.f32 0.0, %v1669
        %v1671 = vpop.f32.mrb[0].mxu0
        %1672 = vmatprep.mubr.bf16.mxu0 0
        %1673 = vmatmul.mubr.bf16.gmra.mrb[0].mxu0 %v1627
        %v1674 = vpop.f32.mrb[0].mxu0
        %v1675 = vadd.f32 0.0, %v1674
        %v1676 = vpop.f32.mrb[0].mxu0
        %v1677 = vpop.f32.mrb[0].mxu0
        %v1678 = vpop.f32.mrb[0].mxu0
        %1679 = vdwg.mxu0
        %1680 = vrot.lane.b32.xlu0 %v1340, 64
        %v1681 = vpop.permute.xlu0 %1680
        %1682 = vrot.lane.b32.xlu0 %v1341, 64
        %v1683 = vpop.permute.xlu0 %1682
        %1684 = vrot.lane.b32.xlu0 %v1342, 64
        %v1685 = vpop.permute.xlu0 %1684
        %1686 = vrot.lane.b32.xlu0 %v1343, 64
        %v1687 = vpop.permute.xlu0 %1686
        %v1689 = vsel %vm1350, %v1681, 0
        %v1692 = vsel %vm1350, %v1683, 0
        %v1695 = vsel %vm1350, %v1685, 0
        %v1698 = vsel %vm1350, %v1687, 0
        %1700 = vmatprep.subr.bf16.mxu0 0
        %1701 = vmatpush1.bf16.xpose.msra.mxu0 %v1695
        %1702 = vmatprep.subr.bf16.mxu0 0
        %1703 = vmatpush1.bf16.xpose.msra.mxu0 %v1698
        %1704 = vmatprep.subr.bf16.mxu0 0
        %1705 = vmatpush1.bf16.xpose.msra.mxu0 0
        %1706 = vmatprep.subr.bf16.mxu0 0
        %1707 = vmatpush1.bf16.xpose.msra.mxu0 0
        %1708 = vmatprep.subr.bf16.mxu0 0
        %1709 = vmatpush1.bf16.xpose.msra.mxu0 0
        %1710 = vmatprep.subr.bf16.mxu0 0
        %1711 = vmatpush1.bf16.xpose.msra.mxu0 0
        %1712 = vmatprep.subr.bf16.mxu0 0
        %1713 = vmatpush1.bf16.xpose.msra.mxu0 0
        %1714 = vmatprep.subr.bf16.mxu0 0
        %1715 = vmatpush1.bf16.xpose.msra.mxu0 0
        %1716 = vmatprep.subr.bf16.mxu0 0
        %1717 = vmatpush1.bf16.xpose.msra.mxu0 0
        %1718 = vmatprep.subr.bf16.mxu0 0
        %1719 = vmatpush1.bf16.xpose.msra.mxu0 0
        %1720 = vmatprep.subr.bf16.mxu0 0
        %1721 = vmatpush1.bf16.xpose.msra.mxu0 0
        %1722 = vmatprep.subr.bf16.mxu0 0
        %1723 = vmatpush1.bf16.xpose.msra.mxu0 0
        %1724 = vmatprep.subr.bf16.mxu0 0
        %1725 = vmatpush1.bf16.xpose.msra.mxu0 0
        %1726 = vmatprep.subr.bf16.mxu0 0
        %1727 = vmatpush1.bf16.xpose.msra.mxu0 0
        %1728 = vmatprep.subr.bf16.mxu0 0
        %1729 = vmatpush1.bf16.xpose.msra.mxu0 0
        %1730 = vmatprep.subr.bf16.mxu0 0
        %1731 = vmatpush1.bf16.xpose.msra.mxu0 0
        %1732 = vmatprep.mubr.bf16.mxu0 0
        %1733 = vmatmul.mubr.bf16.gmra.mrb[0].mxu0 %v1689
        %v1734 = vpop.f32.mrb[0].mxu0
        %v1735 = vadd.f32 %v1348, %v1734
        %v1736 = vpop.f32.mrb[0].mxu0
        %v1737 = vpop.f32.mrb[0].mxu0
        %v1738 = vadd.f32 %v1348, %v1737
        %v1739 = vpop.f32.mrb[0].mxu0
        %1740 = vmatprep.mubr.bf16.mxu0 0
        %1741 = vmatmul.mubr.bf16.gmra.mrb[0].mxu0 %v1692
        %v1742 = vpop.f32.mrb[0].mxu0
        %v1743 = vadd.f32 %v1348, %v1742
        %v1744 = vpop.f32.mrb[0].mxu0
        %v1745 = vpop.f32.mrb[0].mxu0
        %v1746 = vpop.f32.mrb[0].mxu0
        %1747 = vdwg.mxu0
        %v1748 = vsel %vm1411, %v1735, -inf
        %1749 = vmax.xlane.f32.xlu0 %v1748
        %v1750 = vpop.xlane.xlu0 %1749
        %v1751 = vsel %vm1411, %v1738, -inf
        %1752 = vmax.xlane.f32.xlu0 %v1751
        %v1753 = vpop.xlane.xlu0 %1752
        %v1754 = vsel %vm1418, %v1743, -inf
        %1755 = vmax.xlane.f32.xlu0 %v1754
        %v1756 = vpop.xlane.xlu0 %1755
        %v1757 = vsub.f32 %v1735, %v1750
        %v1758 = vsub.f32 %v1738, %v1753
        %v1759 = vsub.f32 %v1743, %v1756
        %v1760 = vmul.f32 %v1757, 1.442695
        %v1761 = vpow.pop %v1760
        %v1762 = vmul.f32 %v1758, 1.442695
        %v1763 = vpow.pop %v1762
        %v1764 = vmul.f32 %v1759, 1.442695
        %v1765 = vpow.pop %v1764
        %v1766 = vsel %vm1411, %v1761, 0.0
        %1767 = vadd.xlane.f32.xlu0 %v1766
        %v1768 = vpop.xlane.xlu0 %1767
        %v1769 = vsel %vm1411, %v1763, 0.0
        %1770 = vadd.xlane.f32.xlu0 %v1769
        %v1771 = vpop.xlane.xlu0 %1770
        %v1772 = vsel %vm1418, %v1765, 0.0
        %1773 = vadd.xlane.f32.xlu0 %v1772
        %v1774 = vpop.xlane.xlu0 %1773
        %v1775 = vrcp.pop %v1768
        %v1776 = vrcp.pop %v1771
        %v1777 = vrcp.pop %v1774
        %v1778 = vmul.f32 %v1761, %v1775
        %v1779 = vmul.f32 %v1763, %v1776
        %v1780 = vmul.f32 %v1765, %v1777
        %v1781 = vpack.c.bf16 %v1779, %v1778
        %v1782 = vpack.c.bf16 %v1780, %v1780
        %1783 = vrot.lane.b32.xlu0 %v1448, 64
        %v1784 = vpop.permute.xlu0 %1783
        %1785 = vrot.lane.b32.xlu0 %v1449, 64
        %v1786 = vpop.permute.xlu0 %1785
        %v1789 = vsel %vm1411, %v1781, 0
        %v1792 = vsel %vm1411, %v1782, 0
        %v1795 = vand.u32 %v1786, %v1457
        %1797 = vmatprep.subr.bf16.mxu0 0
        %1798 = vmatpush1.bf16.msra.mxu0 %v1784
        %1799 = vmatprep.subr.bf16.mxu0 0
        %1800 = vmatpush1.bf16.msra.mxu0 %v1795
        %1801 = vmatprep.subr.bf16.mxu0 0
        %1802 = vmatpush1.bf16.msra.mxu0 0
        %1803 = vmatprep.subr.bf16.mxu0 0
        %1804 = vmatpush1.bf16.msra.mxu0 0
        %1805 = vmatprep.subr.bf16.mxu0 0
        %1806 = vmatpush1.bf16.msra.mxu0 0
        %1807 = vmatprep.subr.bf16.mxu0 0
        %1808 = vmatpush1.bf16.msra.mxu0 0
        %1809 = vmatprep.subr.bf16.mxu0 0
        %1810 = vmatpush1.bf16.msra.mxu0 0
        %1811 = vmatprep.subr.bf16.mxu0 0
        %1812 = vmatpush1.bf16.msra.mxu0 0
        %1813 = vmatprep.subr.bf16.mxu0 0
        %1814 = vmatpush1.bf16.msra.mxu0 0
        %1815 = vmatprep.subr.bf16.mxu0 0
        %1816 = vmatpush1.bf16.msra.mxu0 0
        %1817 = vmatprep.subr.bf16.mxu0 0
        %1818 = vmatpush1.bf16.msra.mxu0 0
        %1819 = vmatprep.subr.bf16.mxu0 0
        %1820 = vmatpush1.bf16.msra.mxu0 0
        %1821 = vmatprep.subr.bf16.mxu0 0
        %1822 = vmatpush1.bf16.msra.mxu0 0
        %1823 = vmatprep.subr.bf16.mxu0 0
        %1824 = vmatpush1.bf16.msra.mxu0 0
        %1825 = vmatprep.subr.bf16.mxu0 0
        %1826 = vmatpush1.bf16.msra.mxu0 0
        %1827 = vmatprep.subr.bf16.mxu0 0
        %1828 = vmatpush1.bf16.msra.mxu0 0
        %1829 = vmatprep.mubr.bf16.mxu0 0
        %1830 = vmatmul.mubr.bf16.gmra.mrb[0].mxu0 %v1789
        %v1831 = vpop.f32.mrb[0].mxu0
        %v1832 = vadd.f32 0.0, %v1831
        %v1833 = vpop.f32.mrb[0].mxu0
        %v1834 = vpop.f32.mrb[0].mxu0
        %v1835 = vadd.f32 0.0, %v1834
        %v1836 = vpop.f32.mrb[0].mxu0
        %1837 = vmatprep.mubr.bf16.mxu0 0
        %1838 = vmatmul.mubr.bf16.gmra.mrb[0].mxu0 %v1792
        %v1839 = vpop.f32.mrb[0].mxu0
        %v1840 = vadd.f32 0.0, %v1839
        %v1841 = vpop.f32.mrb[0].mxu0
        %v1842 = vpop.f32.mrb[0].mxu0
        %v1843 = vpop.f32.mrb[0].mxu0
        %1844 = vdwg.mxu0
        %1845 = vrot.lane.b32.xlu0 %v1340, 32
        %v1846 = vpop.permute.xlu0 %1845
        %1847 = vrot.lane.b32.xlu0 %v1341, 32
        %v1848 = vpop.permute.xlu0 %1847
        %1849 = vrot.lane.b32.xlu0 %v1342, 32
        %v1850 = vpop.permute.xlu0 %1849
        %1851 = vrot.lane.b32.xlu0 %v1343, 32
        %v1852 = vpop.permute.xlu0 %1851
        %v1854 = vsel %vm1350, %v1846, 0
        %v1857 = vsel %vm1350, %v1848, 0
        %v1860 = vsel %vm1350, %v1850, 0
        %v1863 = vsel %vm1350, %v1852, 0
        %1865 = vmatprep.subr.bf16.mxu0 0
        %1866 = vmatpush1.bf16.xpose.msra.mxu0 %v1860
        %1867 = vmatprep.subr.bf16.mxu0 0
        %1868 = vmatpush1.bf16.xpose.msra.mxu0 %v1863
        %1869 = vmatprep.subr.bf16.mxu0 0
        %1870 = vmatpush1.bf16.xpose.msra.mxu0 0
        %1871 = vmatprep.subr.bf16.mxu0 0
        %1872 = vmatpush1.bf16.xpose.msra.mxu0 0
        %1873 = vmatprep.subr.bf16.mxu0 0
        %1874 = vmatpush1.bf16.xpose.msra.mxu0 0
        %1875 = vmatprep.subr.bf16.mxu0 0
        %1876 = vmatpush1.bf16.xpose.msra.mxu0 0
        %1877 = vmatprep.subr.bf16.mxu0 0
        %1878 = vmatpush1.bf16.xpose.msra.mxu0 0
        %1879 = vmatprep.subr.bf16.mxu0 0
        %1880 = vmatpush1.bf16.xpose.msra.mxu0 0
        %1881 = vmatprep.subr.bf16.mxu0 0
        %1882 = vmatpush1.bf16.xpose.msra.mxu0 0
        %1883 = vmatprep.subr.bf16.mxu0 0
        %1884 = vmatpush1.bf16.xpose.msra.mxu0 0
        %1885 = vmatprep.subr.bf16.mxu0 0
        %1886 = vmatpush1.bf16.xpose.msra.mxu0 0
        %1887 = vmatprep.subr.bf16.mxu0 0
        %1888 = vmatpush1.bf16.xpose.msra.mxu0 0
        %1889 = vmatprep.subr.bf16.mxu0 0
        %1890 = vmatpush1.bf16.xpose.msra.mxu0 0
        %1891 = vmatprep.subr.bf16.mxu0 0
        %1892 = vmatpush1.bf16.xpose.msra.mxu0 0
        %1893 = vmatprep.subr.bf16.mxu0 0
        %1894 = vmatpush1.bf16.xpose.msra.mxu0 0
        %1895 = vmatprep.subr.bf16.mxu0 0
        %1896 = vmatpush1.bf16.xpose.msra.mxu0 0
        %1897 = vmatprep.mubr.bf16.mxu0 0
        %1898 = vmatmul.mubr.bf16.gmra.mrb[0].mxu0 %v1854
        %v1899 = vpop.f32.mrb[0].mxu0
        %v1900 = vadd.f32 %v1348, %v1899
        %v1901 = vpop.f32.mrb[0].mxu0
        %v1902 = vpop.f32.mrb[0].mxu0
        %v1903 = vadd.f32 %v1348, %v1902
        %v1904 = vpop.f32.mrb[0].mxu0
        %1905 = vmatprep.mubr.bf16.mxu0 0
        %1906 = vmatmul.mubr.bf16.gmra.mrb[0].mxu0 %v1857
        %v1907 = vpop.f32.mrb[0].mxu0
        %v1908 = vadd.f32 %v1348, %v1907
        %v1909 = vpop.f32.mrb[0].mxu0
        %v1910 = vpop.f32.mrb[0].mxu0
        %v1911 = vpop.f32.mrb[0].mxu0
        %1912 = vdwg.mxu0
        %v1913 = vsel %vm1411, %v1900, -inf
        %1914 = vmax.xlane.f32.xlu0 %v1913
        %v1915 = vpop.xlane.xlu0 %1914
        %v1916 = vsel %vm1411, %v1903, -inf
        %1917 = vmax.xlane.f32.xlu0 %v1916
        %v1918 = vpop.xlane.xlu0 %1917
        %v1919 = vsel %vm1418, %v1908, -inf
        %1920 = vmax.xlane.f32.xlu0 %v1919
        %v1921 = vpop.xlane.xlu0 %1920
        %v1922 = vsub.f32 %v1900, %v1915
        %v1923 = vsub.f32 %v1903, %v1918
        %v1924 = vsub.f32 %v1908, %v1921
        %v1925 = vmul.f32 %v1922, 1.442695
        %v1926 = vpow.pop %v1925
        %v1927 = vmul.f32 %v1923, 1.442695
        %v1928 = vpow.pop %v1927
        %v1929 = vmul.f32 %v1924, 1.442695
        %v1930 = vpow.pop %v1929
        %v1931 = vsel %vm1411, %v1926, 0.0
        %1932 = vadd.xlane.f32.xlu0 %v1931
        %v1933 = vpop.xlane.xlu0 %1932
        %v1934 = vsel %vm1411, %v1928, 0.0
        %1935 = vadd.xlane.f32.xlu0 %v1934
        %v1936 = vpop.xlane.xlu0 %1935
        %v1937 = vsel %vm1418, %v1930, 0.0
        %1938 = vadd.xlane.f32.xlu0 %v1937
        %v1939 = vpop.xlane.xlu0 %1938
        %v1940 = vrcp.pop %v1933
        %v1941 = vrcp.pop %v1936
        %v1942 = vrcp.pop %v1939
        %v1943 = vmul.f32 %v1926, %v1940
        %v1944 = vmul.f32 %v1928, %v1941
        %v1945 = vmul.f32 %v1930, %v1942
        %v1946 = vpack.c.bf16 %v1944, %v1943
        %v1947 = vpack.c.bf16 %v1945, %v1945
        %1948 = vrot.lane.b32.xlu0 %v1448, 32
        %v1949 = vpop.permute.xlu0 %1948
        %1950 = vrot.lane.b32.xlu0 %v1449, 32
        %v1951 = vpop.permute.xlu0 %1950
        %v1954 = vsel %vm1411, %v1946, 0
        %v1957 = vsel %vm1411, %v1947, 0
        %v1960 = vand.u32 %v1951, %v1457
        %1962 = vmatprep.subr.bf16.mxu0 0
        %1963 = vmatpush1.bf16.msra.mxu0 %v1949
        %1964 = vmatprep.subr.bf16.mxu0 0
        %1965 = vmatpush1.bf16.msra.mxu0 %v1960
        %1966 = vmatprep.subr.bf16.mxu0 0
        %1967 = vmatpush1.bf16.msra.mxu0 0
        %1968 = vmatprep.subr.bf16.mxu0 0
        %1969 = vmatpush1.bf16.msra.mxu0 0
        %1970 = vmatprep.subr.bf16.mxu0 0
        %1971 = vmatpush1.bf16.msra.mxu0 0
        %1972 = vmatprep.subr.bf16.mxu0 0
        %1973 = vmatpush1.bf16.msra.mxu0 0
        %1974 = vmatprep.subr.bf16.mxu0 0
        %1975 = vmatpush1.bf16.msra.mxu0 0
        %1976 = vmatprep.subr.bf16.mxu0 0
        %1977 = vmatpush1.bf16.msra.mxu0 0
        %1978 = vmatprep.subr.bf16.mxu0 0
        %1979 = vmatpush1.bf16.msra.mxu0 0
        %1980 = vmatprep.subr.bf16.mxu0 0
        %1981 = vmatpush1.bf16.msra.mxu0 0
        %1982 = vmatprep.subr.bf16.mxu0 0
        %1983 = vmatpush1.bf16.msra.mxu0 0
        %1984 = vmatprep.subr.bf16.mxu0 0
        %1985 = vmatpush1.bf16.msra.mxu0 0
        %1986 = vmatprep.subr.bf16.mxu0 0
        %1987 = vmatpush1.bf16.msra.mxu0 0
        %1988 = vmatprep.subr.bf16.mxu0 0
        %1989 = vmatpush1.bf16.msra.mxu0 0
        %1990 = vmatprep.subr.bf16.mxu0 0
        %1991 = vmatpush1.bf16.msra.mxu0 0
        %1992 = vmatprep.subr.bf16.mxu0 0
        %1993 = vmatpush1.bf16.msra.mxu0 0
        %1994 = vmatprep.mubr.bf16.mxu0 0
        %1995 = vmatmul.mubr.bf16.gmra.mrb[0].mxu0 %v1954
        %v1996 = vpop.f32.mrb[0].mxu0
        %v1997 = vadd.f32 0.0, %v1996
        %v1998 = vpop.f32.mrb[0].mxu0
        %v1999 = vpop.f32.mrb[0].mxu0
        %v2000 = vadd.f32 0.0, %v1999
        %v2001 = vpop.f32.mrb[0].mxu0
        %2002 = vmatprep.mubr.bf16.mxu0 0
        %2003 = vmatmul.mubr.bf16.gmra.mrb[0].mxu0 %v1957
        %v2004 = vpop.f32.mrb[0].mxu0
        %v2005 = vadd.f32 0.0, %v2004
        %v2006 = vpop.f32.mrb[0].mxu0
        %v2007 = vpop.f32.mrb[0].mxu0
        %v2008 = vpop.f32.mrb[0].mxu0
        %2009 = vdwg.mxu0
        %2013 = vrot.lane.b32.xlu0 %v1667, 32
        %v2014 = vpop.permute.xlu0 %2013
        %2015 = vrot.lane.b32.xlu0 %v1670, 32
        %v2016 = vpop.permute.xlu0 %2015
        %2017 = vrot.lane.b32.xlu0 %v1675, 32
        %v2018 = vpop.permute.xlu0 %2017
        %2025 = vrot.lane.b32.xlu0 %v1832, 64
        %v2026 = vpop.permute.xlu0 %2025
        %2027 = vrot.lane.b32.xlu0 %v1835, 64
        %v2028 = vpop.permute.xlu0 %2027
        %2029 = vrot.lane.b32.xlu0 %v1840, 64
        %v2030 = vpop.permute.xlu0 %2029
        %2037 = vrot.lane.b32.xlu0 %v1997, 96
        %v2038 = vpop.permute.xlu0 %2037
        %2039 = vrot.lane.b32.xlu0 %v2000, 96
        %v2040 = vpop.permute.xlu0 %2039
        %2041 = vrot.lane.b32.xlu0 %v2005, 96
        %v2042 = vpop.permute.xlu0 %2041
        %v2046 = vsel %vm1350, %v1496, %v2014
        %v2047 = vsel %vm1350, %v1499, %v2016
        %v2048 = vsel %vm1350, %v1504, %v2018
        %vm2049 = vcmask 523264
        %v2050 = vsel %vm2049, %v2046, %v2026
        %v2051 = vsel %vm2049, %v2047, %v2028
        %v2052 = vsel %vm2049, %v2048, %v2030
        %vm2053 = vcmask 785408
        %v2054 = vsel %vm2053, %v2050, %v2038
        %v2055 = vsel %vm2053, %v2051, %v2040
        %v2056 = vsel %vm2053, %v2052, %v2042
        %v2057 = vld [vmem:[%s818] sm:$0xf]
        %v2058 = vld [vmem:[%s818 + $0x4] sm:$0xf]
        %v2059 = vld [vmem:[%s818 + $0x8] sm:$0xf]
        %v2060 = vld [vmem:[%s818 + $0xc] sm:$0xf]
        %v2061 = vld [vmem:[%s818 + $0x10] sm:$0xf]
        %v2062 = vld [vmem:[%s818 + $0x14] sm:$0xf]
        %v2063 = vld [vmem:[%s818 + $0x18] sm:$0xf]
        %v2064 = vld [vmem:[%s818 + $0x1c] sm:$0xf]
        %v2065 = vld [vmem:[%s818 + $0x20] sm:$0xf]
        %v2066 = vld [vmem:[%s818 + $0x24] sm:$0xf]
        %v2067 = vld [vmem:[%s818 + $0x28] sm:$0xf]
        %v2068 = vld [vmem:[%s818 + $0x2c] sm:$0xf]
        %v2069 = vld [vmem:[%s818 + $0x30] sm:$0xf]
        %v2070 = vld [vmem:[%s818 + $0x34] sm:$0xf]
        %v2071 = vld [vmem:[%s818 + $0x38] sm:$0xf]
        %v2072 = vld [vmem:[%s818 + $0x3c] sm:$0xf]
        %v2073 = vpack.c.bf16 %v2055, %v2054
        %v2074 = vpack.c.bf16 %v2056, %v2056
        %v2091 = vunpack.c.l.b16 %v2057
        %v2092 = vunpack.c.l.b16 %v2058
        %v2093 = vunpack.c.l.b16 %v2059
        %v2094 = vunpack.c.l.b16 %v2060
        %v2095 = vunpack.c.l.b16 %v2061
        %v2096 = vunpack.c.l.b16 %v2062
        %v2097 = vunpack.c.l.b16 %v2063
        %v2098 = vunpack.c.l.b16 %v2064
        %v2099 = vunpack.c.l.b16 %v2065
        %v2100 = vunpack.c.l.b16 %v2066
        %v2101 = vunpack.c.l.b16 %v2067
        %v2102 = vunpack.c.l.b16 %v2068
        %v2103 = vunpack.c.l.b16 %v2069
        %v2104 = vunpack.c.l.b16 %v2070
        %v2105 = vunpack.c.l.b16 %v2071
        %v2106 = vunpack.c.l.b16 %v2072
        %v2107 = vpack.c.b16 %v2092, %v2091
        %v2108 = vpack.c.b16 %v2094, %v2093
        %v2109 = vpack.c.b16 %v2096, %v2095
        %v2110 = vpack.c.b16 %v2098, %v2097
        %v2111 = vpack.c.b16 %v2100, %v2099
        %v2112 = vpack.c.b16 %v2102, %v2101
        %v2113 = vpack.c.b16 %v2104, %v2103
        %v2114 = vpack.c.b16 %v2106, %v2105
        %2123 = vmatprep.subr.bf16.mxu0 0
        %2124 = vmatpush1.bf16.msra.mxu0 %v2107
        %2125 = vmatprep.subr.bf16.mxu0 0
        %2126 = vmatpush1.bf16.msra.mxu0 %v2108
        %2127 = vmatprep.subr.bf16.mxu0 0
        %2128 = vmatpush1.bf16.msra.mxu0 %v2109
        %2129 = vmatprep.subr.bf16.mxu0 0
        %2130 = vmatpush1.bf16.msra.mxu0 %v2110
        %2131 = vmatprep.subr.bf16.mxu0 0
        %2132 = vmatpush1.bf16.msra.mxu0 %v2111
        %2133 = vmatprep.subr.bf16.mxu0 0
        %2134 = vmatpush1.bf16.msra.mxu0 %v2112
        %2135 = vmatprep.subr.bf16.mxu0 0
        %2136 = vmatpush1.bf16.msra.mxu0 %v2113
        %2137 = vmatprep.subr.bf16.mxu0 0
        %2138 = vmatpush1.bf16.msra.mxu0 %v2114
        %2139 = vmatprep.subr.bf16.mxu0 0
        %2140 = vmatpush1.bf16.msra.mxu0 0
        %2141 = vmatprep.subr.bf16.mxu0 0
        %2142 = vmatpush1.bf16.msra.mxu0 0
        %2143 = vmatprep.subr.bf16.mxu0 0
        %2144 = vmatpush1.bf16.msra.mxu0 0
        %2145 = vmatprep.subr.bf16.mxu0 0
        %2146 = vmatpush1.bf16.msra.mxu0 0
        %2147 = vmatprep.subr.bf16.mxu0 0
        %2148 = vmatpush1.bf16.msra.mxu0 0
        %2149 = vmatprep.subr.bf16.mxu0 0
        %2150 = vmatpush1.bf16.msra.mxu0 0
        %2151 = vmatprep.subr.bf16.mxu0 0
        %2152 = vmatpush1.bf16.msra.mxu0 0
        %2153 = vmatprep.subr.bf16.mxu0 0
        %2154 = vmatpush1.bf16.msra.mxu0 0
        %2155 = vmatprep.mubr.bf16.mxu0 0
        %2156 = vmatmul.mubr.bf16.gmra.mrb[0].mxu0 %v2073
        %v2157 = vpop.f32.mrb[0].mxu0
        %v2158 = vadd.f32 0.0, %v2157
        %v2159 = vpop.f32.mrb[0].mxu0
        %v2160 = vpop.f32.mrb[0].mxu0
        %v2161 = vadd.f32 0.0, %v2160
        %v2162 = vpop.f32.mrb[0].mxu0
        %2163 = vmatprep.mubr.bf16.mxu0 0
        %2164 = vmatmul.mubr.bf16.gmra.mrb[0].mxu0 %v2074
        %v2165 = vpop.f32.mrb[0].mxu0
        %v2166 = vadd.f32 0.0, %v2165
        %v2167 = vpop.f32.mrb[0].mxu0
        %v2168 = vpop.f32.mrb[0].mxu0
        %v2169 = vpop.f32.mrb[0].mxu0
        %2170 = vdwg.mxu0
        %v2171 = vadd.f32 %v998, %v2158
        %v2172 = vadd.f32 %v999, %v2161
        %v2173 = vadd.f32 %v1000, %v2166
        %v2174 = vld [vmem:[%s821] sm:$0x1]
        %v2176 = vlaneseq
        %v2177 = vshrl.u32 %v2176, 7
        %v2178 = vsub.s32 0, %v2177
        %v2179 = vrot.slane %v2174, %v2178
        %v2181 = vadd.f32 %v2171, %v2179
        %v2182 = vadd.f32 %v2172, %v2179
        %v2183 = vadd.f32 %v2173, %v2179
        %v2184 = vld [vmem:[%s824] sm:$0x1]
        %v2185 = vld [vmem:[%s827] sm:$0x1]
        %2186 = vadd.xlane.f32.xlu0 %v2181
        %v2187 = vpop.xlane.xlu0 %2186
        %2188 = vadd.xlane.f32.xlu0 %v2182
        %v2189 = vpop.xlane.xlu0 %2188
        %v2190 = vsel %vm1008, %v2183, 0.0
        %2191 = vadd.xlane.f32.xlu0 %v2190
        %v2192 = vpop.xlane.xlu0 %2191
        %v2193 = vmul.f32 %v2187, %v1012
        %v2194 = vmul.f32 %v2189, %v1012
        %v2195 = vmul.f32 %v2192, %v1012
        %v2196 = vsub.f32 %v2181, %v2193
        %v2197 = vsub.f32 %v2182, %v2194
        %v2198 = vsub.f32 %v2183, %v2195
        %v2199 = vmul.f32 %v2196, %v2196
        %v2200 = vmul.f32 %v2197, %v2197
        %v2201 = vmul.f32 %v2198, %v2198
        %2202 = vadd.xlane.f32.xlu0 %v2199
        %v2203 = vpop.xlane.xlu0 %2202
        %2204 = vadd.xlane.f32.xlu0 %v2200
        %v2205 = vpop.xlane.xlu0 %2204
        %v2206 = vsel %vm1008, %v2201, 0.0
        %2207 = vadd.xlane.f32.xlu0 %v2206
        %v2208 = vpop.xlane.xlu0 %2207
        %v2209 = vmul.f32 %v2203, %v1012
        %v2210 = vmul.f32 %v2205, %v1012
        %v2211 = vmul.f32 %v2208, %v1012
        %v2212 = vadd.f32 %v2209, 1e-05
        %v2213 = vadd.f32 %v2210, 1e-05
        %v2214 = vadd.f32 %v2211, 1e-05
        %v2215 = vrsqrt.pop %v2212
        %v2216 = vrsqrt.pop %v2213
        %v2217 = vrsqrt.pop %v2214
        %v2218 = vmul.f32 %v2196, %v2215
        %v2219 = vmul.f32 %v2197, %v2216
        %v2220 = vmul.f32 %v2198, %v2217
        %v2222 = vlaneseq
        %v2223 = vshrl.u32 %v2222, 7
        %v2224 = vsub.s32 0, %v2223
        %v2225 = vrot.slane %v2184, %v2224
        %v2227 = vmul.f32 %v2218, %v2225
        %v2228 = vmul.f32 %v2219, %v2225
        %v2229 = vmul.f32 %v2220, %v2225
        %v2231 = vlaneseq
        %v2232 = vshrl.u32 %v2231, 7
        %v2233 = vsub.s32 0, %v2232
        %v2234 = vrot.slane %v2185, %v2233
        %v2236 = vadd.f32 %v2227, %v2234
        %v2237 = vadd.f32 %v2228, %v2234
        %v2238 = vadd.f32 %v2229, %v2234
        %v2239 = vld [vmem:[%s832] sm:$0xff]
        %v2240 = vld [vmem:[%s832 + $0x8] sm:$0xff]
        %v2241 = vld [vmem:[%s832 + $0x10] sm:$0xff]
        %v2242 = vld [vmem:[%s832 + $0x18] sm:$0xff]
        %v2243 = vld [vmem:[%s832 + $0x20] sm:$0xff]
        %v2244 = vld [vmem:[%s832 + $0x28] sm:$0xff]
        %v2245 = vld [vmem:[%s832 + $0x30] sm:$0xff]
        %v2246 = vld [vmem:[%s832 + $0x38] sm:$0xff]
        %v2247 = vld [vmem:[%s832 + $0x40] sm:$0xff]
        %v2248 = vld [vmem:[%s832 + $0x48] sm:$0xff]
        %v2249 = vld [vmem:[%s832 + $0x50] sm:$0xff]
        %v2250 = vld [vmem:[%s832 + $0x58] sm:$0xff]
        %v2251 = vld [vmem:[%s832 + $0x60] sm:$0xff]
        %v2252 = vld [vmem:[%s832 + $0x68] sm:$0xff]
        %v2253 = vld [vmem:[%s832 + $0x70] sm:$0xff]
        %v2254 = vld [vmem:[%s832 + $0x78] sm:$0xff]
        %v2255 = vpack.c.bf16 %v2237, %v2236
        %v2256 = vpack.c.bf16 %v2238, %v2238
        %v2257 = vld [vmem:[%s836] sm:$0x3]
        %v2259 = vlaneseq
        %v2260 = vshrl.u32 %v2259, 7
        %v2261 = vsub.s32 0, %v2260
        %v2262 = vrot.slane %v2257, %v2261
        %v2263 = vlaneseq
        %v2264 = vshrl.u32 %v2263, 7
        %v2265 = vsub.s32 1, %v2264
        %v2266 = vrot.slane %v2257, %v2265
        %v2285 = vunpack.c.l.b16 %v2239
        %v2286 = vunpack.c.h.b16 %v2239
        %v2287 = vunpack.c.l.b16 %v2240
        %v2288 = vunpack.c.h.b16 %v2240
        %v2289 = vunpack.c.l.b16 %v2241
        %v2290 = vunpack.c.h.b16 %v2241
        %v2291 = vunpack.c.l.b16 %v2242
        %v2292 = vunpack.c.h.b16 %v2242
        %v2293 = vunpack.c.l.b16 %v2243
        %v2294 = vunpack.c.h.b16 %v2243
        %v2295 = vunpack.c.l.b16 %v2244
        %v2296 = vunpack.c.h.b16 %v2244
        %v2297 = vunpack.c.l.b16 %v2245
        %v2298 = vunpack.c.h.b16 %v2245
        %v2299 = vunpack.c.l.b16 %v2246
        %v2300 = vunpack.c.h.b16 %v2246
        %v2301 = vunpack.c.l.b16 %v2247
        %v2302 = vunpack.c.h.b16 %v2247
        %v2303 = vunpack.c.l.b16 %v2248
        %v2304 = vunpack.c.h.b16 %v2248
        %v2305 = vunpack.c.l.b16 %v2249
        %v2306 = vunpack.c.h.b16 %v2249
        %v2307 = vunpack.c.l.b16 %v2250
        %v2308 = vunpack.c.h.b16 %v2250
        %v2309 = vunpack.c.l.b16 %v2251
        %v2310 = vunpack.c.h.b16 %v2251
        %v2311 = vunpack.c.l.b16 %v2252
        %v2312 = vunpack.c.h.b16 %v2252
        %v2313 = vunpack.c.l.b16 %v2253
        %v2314 = vunpack.c.h.b16 %v2253
        %v2315 = vunpack.c.l.b16 %v2254
        %v2316 = vunpack.c.h.b16 %v2254
        %v2317 = vpack.c.b16 %v2287, %v2285
        %v2318 = vpack.c.b16 %v2288, %v2286
        %v2319 = vpack.c.b16 %v2291, %v2289
        %v2320 = vpack.c.b16 %v2292, %v2290
        %v2321 = vpack.c.b16 %v2295, %v2293
        %v2322 = vpack.c.b16 %v2296, %v2294
        %v2323 = vpack.c.b16 %v2299, %v2297
        %v2324 = vpack.c.b16 %v2300, %v2298
        %v2325 = vpack.c.b16 %v2303, %v2301
        %v2326 = vpack.c.b16 %v2304, %v2302
        %v2327 = vpack.c.b16 %v2307, %v2305
        %v2328 = vpack.c.b16 %v2308, %v2306
        %v2329 = vpack.c.b16 %v2311, %v2309
        %v2330 = vpack.c.b16 %v2312, %v2310
        %v2331 = vpack.c.b16 %v2315, %v2313
        %v2332 = vpack.c.b16 %v2316, %v2314
        %2349 = vmatprep.subr.bf16.mxu0 %v2318
        %2350 = vmatpush1.bf16.msra.mxu0 %v2317
        %2351 = vmatprep.subr.bf16.mxu0 %v2320
        %2352 = vmatpush1.bf16.msra.mxu0 %v2319
        %2353 = vmatprep.subr.bf16.mxu0 %v2322
        %2354 = vmatpush1.bf16.msra.mxu0 %v2321
        %2355 = vmatprep.subr.bf16.mxu0 %v2324
        %2356 = vmatpush1.bf16.msra.mxu0 %v2323
        %2357 = vmatprep.subr.bf16.mxu0 %v2326
        %2358 = vmatpush1.bf16.msra.mxu0 %v2325
        %2359 = vmatprep.subr.bf16.mxu0 %v2328
        %2360 = vmatpush1.bf16.msra.mxu0 %v2327
        %2361 = vmatprep.subr.bf16.mxu0 %v2330
        %2362 = vmatpush1.bf16.msra.mxu0 %v2329
        %2363 = vmatprep.subr.bf16.mxu0 %v2332
        %2364 = vmatpush1.bf16.msra.mxu0 %v2331
        %2365 = vmatprep.subr.bf16.mxu0 0
        %2366 = vmatpush1.bf16.msra.mxu0 0
        %2367 = vmatprep.subr.bf16.mxu0 0
        %2368 = vmatpush1.bf16.msra.mxu0 0
        %2369 = vmatprep.subr.bf16.mxu0 0
        %2370 = vmatpush1.bf16.msra.mxu0 0
        %2371 = vmatprep.subr.bf16.mxu0 0
        %2372 = vmatpush1.bf16.msra.mxu0 0
        %2373 = vmatprep.subr.bf16.mxu0 0
        %2374 = vmatpush1.bf16.msra.mxu0 0
        %2375 = vmatprep.subr.bf16.mxu0 0
        %2376 = vmatpush1.bf16.msra.mxu0 0
        %2377 = vmatprep.subr.bf16.mxu0 0
        %2378 = vmatpush1.bf16.msra.mxu0 0
        %2379 = vmatprep.subr.bf16.mxu0 0
        %2380 = vmatpush1.bf16.msra.mxu0 0
        %2381 = vmatprep.mubr.bf16.mxu0 0
        %2382 = vmatmul.mubr.bf16.gmra.mrb[0].mxu0 %v2255
        %v2383 = vpop.f32.mrb[0].mxu0
        %v2384 = vadd.f32 %v2262, %v2383
        %v2385 = vpop.f32.mrb[0].mxu0
        %v2386 = vadd.f32 %v2266, %v2385
        %v2387 = vpop.f32.mrb[0].mxu0
        %v2388 = vadd.f32 %v2262, %v2387
        %v2389 = vpop.f32.mrb[0].mxu0
        %v2390 = vadd.f32 %v2266, %v2389
        %2391 = vmatprep.mubr.bf16.mxu0 0
        %2392 = vmatmul.mubr.bf16.gmra.mrb[0].mxu0 %v2256
        %v2393 = vpop.f32.mrb[0].mxu0
        %v2394 = vadd.f32 %v2262, %v2393
        %v2395 = vpop.f32.mrb[0].mxu0
        %v2396 = vadd.f32 %v2266, %v2395
        %v2397 = vpop.f32.mrb[0].mxu0
        %v2398 = vpop.f32.mrb[0].mxu0
        %2399 = vdwg.mxu0
        %v2400 = vmul.f32 %v2384, 1.702
        %v2401 = vmul.f32 %v2386, 1.702
        %v2402 = vmul.f32 %v2388, 1.702
        %v2403 = vmul.f32 %v2390, 1.702
        %v2404 = vmul.f32 %v2394, 1.702
        %v2405 = vmul.f32 %v2396, 1.702
        %v2406 = vxor.u32 %v2400, 2147483648
        %v2407 = vxor.u32 %v2401, 2147483648
        %v2408 = vxor.u32 %v2402, 2147483648
        %v2409 = vxor.u32 %v2403, 2147483648
        %v2410 = vxor.u32 %v2404, 2147483648
        %v2411 = vxor.u32 %v2405, 2147483648
        %v2412 = vmul.f32 %v2406, 1.442695
        %v2413 = vpow.pop %v2412
        %v2414 = vmul.f32 %v2407, 1.442695
        %v2415 = vpow.pop %v2414
        %v2416 = vmul.f32 %v2408, 1.442695
        %v2417 = vpow.pop %v2416
        %v2418 = vmul.f32 %v2409, 1.442695
        %v2419 = vpow.pop %v2418
        %v2420 = vmul.f32 %v2410, 1.442695
        %v2421 = vpow.pop %v2420
        %v2422 = vmul.f32 %v2411, 1.442695
        %v2423 = vpow.pop %v2422
        %v2424 = vadd.f32 %v2413, 1.0
        %v2425 = vadd.f32 %v2415, 1.0
        %v2426 = vadd.f32 %v2417, 1.0
        %v2427 = vadd.f32 %v2419, 1.0
        %v2428 = vadd.f32 %v2421, 1.0
        %v2429 = vadd.f32 %v2423, 1.0
        %v2430 = vrcp.pop %v2424
        %v2431 = vmul.f32 1.0, %v2430
        %v2432 = vrcp.pop %v2425
        %v2433 = vmul.f32 1.0, %v2432
        %v2434 = vrcp.pop %v2426
        %v2435 = vmul.f32 1.0, %v2434
        %v2436 = vrcp.pop %v2427
        %v2437 = vmul.f32 1.0, %v2436
        %v2438 = vrcp.pop %v2428
        %v2439 = vmul.f32 1.0, %v2438
        %v2440 = vrcp.pop %v2429
        %v2441 = vmul.f32 1.0, %v2440
        %v2442 = vmul.f32 %v2384, %v2431
        %v2443 = vmul.f32 %v2386, %v2433
        %v2444 = vmul.f32 %v2388, %v2435
        %v2445 = vmul.f32 %v2390, %v2437
        %v2446 = vmul.f32 %v2394, %v2439
        %v2447 = vmul.f32 %v2396, %v2441
        %v2448 = vld [vmem:[%s841] sm:$0xf]
        %v2449 = vld [vmem:[%s841 + $0x4] sm:$0xf]
        %v2450 = vld [vmem:[%s841 + $0x8] sm:$0xf]
        %v2451 = vld [vmem:[%s841 + $0xc] sm:$0xf]
        %v2452 = vld [vmem:[%s841 + $0x10] sm:$0xf]
        %v2453 = vld [vmem:[%s841 + $0x14] sm:$0xf]
        %v2454 = vld [vmem:[%s841 + $0x18] sm:$0xf]
        %v2455 = vld [vmem:[%s841 + $0x1c] sm:$0xf]
        %v2456 = vld [vmem:[%s841 + $0x20] sm:$0xf]
        %v2457 = vld [vmem:[%s841 + $0x24] sm:$0xf]
        %v2458 = vld [vmem:[%s841 + $0x28] sm:$0xf]
        %v2459 = vld [vmem:[%s841 + $0x2c] sm:$0xf]
        %v2460 = vld [vmem:[%s841 + $0x30] sm:$0xf]
        %v2461 = vld [vmem:[%s841 + $0x34] sm:$0xf]
        %v2462 = vld [vmem:[%s841 + $0x38] sm:$0xf]
        %v2463 = vld [vmem:[%s841 + $0x3c] sm:$0xf]
        %v2464 = vld [vmem:[%s841 + $0x40] sm:$0xf]
        %v2465 = vld [vmem:[%s841 + $0x44] sm:$0xf]
        %v2466 = vld [vmem:[%s841 + $0x48] sm:$0xf]
        %v2467 = vld [vmem:[%s841 + $0x4c] sm:$0xf]
        %v2468 = vld [vmem:[%s841 + $0x50] sm:$0xf]
        %v2469 = vld [vmem:[%s841 + $0x54] sm:$0xf]
        %v2470 = vld [vmem:[%s841 + $0x58] sm:$0xf]
        %v2471 = vld [vmem:[%s841 + $0x5c] sm:$0xf]
        %v2472 = vld [vmem:[%s841 + $0x60] sm:$0xf]
        %v2473 = vld [vmem:[%s841 + $0x64] sm:$0xf]
        %v2474 = vld [vmem:[%s841 + $0x68] sm:$0xf]
        %v2475 = vld [vmem:[%s841 + $0x6c] sm:$0xf]
        %v2476 = vld [vmem:[%s841 + $0x70] sm:$0xf]
        %v2477 = vld [vmem:[%s841 + $0x74] sm:$0xf]
        %v2478 = vld [vmem:[%s841 + $0x78] sm:$0xf]
        %v2479 = vld [vmem:[%s841 + $0x7c] sm:$0xf]
        %v2480 = vpack.c.bf16 %v2444, %v2442
        %v2481 = vpack.c.bf16 %v2445, %v2443
        %v2482 = vpack.c.bf16 %v2446, %v2446
        %v2483 = vpack.c.bf16 %v2447, %v2447
        %v2516 = vunpack.c.l.b16 %v2448
        %v2517 = vunpack.c.l.b16 %v2449
        %v2518 = vunpack.c.l.b16 %v2450
        %v2519 = vunpack.c.l.b16 %v2451
        %v2520 = vunpack.c.l.b16 %v2452
        %v2521 = vunpack.c.l.b16 %v2453
        %v2522 = vunpack.c.l.b16 %v2454
        %v2523 = vunpack.c.l.b16 %v2455
        %v2524 = vunpack.c.l.b16 %v2456
        %v2525 = vunpack.c.l.b16 %v2457
        %v2526 = vunpack.c.l.b16 %v2458
        %v2527 = vunpack.c.l.b16 %v2459
        %v2528 = vunpack.c.l.b16 %v2460
        %v2529 = vunpack.c.l.b16 %v2461
        %v2530 = vunpack.c.l.b16 %v2462
        %v2531 = vunpack.c.l.b16 %v2463
        %v2532 = vunpack.c.l.b16 %v2464
        %v2533 = vunpack.c.l.b16 %v2465
        %v2534 = vunpack.c.l.b16 %v2466
        %v2535 = vunpack.c.l.b16 %v2467
        %v2536 = vunpack.c.l.b16 %v2468
        %v2537 = vunpack.c.l.b16 %v2469
        %v2538 = vunpack.c.l.b16 %v2470
        %v2539 = vunpack.c.l.b16 %v2471
        %v2540 = vunpack.c.l.b16 %v2472
        %v2541 = vunpack.c.l.b16 %v2473
        %v2542 = vunpack.c.l.b16 %v2474
        %v2543 = vunpack.c.l.b16 %v2475
        %v2544 = vunpack.c.l.b16 %v2476
        %v2545 = vunpack.c.l.b16 %v2477
        %v2546 = vunpack.c.l.b16 %v2478
        %v2547 = vunpack.c.l.b16 %v2479
        %v2548 = vpack.c.b16 %v2517, %v2516
        %v2549 = vpack.c.b16 %v2519, %v2518
        %v2550 = vpack.c.b16 %v2521, %v2520
        %v2551 = vpack.c.b16 %v2523, %v2522
        %v2552 = vpack.c.b16 %v2525, %v2524
        %v2553 = vpack.c.b16 %v2527, %v2526
        %v2554 = vpack.c.b16 %v2529, %v2528
        %v2555 = vpack.c.b16 %v2531, %v2530
        %v2556 = vpack.c.b16 %v2533, %v2532
        %v2557 = vpack.c.b16 %v2535, %v2534
        %v2558 = vpack.c.b16 %v2537, %v2536
        %v2559 = vpack.c.b16 %v2539, %v2538
        %v2560 = vpack.c.b16 %v2541, %v2540
        %v2561 = vpack.c.b16 %v2543, %v2542
        %v2562 = vpack.c.b16 %v2545, %v2544
        %v2563 = vpack.c.b16 %v2547, %v2546
        %2580 = vmatprep.subr.bf16.mxu0 0
        %2581 = vmatpush1.bf16.msra.mxu0 %v2548
        %2582 = vmatprep.subr.bf16.mxu0 0
        %2583 = vmatpush1.bf16.msra.mxu0 %v2549
        %2584 = vmatprep.subr.bf16.mxu0 0
        %2585 = vmatpush1.bf16.msra.mxu0 %v2550
        %2586 = vmatprep.subr.bf16.mxu0 0
        %2587 = vmatpush1.bf16.msra.mxu0 %v2551
        %2588 = vmatprep.subr.bf16.mxu0 0
        %2589 = vmatpush1.bf16.msra.mxu0 %v2552
        %2590 = vmatprep.subr.bf16.mxu0 0
        %2591 = vmatpush1.bf16.msra.mxu0 %v2553
        %2592 = vmatprep.subr.bf16.mxu0 0
        %2593 = vmatpush1.bf16.msra.mxu0 %v2554
        %2594 = vmatprep.subr.bf16.mxu0 0
        %2595 = vmatpush1.bf16.msra.mxu0 %v2555
        %2596 = vmatprep.subr.bf16.mxu0 0
        %2597 = vmatpush1.bf16.msra.mxu0 %v2556
        %2598 = vmatprep.subr.bf16.mxu0 0
        %2599 = vmatpush1.bf16.msra.mxu0 %v2557
        %2600 = vmatprep.subr.bf16.mxu0 0
        %2601 = vmatpush1.bf16.msra.mxu0 %v2558
        %2602 = vmatprep.subr.bf16.mxu0 0
        %2603 = vmatpush1.bf16.msra.mxu0 %v2559
        %2604 = vmatprep.subr.bf16.mxu0 0
        %2605 = vmatpush1.bf16.msra.mxu0 %v2560
        %2606 = vmatprep.subr.bf16.mxu0 0
        %2607 = vmatpush1.bf16.msra.mxu0 %v2561
        %2608 = vmatprep.subr.bf16.mxu0 0
        %2609 = vmatpush1.bf16.msra.mxu0 %v2562
        %2610 = vmatprep.subr.bf16.mxu0 0
        %2611 = vmatpush1.bf16.msra.mxu0 %v2563
        %2612 = vmatprep.mubr.bf16.mxu0 %v2481
        %2613 = vmatmul.mubr.bf16.gmra.mrb[0].mxu0 %v2480
        %v2614 = vpop.f32.mrb[0].mxu0
        %v2615 = vadd.f32 0.0, %v2614
        %v2616 = vpop.f32.mrb[0].mxu0
        %v2617 = vpop.f32.mrb[0].mxu0
        %v2618 = vadd.f32 0.0, %v2617
        %v2619 = vpop.f32.mrb[0].mxu0
        %2620 = vmatprep.mubr.bf16.mxu0 %v2483
        %2621 = vmatmul.mubr.bf16.gmra.mrb[0].mxu0 %v2482
        %v2622 = vpop.f32.mrb[0].mxu0
        %v2623 = vadd.f32 0.0, %v2622
        %v2624 = vpop.f32.mrb[0].mxu0
        %v2625 = vpop.f32.mrb[0].mxu0
        %v2626 = vpop.f32.mrb[0].mxu0
        %2627 = vdwg.mxu0
        %v2628 = vadd.f32 %v2181, %v2615
        %v2629 = vadd.f32 %v2182, %v2618
        %v2630 = vadd.f32 %v2183, %v2623
        %v2631 = vld [vmem:[%s844] sm:$0x1]
        %v2633 = vlaneseq
        %v2634 = vshrl.u32 %v2633, 7
        %v2635 = vsub.s32 0, %v2634
        %v2636 = vrot.slane %v2631, %v2635
        %v2638 = vadd.f32 %v2628, %v2636
        %v2639 = vadd.f32 %v2629, %v2636
        %v2640 = vadd.f32 %v2630, %v2636
        %2641 = vst [vmem:[#allocation2] sm:$0xff] %v2638
        %2642 = vst [vmem:[#allocation2 + $0x8] sm:$0xff] %v2639
        %2643 = vst [vmem:[#allocation2 + $0x10] sm:$0x1] %v2640
        %p2644 = scmp.eq.s32.totalorder %s38, 1
        // Predicated region
        $region101: #{tower_forward.1} parent=95 // pred_check
          %p2645 = pneg %p2644
        $region102: #{tower_forward.1} parent=95 // pred_check_branch
          %2647 = sbr.rel (%p2645) target = $region104
        $region103: #{tower_forward.1} parent=95 // pred_region
          %2648 = vst [vmem:[%s785 - $0x1] sm:$0xfe] %v2638
          %2649 = vst [vmem:[%s785 + $0x7] sm:$0xff] %v2639
          %2650 = vst [vmem:[%s785 + $0xf] sm:$0x1] %v2640
        $region104: #{tower_forward.1} parent=95 // pred_fallthru
          _
        %s2651 = sand.u32 %s527, 1
        %s2652 = scalar_lea.sflag [#allocation4], %s2651
        %s2653 = sand.u32 %s527, 1
        %s2654 = smul.addr %s2653, 16
        %s2655 = scalar_lea.vmem [#allocation3], %s2654
        // Predicated region
        $region105: #{tower_forward.1} parent=95 // pred_check
          %p2656 = pneg %p537
        $region106: #{tower_forward.1} parent=95 // pred_check_branch
          %2658 = sbr.rel (%p2656) target = $region108
        $region107: #{tower_forward.1} parent=95 // pred_region
          %s2660 = ssub.s32 256, 256
          %2661 = vsyncadd %s2652, %s2660
          %s2662 = smul.addr %s37, 2
          %s2663 = smul.addr %s2662, 128
          %s2664 = scalar_lea.hbm %s19, %s2663
          %s2665 = sshll.u32 %s2655, 4
          %s2666 = int_to_ptr.vmem [resolvable:$true] %s2665
          %2671 = dma.vmem_to_hbm [thread:$0]  %s2666, 256, %s2664, %s2652, 128, 128, 8
        $region108: #{tower_forward.1} parent=95 // pred_fallthru
          _
      $region96: #{tower_forward.1} parent=5 // pred_fallthru
        _
      %p2672 = scmp.le.s32.totalorder 2, %s28
      // Predicated region
      $region109: #{tower_forward.1} parent=5 // pred_check
        %p2673 = pneg %p2672
      $region110: #{tower_forward.1} parent=5 // pred_check_branch
        %2675 = sbr.rel (%p2673) target = $region112
      $region111: #{tower_forward.1} parent=5 // pred_region
        %s2676 = ssub.s32 %s28, 2
        // Predicated region
        $region113: #{tower_forward.1} parent=111 // pred_check
          %p2677 = pneg %p543
        $region114: #{tower_forward.1} parent=111 // pred_check_branch
          %2679 = sbr.rel (%p2677) target = $region116
        $region115: #{tower_forward.1} parent=111 // pred_region
          %s2680 = sand.u32 %s528, 1
          %s2681 = scalar_lea.sflag [#allocation4], %s2680
          %s2682 = sand.u32 %s528, 1
          %s2683 = smul.addr %s2682, 16
          %s2684 = scalar_lea.vmem [#allocation3], %s2683
          %2685 = dma.done %s2681, 256
        $region116: #{tower_forward.1} parent=111 // pred_fallthru
          _
      $region112: #{tower_forward.1} parent=5 // pred_fallthru
        _
    $region6: #{tower_forward.1} parent=1 // loop_footer
      %s32 = sadd.s32 1, %s28
    $region7: #{tower_forward.1} parent=1 // loop_footer_branch
      %27 = sbr.rel target = $region3
    $region8: #{tower_forward.1} parent=1 // loop_exit
      _
    %2686 = vsyncpa [#allocation4], 1
    %s2687 = scalar_lea.sflag [#allocation4], 1
    %2688 = vsyncpa %s2687, 1

</llo_original>
